<compile_context>
chip_gen: v7x
topology: tpu7x:2x2x1
jax: 0.10.0
libtpu: 0.0.40
codegen_flags: <defaults>
</compile_context>

<pallas_src>
import math
import numpy as np
import jax
import jax.numpy as jnp
from jax import lax
from jax.experimental import pallas as pl
from jax.experimental.pallas import tpu as pltpu

LANES = 128          # fused layer-1/layer-3 width and packed-output lane width
H1, H2 = 64, 32      # hidden widths from the PyTorch module


def _round_up(x, m):
    return ((x + m - 1) // m) * m


def actor_critic_kernel(state_ref, action_ref,
                        w1_ref, b1_ref, w2_ref, b2_ref, w3_ref, b3_ref,
                        inv_var_ref, const_ref, out_ref):
    x = state_ref[...]                        # (TB, S)
    a = action_ref[...]                       # (TB, A)
    A = a.shape[-1]

    # One lane-full MXU matmul per layer (actor + critic fused).
    h1 = jnp.tanh(jnp.dot(x, w1_ref[...], preferred_element_type=jnp.float32)
                  + b1_ref[...])              # (TB, 128)
    h2 = jnp.tanh(jnp.dot(h1, w2_ref[...], preferred_element_type=jnp.float32)
                  + b2_ref[...])              # (TB, 64)
    z3 = (jnp.dot(h2, w3_ref[...], preferred_element_type=jnp.float32)
          + b3_ref[...])                      # (TB, 128)

    mean = jnp.tanh(z3[:, :A])                # actor head (tanh), (TB, A)
    value = z3[:, A:A + 1]                    # critic head (no tanh), (TB, 1)

    # Diagonal-Gaussian log_prob; inv_var and the (k*log2pi + logdet)/2 constant
    # are precomputed in the wrapper -> only VPU mul/add + one lane reduce here.
    diff = a - mean
    maha = jnp.sum(diff * diff * inv_var_ref[...], axis=-1, keepdims=True)  # (TB,1)
    logprob = const_ref[...] - 0.5 * maha                                   # (TB,1)

    # Lane-dense packed store: lane 0 = log_prob, lane 1 = value, rest zero.
    lane = lax.broadcasted_iota(jnp.int32, out_ref.shape, 1)
    out_ref[...] = jnp.where(lane == 0, logprob,
                             jnp.where(lane == 1, value, 0.0))


def init_params(key, state_dim, action_dim):
    """PyTorch-Linear-style init U(-1/sqrt(fan_in), 1/sqrt(fan_in)); (in,out) layout."""
    dims_actor = [(state_dim, H1), (H1, H2), (H2, action_dim)]
    dims_critic = [(state_dim, H1), (H1, H2), (H2, 1)]
    params = []
    for (fi, fo) in dims_actor + dims_critic:
        key, kw, kb = jax.random.split(key, 3)
        bound = 1.0 / math.sqrt(fi)
        w = jax.random.uniform(kw, (fi, fo), jnp.float32, -bound, bound)
        b = jax.random.uniform(kb, (1, fo), jnp.float32, -bound, bound)
        params += [w, b]
    return params  # [aw1,ab1,aw2,ab2,aw3,ab3, cw1,cb1,cw2,cb2,cw3,cb3]


def pack_params(params, action_dim):
    """Fuse actor/critic weights into 3 lane-full matmul operands (built once)."""
    aw1, ab1, aw2, ab2, aw3, ab3, cw1, cb1, cw2, cb2, cw3, cb3 = params
    w1 = jnp.concatenate([aw1, cw1], axis=1)               # (S, 128)
    b1 = jnp.concatenate([ab1, cb1], axis=1)               # (1, 128)
    w2 = jnp.zeros((2 * H1, 2 * H2), jnp.float32)          # (128, 64) block-diag
    w2 = w2.at[:H1, :H2].set(aw2).at[H1:, H2:].set(cw2)
    b2 = jnp.concatenate([ab2, cb2], axis=1)               # (1, 64)
    w3 = jnp.zeros((2 * H2, LANES), jnp.float32)           # (64, 128)
    w3 = w3.at[:H2, :action_dim].set(aw3)
    w3 = w3.at[H2:, action_dim:action_dim + 1].set(cw3)
    b3 = jnp.zeros((1, LANES), jnp.float32)
    b3 = b3.at[:, :action_dim].set(ab3)
    b3 = b3.at[:, action_dim:action_dim + 1].set(cb3)
    return w1, b1, w2, b2, w3, b3


def actor_critic_evaluate(state, action, params, action_var, *, tile_b=512):
    B, S = state.shape
    A = action.shape[1]
    w1, b1, w2, b2, w3, b3 = pack_params(params, A)

    # Hoist var-derived math out of the kernel.
    var = action_var.reshape(1, A).astype(jnp.float32)
    inv_var = (1.0 / var).astype(jnp.float32)                       # (1, A)
    log2pi = math.log(2.0 * math.pi)
    log_var_sum = jnp.sum(jnp.log(var))
    const = jnp.reshape(-0.5 * (A * log2pi + log_var_sum), (1, 1)).astype(jnp.float32)
    entropy_scalar = 0.5 * A * (1.0 + log2pi) + 0.5 * log_var_sum   # batch-independent

    # Batch tiling (pad B up to a tile multiple; padded rows are discarded).
    tb = min(tile_b, _round_up(B, 8))
    b_pad = _round_up(B, tb)
    if b_pad != B:
        state = jnp.pad(state, ((0, b_pad - B), (0, 0)))
        action = jnp.pad(action, ((0, b_pad - B), (0, 0)))

    def resident(shape):  # grid-invariant block: stays in VMEM, no re-DMA per step
        return pl.BlockSpec(shape, lambda i: (0, 0))

    out = pl.pallas_call(
        actor_critic_kernel,
        out_shape=jax.ShapeDtypeStruct((b_pad, LANES), jnp.float32),
        grid=(b_pad // tb,),
        in_specs=[
            pl.BlockSpec((tb, S), lambda i: (i, 0)),     # state  (tiled over batch)
            pl.BlockSpec((tb, A), lambda i: (i, 0)),     # action (tiled over batch)
            resident(w1.shape), resident(b1.shape),
            resident(w2.shape), resident(b2.shape),
            resident(w3.shape), resident(b3.shape),
            resident(inv_var.shape), resident(const.shape),
        ],
        out_specs=pl.BlockSpec((tb, LANES), lambda i: (i, 0)),
        compiler_params=pltpu.CompilerParams(
            dimension_semantics=("parallel",)),          # megacore-shardable
    )(state, action, w1, b1, w2, b2, w3, b3, inv_var, const)

    logprob = out[:B, 0]
    value = out[:B, 1]
    entropy = jnp.broadcast_to(entropy_scalar, (B,)).astype(jnp.float32)
    return logprob, value, entropy


def reference_evaluate(state, action, params, action_var):
    aw1, ab1, aw2, ab2, aw3, ab3, cw1, cb1, cw2, cb2, cw3, cb3 = params
    h = jnp.tanh(state @ aw1 + ab1)
    h = jnp.tanh(h @ aw2 + ab2)
    mean = jnp.tanh(h @ aw3 + ab3)
    v = jnp.tanh(state @ cw1 + cb1)
    v = jnp.tanh(v @ cw2 + cb2)
    value = (v @ cw3 + cb3)[:, 0]
    var = action_var[0]
    k = mean.shape[-1]
    log2pi = math.log(2.0 * math.pi)
    diff = action - mean
    logprob = (-0.5 * jnp.sum(diff * diff / var, axis=-1)
               - 0.5 * k * log2pi - 0.5 * jnp.sum(jnp.log(var)))
    entropy = jnp.full((state.shape[0],),
                       0.5 * k * (1.0 + log2pi) + 0.5 * jnp.sum(jnp.log(var)))
    return logprob, value, entropy


if __name__ == "__main__":
    state_dim, action_dim, action_std = 8, 4, 0.5
    B = 1000  # not a tile multiple -> exercises padding; grid=(2,) with TB=512

    key = jax.random.PRNGKey(0)
    k_params, k_state, k_action = jax.random.split(key, 3)

    params = init_params(k_params, state_dim, action_dim)
    action_var = jnp.full((1, action_dim), action_std * action_std, jnp.float32)

    state = jax.random.normal(k_state, (B, state_dim), jnp.float32)
    action = jax.random.normal(k_action, (B, action_dim), jnp.float32)

    logprob, value, entropy = actor_critic_evaluate(state, action, params, action_var)
    jax.block_until_ready((logprob, value, entropy))

    ref_lp, ref_v, ref_e = reference_evaluate(state, action, params, action_var)
    assert np.allclose(np.asarray(logprob), np.asarray(ref_lp), atol=1e-5)
    assert np.allclose(np.asarray(value), np.asarray(ref_v), atol=1e-5)
    assert np.allclose(np.asarray(entropy), np.asarray(ref_e), atol=1e-5)

    print("KERNEL_OK")
</pallas_src>

<mosaic_0001>
module attributes {stable_mosaic.version = 11 : i64} {
  func.func @actor_critic_kernel(%arg0: i32, %arg1: memref<512x8xf32, #tpu.memory_space<vmem>>, %arg2: memref<512x4xf32, #tpu.memory_space<vmem>>, %arg3: memref<8x128xf32, #tpu.memory_space<vmem>>, %arg4: memref<1x128xf32, #tpu.memory_space<vmem>>, %arg5: memref<128x64xf32, #tpu.memory_space<vmem>>, %arg6: memref<1x64xf32, #tpu.memory_space<vmem>>, %arg7: memref<64x128xf32, #tpu.memory_space<vmem>>, %arg8: memref<1x128xf32, #tpu.memory_space<vmem>>, %arg9: memref<1x4xf32, #tpu.memory_space<vmem>>, %arg10: memref<1x1xf32, #tpu.memory_space<vmem>>, %arg11: memref<512x128xf32, #tpu.memory_space<vmem>>) attributes {dimension_semantics = [#tpu.dimension_semantics<parallel>], iteration_bounds = array<i64: 2>, scalar_prefetch = 0 : i64, scratch_operands = 0 : i64, tpu.core_type = #tpu.core_type<tc>, window_params = [{transform_indices = @transform_0, window_bounds = array<i64: 512, 8>}, {transform_indices = @transform_1, window_bounds = array<i64: 512, 4>}, {pipeline_mode = #tpu.pipeline_mode<synchronous>, transform_indices = @transform_2, window_bounds = array<i64: 8, 128>}, {pipeline_mode = #tpu.pipeline_mode<synchronous>, transform_indices = @transform_3, window_bounds = array<i64: 1, 128>}, {pipeline_mode = #tpu.pipeline_mode<synchronous>, transform_indices = @transform_4, window_bounds = array<i64: 128, 64>}, {pipeline_mode = #tpu.pipeline_mode<synchronous>, transform_indices = @transform_5, window_bounds = array<i64: 1, 64>}, {pipeline_mode = #tpu.pipeline_mode<synchronous>, transform_indices = @transform_6, window_bounds = array<i64: 64, 128>}, {pipeline_mode = #tpu.pipeline_mode<synchronous>, transform_indices = @transform_7, window_bounds = array<i64: 1, 128>}, {pipeline_mode = #tpu.pipeline_mode<synchronous>, transform_indices = @transform_8, window_bounds = array<i64: 1, 4>}, {pipeline_mode = #tpu.pipeline_mode<synchronous>, transform_indices = @transform_9, window_bounds = array<i64: 1, 1>}, {transform_indices = @transform_10, window_bounds = array<i64: 512, 128>}]} {
    %c0 = arith.constant 0 : index
    %c0_0 = arith.constant 0 : index
    %0 = vector.load %arg1[%c0, %c0_0] : memref<512x8xf32, #tpu.memory_space<vmem>>, vector<512x8xf32>
    %c0_1 = arith.constant 0 : index
    %c0_2 = arith.constant 0 : index
    %1 = vector.load %arg2[%c0_1, %c0_2] : memref<512x4xf32, #tpu.memory_space<vmem>>, vector<512x4xf32>
    %c0_3 = arith.constant 0 : index
    %c0_4 = arith.constant 0 : index
    %2 = vector.load %arg3[%c0_3, %c0_4] : memref<8x128xf32, #tpu.memory_space<vmem>>, vector<8x128xf32>
    %cst = arith.constant dense<0.000000e+00> : vector<512x128xf32>
    %3 = tpu.matmul %0, %2, %cst {dimension_numbers = #tpu.dot_dimension_numbers<[1], [0], [0], [1], [0, 0, 1, 1], [], []>} : vector<512x8xf32>, vector<8x128xf32>, vector<512x128xf32> -> vector<512x128xf32>
    %c0_5 = arith.constant 0 : index
    %c0_6 = arith.constant 0 : index
    %4 = vector.load %arg4[%c0_5, %c0_6] : memref<1x128xf32, #tpu.memory_space<vmem>>, vector<1x128xf32>
    %5 = vector.broadcast %4 : vector<1x128xf32> to vector<512x128xf32>
    %6 = arith.addf %3, %5 : vector<512x128xf32>
    %7 = math.tanh %6 : vector<512x128xf32>
    %c0_7 = arith.constant 0 : index
    %c0_8 = arith.constant 0 : index
    %8 = vector.load %arg5[%c0_7, %c0_8] : memref<128x64xf32, #tpu.memory_space<vmem>>, vector<128x64xf32>
    %cst_9 = arith.constant dense<0.000000e+00> : vector<512x64xf32>
    %9 = tpu.matmul %7, %8, %cst_9 {dimension_numbers = #tpu.dot_dimension_numbers<[1], [0], [0], [1], [0, 0, 1, 1], [], []>} : vector<512x128xf32>, vector<128x64xf32>, vector<512x64xf32> -> vector<512x64xf32>
    %c0_10 = arith.constant 0 : index
    %c0_11 = arith.constant 0 : index
    %10 = vector.load %arg6[%c0_10, %c0_11] : memref<1x64xf32, #tpu.memory_space<vmem>>, vector<1x64xf32>
    %11 = vector.broadcast %10 : vector<1x64xf32> to vector<512x64xf32>
    %12 = arith.addf %9, %11 : vector<512x64xf32>
    %13 = math.tanh %12 : vector<512x64xf32>
    %c0_12 = arith.constant 0 : index
    %c0_13 = arith.constant 0 : index
    %14 = vector.load %arg7[%c0_12, %c0_13] : memref<64x128xf32, #tpu.memory_space<vmem>>, vector<64x128xf32>
    %cst_14 = arith.constant dense<0.000000e+00> : vector<512x128xf32>
    %15 = tpu.matmul %13, %14, %cst_14 {dimension_numbers = #tpu.dot_dimension_numbers<[1], [0], [0], [1], [0, 0, 1, 1], [], []>} : vector<512x64xf32>, vector<64x128xf32>, vector<512x128xf32> -> vector<512x128xf32>
    %c0_15 = arith.constant 0 : index
    %c0_16 = arith.constant 0 : index
    %16 = vector.load %arg8[%c0_15, %c0_16] : memref<1x128xf32, #tpu.memory_space<vmem>>, vector<1x128xf32>
    %17 = vector.broadcast %16 : vector<1x128xf32> to vector<512x128xf32>
    %18 = arith.addf %15, %17 : vector<512x128xf32>
    %19 = vector.extract_strided_slice %18 {offsets = [0, 0], sizes = [512, 4], strides = [1, 1]} : vector<512x128xf32> to vector<512x4xf32>
    %20 = math.tanh %19 : vector<512x4xf32>
    %21 = vector.extract_strided_slice %18 {offsets = [0, 4], sizes = [512, 1], strides = [1, 1]} : vector<512x128xf32> to vector<512x1xf32>
    %22 = arith.subf %1, %20 : vector<512x4xf32>
    %23 = arith.mulf %22, %22 : vector<512x4xf32>
    %c0_17 = arith.constant 0 : index
    %c0_18 = arith.constant 0 : index
    %24 = vector.load %arg9[%c0_17, %c0_18] : memref<1x4xf32, #tpu.memory_space<vmem>>, vector<1x4xf32>
    %25 = vector.broadcast %24 : vector<1x4xf32> to vector<512x4xf32>
    %26 = arith.mulf %23, %25 : vector<512x4xf32>
    %cst_19 = arith.constant dense<0.000000e+00> : vector<512xf32>
    %27 = vector.multi_reduction <add>, %26, %cst_19 [1] : vector<512x4xf32> to vector<512xf32>
    %28 = vector.shape_cast %27 : vector<512xf32> to vector<512x1xf32>
    %c0_20 = arith.constant 0 : index
    %c0_21 = arith.constant 0 : index
    %29 = vector.load %arg10[%c0_20, %c0_21] : memref<1x1xf32, #tpu.memory_space<vmem>>, vector<1x1xf32>
    %cst_22 = arith.constant 5.000000e-01 : f32
    %30 = vector.broadcast %cst_22 : f32 to vector<512x1xf32>
    %31 = arith.mulf %30, %28 : vector<512x1xf32>
    %32 = vector.broadcast %29 : vector<1x1xf32> to vector<512x1xf32>
    %33 = arith.subf %32, %31 : vector<512x1xf32>
    %34 = tpu.iota {dimensions = array<i32: 1>} : vector<512x128xi32>
    %c0_i32 = arith.constant 0 : i32
    %35 = vector.broadcast %c0_i32 : i32 to vector<512x128xi32>
    %36 = arith.cmpi eq, %34, %35 : vector<512x128xi32>
    %c1_i32 = arith.constant 1 : i32
    %37 = vector.broadcast %c1_i32 : i32 to vector<512x128xi32>
    %38 = arith.cmpi eq, %34, %37 : vector<512x128xi32>
    %cst_23 = arith.constant 0.000000e+00 : f32
    %39 = vector.shape_cast %21 : vector<512x1xf32> to vector<512x1xf32>
    %40 = vector.broadcast %39 : vector<512x1xf32> to vector<512x128xf32>
    %41 = vector.broadcast %cst_23 : f32 to vector<512x128xf32>
    %42 = arith.select %38, %40, %41 : vector<512x128xi1>, vector<512x128xf32>
    %43 = vector.shape_cast %33 : vector<512x1xf32> to vector<512x1xf32>
    %44 = vector.broadcast %43 : vector<512x1xf32> to vector<512x128xf32>
    %45 = arith.select %36, %44, %42 : vector<512x128xi1>, vector<512x128xf32>
    %c0_24 = arith.constant 0 : index
    %c0_25 = arith.constant 0 : index
    %46 = vector.load %arg11[%c0_24, %c0_25] : memref<512x128xf32, #tpu.memory_space<vmem>>, vector<512x128xf32>
    tpu.vector_store %arg11[%c0_24, %c0_25], %45 {strides = array<i32>} : memref<512x128xf32, #tpu.memory_space<vmem>>, vector<512x128xf32>,
    return
  }
  func.func @transform_0(%arg0: i32) -> (i32, i32) {
    %c0_i32 = arith.constant 0 : i32
    %c0_i32_0 = arith.constant 0 : i32
    return %arg0, %c0_i32 : i32, i32
  }
  func.func @transform_1(%arg0: i32) -> (i32, i32) {
    %c0_i32 = arith.constant 0 : i32
    %c0_i32_0 = arith.constant 0 : i32
    return %arg0, %c0_i32 : i32, i32
  }
  func.func @transform_2(%arg0: i32) -> (i32, i32) {
    %c0_i32 = arith.constant 0 : i32
    %c0_i32_0 = arith.constant 0 : i32
    %c0_i32_1 = arith.constant 0 : i32
    return %c0_i32, %c0_i32_0 : i32, i32
  }
  func.func @transform_3(%arg0: i32) -> (i32, i32) {
    %c0_i32 = arith.constant 0 : i32
    %c0_i32_0 = arith.constant 0 : i32
    %c0_i32_1 = arith.constant 0 : i32
    return %c0_i32, %c0_i32_0 : i32, i32
  }
  func.func @transform_4(%arg0: i32) -> (i32, i32) {
    %c0_i32 = arith.constant 0 : i32
    %c0_i32_0 = arith.constant 0 : i32
    %c0_i32_1 = arith.constant 0 : i32
    return %c0_i32, %c0_i32_0 : i32, i32
  }
  func.func @transform_5(%arg0: i32) -> (i32, i32) {
    %c0_i32 = arith.constant 0 : i32
    %c0_i32_0 = arith.constant 0 : i32
    %c0_i32_1 = arith.constant 0 : i32
    return %c0_i32, %c0_i32_0 : i32, i32
  }
  func.func @transform_6(%arg0: i32) -> (i32, i32) {
    %c0_i32 = arith.constant 0 : i32
    %c0_i32_0 = arith.constant 0 : i32
    %c0_i32_1 = arith.constant 0 : i32
    return %c0_i32, %c0_i32_0 : i32, i32
  }
  func.func @transform_7(%arg0: i32) -> (i32, i32) {
    %c0_i32 = arith.constant 0 : i32
    %c0_i32_0 = arith.constant 0 : i32
    %c0_i32_1 = arith.constant 0 : i32
    return %c0_i32, %c0_i32_0 : i32, i32
  }
  func.func @transform_8(%arg0: i32) -> (i32, i32) {
    %c0_i32 = arith.constant 0 : i32
    %c0_i32_0 = arith.constant 0 : i32
    %c0_i32_1 = arith.constant 0 : i32
    return %c0_i32, %c0_i32_0 : i32, i32
  }
  func.func @transform_9(%arg0: i32) -> (i32, i32) {
    %c0_i32 = arith.constant 0 : i32
    %c0_i32_0 = arith.constant 0 : i32
    %c0_i32_1 = arith.constant 0 : i32
    return %c0_i32, %c0_i32_0 : i32, i32
  }
  func.func @transform_10(%arg0: i32) -> (i32, i32) {
    %c0_i32 = arith.constant 0 : i32
    %c0_i32_0 = arith.constant 0 : i32
    return %arg0, %c0_i32 : i32, i32
  }
}

</mosaic_0001>

<llo_original>
// kernel: tpu_custom_call.1
$region0: #{tpu_custom_call.1}
  #allocation0 [shape = 'u32[]', space=smem, size = 0x4, offset = 0x4, fixed_abs, tag = 'smem constant byte address 0x4 - core index']
  #allocation1 [shape = 'u32[144,128]{1,0:T(1,128)}', space=vmem, size = 0x12000, scoped, tag = 'internal scratch']
  #allocation2 [shape = 'f32[1,1]{1,0:T(1,128)S(1)}', space=vmem, size = 0x200, scoped, tag = 'scoped memory for tpu_custom_call.1']
  %s0 = inlined_call_operand.vmem [shape: f32[1024,8], index: 0, kind: input, shape index: {}]
  %s1 = inlined_call_operand.vmem [shape: f32[1024,4], index: 1, kind: input, shape index: {}]
  %s2 = inlined_call_operand.vmem [shape: f32[8,128], index: 2, kind: input, shape index: {}]
  %s3 = inlined_call_operand.vmem [shape: f32[1,128], index: 3, kind: input, shape index: {}]
  %s4 = inlined_call_operand.vmem [shape: f32[128,64], index: 4, kind: input, shape index: {}]
  %s5 = inlined_call_operand.vmem [shape: f32[1,64], index: 5, kind: input, shape index: {}]
  %s6 = inlined_call_operand.vmem [shape: f32[64,128], index: 6, kind: input, shape index: {}]
  %s7 = inlined_call_operand.vmem [shape: f32[1,128], index: 7, kind: input, shape index: {}]
  %s8 = inlined_call_operand.vmem [shape: f32[1,4], index: 8, kind: input, shape index: {}]
  %s9 = inlined_call_operand.<no memory space> [shape: f32[1,1], index: 9, kind: input, shape index: {}]
  %s10 = inlined_call_operand.hbm [shape: f32[1024,128], index: 10, kind: output, shape index: {}]
  %s11 = sld [smem:[#allocation0]]
  $region73: #{tpu_custom_call.1} parent=0
    _
  %s13 = ssub.s32 1, %s11
  %s14 = scalar_select 0, %s13, %s11
  %v15 = vstv %s9
  %16 = vst [vmem:[#allocation2] sm:$0x1] %v15
  $region1: #{tpu_custom_call.1} parent=0
    #allocation3 [shape = 'u8[524288]{0}', space=vmem, size = 0x80000, scoped, tag = 'output window, operand 0']
    #allocation4 [shape = 's32[2]{0}', space=sflag, size = 0x8, scoped, tag = 'scoped memory for tpu_custom_call.1']
    %17 = vsyncpa [#allocation4], 0
    %s18 = scalar_lea.sflag [#allocation4], 1
    %19 = vsyncpa %s18, 0
    loop: start=0, step=1, limit=4
    $region2: #{tpu_custom_call.1} parent=1 // loop_pre_header
      _
    $region3: #{tpu_custom_call.1} parent=1 // loop_header
      %s21 = sphi 0, %s25
      %p22 = scmp.ge.s32.totalorder %s21, 4
      %s31 = sphi 0, %s33
      %s34 = sphi 0, %s31
      %s35 = sphi 0, %s34
      %s51 = sphi 0, %s35
      %s57 = sphi 0, %s59
      %s60 = sphi 0, %s57
      %s61 = sphi 0, %s60
      %s77 = sphi 0, %s61
      %s81 = sphi 0, %s81
      %s83 = sphi 0, %s81
      %s84 = sphi 0, %s83
      %s98 = sphi 0, %s84
      %s102 = sphi 0, %s102
      %s104 = sphi 0, %s102
      %s105 = sphi 0, %s104
      %s119 = sphi 0, %s105
      %s123 = sphi 0, %s123
      %s125 = sphi 0, %s123
      %s126 = sphi 0, %s125
      %s140 = sphi 0, %s126
      %s144 = sphi 0, %s144
      %s146 = sphi 0, %s144
      %s147 = sphi 0, %s146
      %s161 = sphi 0, %s147
      %s165 = sphi 0, %s165
      %s167 = sphi 0, %s165
      %s168 = sphi 0, %s167
      %s182 = sphi 0, %s168
      %s186 = sphi 0, %s186
      %s188 = sphi 0, %s186
      %s189 = sphi 0, %s188
      %s203 = sphi 0, %s189
      %s207 = sphi 0, %s207
      %s209 = sphi 0, %s207
      %s210 = sphi 0, %s209
      %s224 = sphi 0, %s210
      %s228 = sphi 0, %s228
      %s230 = sphi 0, %s228
      %s231 = sphi 0, %s230
      %s245 = sphi 0, %s231
      %s251 = sphi 0, %s253
      %s254 = sphi 0, %s251
      %s255 = sphi 0, %s254
      %s271 = sphi 0, %s255
    $region4: #{tpu_custom_call.1} parent=1 // loop_header_branch
      %24 = sbr.rel (%p22) target = $region8
    $region5: #{tpu_custom_call.1} parent=1 // loop_body
      %s26 = ssub.s32 %s21, 1
      %s27 = ssub.s32 %s21, 2
      %s28 = sadd.s32 %s21, 1
      %s29 = ssub.s32 %s21, %s28
      %p30 = scmp.eq.s32.totalorder %s29, 0
      %s32 = sadd.s32 %s31, 1
      %s33 = scalar_select %p30, %s31, %s32
      %p36 = pneg %p30
      %p37 = scmp.eq.s32.totalorder %s21, 1
      %p38 = por %p36, %p37
      %p39 = scmp.ne.s32.totalorder %s31, %s34
      %p40 = scmp.eq.s32.totalorder %s21, 0
      %p41 = por %p39, %p40
      %p42 = scmp.ne.s32.totalorder %s31, %s34
      %p43 = scmp.eq.s32.totalorder %s26, 1
      %p44 = por %p42, %p43
      %p45 = scmp.ne.s32.totalorder %s34, %s35
      %p46 = scmp.eq.s32.totalorder %s26, 0
      %p47 = por %p45, %p46
      %p48 = scmp.ne.s32.totalorder %s34, %s35
      %p49 = scmp.eq.s32.totalorder %s27, 1
      %p50 = por %p48, %p49
      %p52 = scmp.ne.s32.totalorder %s35, %s51
      %p53 = scmp.eq.s32.totalorder %s27, 0
      %p54 = por %p52, %p53
      %s55 = ssub.s32 %s21, %s28
      %p56 = scmp.eq.s32.totalorder %s55, 0
      %s58 = sadd.s32 %s57, 1
      %s59 = scalar_select %p56, %s57, %s58
      %p62 = pneg %p56
      %p63 = scmp.eq.s32.totalorder %s21, 1
      %p64 = por %p62, %p63
      %p65 = scmp.ne.s32.totalorder %s57, %s60
      %p66 = scmp.eq.s32.totalorder %s21, 0
      %p67 = por %p65, %p66
      %p68 = scmp.ne.s32.totalorder %s57, %s60
      %p69 = scmp.eq.s32.totalorder %s26, 1
      %p70 = por %p68, %p69
      %p71 = scmp.ne.s32.totalorder %s60, %s61
      %p72 = scmp.eq.s32.totalorder %s26, 0
      %p73 = por %p71, %p72
      %p74 = scmp.ne.s32.totalorder %s60, %s61
      %p75 = scmp.eq.s32.totalorder %s27, 1
      %p76 = por %p74, %p75
      %p78 = scmp.ne.s32.totalorder %s61, %s77
      %p79 = scmp.eq.s32.totalorder %s27, 0
      %p80 = por %p78, %p79
      %s82 = sadd.s32 %s81, 1
      %p85 = scmp.eq.s32.totalorder %s21, 1
      %p86 = scmp.ne.s32.totalorder %s81, %s83
      %p87 = scmp.eq.s32.totalorder %s21, 0
      %p88 = por %p86, %p87
      %p89 = scmp.ne.s32.totalorder %s81, %s83
      %p90 = scmp.eq.s32.totalorder %s26, 1
      %p91 = por %p89, %p90
      %p92 = scmp.ne.s32.totalorder %s83, %s84
      %p93 = scmp.eq.s32.totalorder %s26, 0
      %p94 = por %p92, %p93
      %p95 = scmp.ne.s32.totalorder %s83, %s84
      %p96 = scmp.eq.s32.totalorder %s27, 1
      %p97 = por %p95, %p96
      %p99 = scmp.ne.s32.totalorder %s84, %s98
      %p100 = scmp.eq.s32.totalorder %s27, 0
      %p101 = por %p99, %p100
      %s103 = sadd.s32 %s102, 1
      %p106 = scmp.eq.s32.totalorder %s21, 1
      %p107 = scmp.ne.s32.totalorder %s102, %s104
      %p108 = scmp.eq.s32.totalorder %s21, 0
      %p109 = por %p107, %p108
      %p110 = scmp.ne.s32.totalorder %s102, %s104
      %p111 = scmp.eq.s32.totalorder %s26, 1
      %p112 = por %p110, %p111
      %p113 = scmp.ne.s32.totalorder %s104, %s105
      %p114 = scmp.eq.s32.totalorder %s26, 0
      %p115 = por %p113, %p114
      %p116 = scmp.ne.s32.totalorder %s104, %s105
      %p117 = scmp.eq.s32.totalorder %s27, 1
      %p118 = por %p116, %p117
      %p120 = scmp.ne.s32.totalorder %s105, %s119
      %p121 = scmp.eq.s32.totalorder %s27, 0
      %p122 = por %p120, %p121
      %s124 = sadd.s32 %s123, 1
      %p127 = scmp.eq.s32.totalorder %s21, 1
      %p128 = scmp.ne.s32.totalorder %s123, %s125
      %p129 = scmp.eq.s32.totalorder %s21, 0
      %p130 = por %p128, %p129
      %p131 = scmp.ne.s32.totalorder %s123, %s125
      %p132 = scmp.eq.s32.totalorder %s26, 1
      %p133 = por %p131, %p132
      %p134 = scmp.ne.s32.totalorder %s125, %s126
      %p135 = scmp.eq.s32.totalorder %s26, 0
      %p136 = por %p134, %p135
      %p137 = scmp.ne.s32.totalorder %s125, %s126
      %p138 = scmp.eq.s32.totalorder %s27, 1
      %p139 = por %p137, %p138
      %p141 = scmp.ne.s32.totalorder %s126, %s140
      %p142 = scmp.eq.s32.totalorder %s27, 0
      %p143 = por %p141, %p142
      %s145 = sadd.s32 %s144, 1
      %p148 = scmp.eq.s32.totalorder %s21, 1
      %p149 = scmp.ne.s32.totalorder %s144, %s146
      %p150 = scmp.eq.s32.totalorder %s21, 0
      %p151 = por %p149, %p150
      %p152 = scmp.ne.s32.totalorder %s144, %s146
      %p153 = scmp.eq.s32.totalorder %s26, 1
      %p154 = por %p152, %p153
      %p155 = scmp.ne.s32.totalorder %s146, %s147
      %p156 = scmp.eq.s32.totalorder %s26, 0
      %p157 = por %p155, %p156
      %p158 = scmp.ne.s32.totalorder %s146, %s147
      %p159 = scmp.eq.s32.totalorder %s27, 1
      %p160 = por %p158, %p159
      %p162 = scmp.ne.s32.totalorder %s147, %s161
      %p163 = scmp.eq.s32.totalorder %s27, 0
      %p164 = por %p162, %p163
      %s166 = sadd.s32 %s165, 1
      %p169 = scmp.eq.s32.totalorder %s21, 1
      %p170 = scmp.ne.s32.totalorder %s165, %s167
      %p171 = scmp.eq.s32.totalorder %s21, 0
      %p172 = por %p170, %p171
      %p173 = scmp.ne.s32.totalorder %s165, %s167
      %p174 = scmp.eq.s32.totalorder %s26, 1
      %p175 = por %p173, %p174
      %p176 = scmp.ne.s32.totalorder %s167, %s168
      %p177 = scmp.eq.s32.totalorder %s26, 0
      %p178 = por %p176, %p177
      %p179 = scmp.ne.s32.totalorder %s167, %s168
      %p180 = scmp.eq.s32.totalorder %s27, 1
      %p181 = por %p179, %p180
      %p183 = scmp.ne.s32.totalorder %s168, %s182
      %p184 = scmp.eq.s32.totalorder %s27, 0
      %p185 = por %p183, %p184
      %s187 = sadd.s32 %s186, 1
      %p190 = scmp.eq.s32.totalorder %s21, 1
      %p191 = scmp.ne.s32.totalorder %s186, %s188
      %p192 = scmp.eq.s32.totalorder %s21, 0
      %p193 = por %p191, %p192
      %p194 = scmp.ne.s32.totalorder %s186, %s188
      %p195 = scmp.eq.s32.totalorder %s26, 1
      %p196 = por %p194, %p195
      %p197 = scmp.ne.s32.totalorder %s188, %s189
      %p198 = scmp.eq.s32.totalorder %s26, 0
      %p199 = por %p197, %p198
      %p200 = scmp.ne.s32.totalorder %s188, %s189
      %p201 = scmp.eq.s32.totalorder %s27, 1
      %p202 = por %p200, %p201
      %p204 = scmp.ne.s32.totalorder %s189, %s203
      %p205 = scmp.eq.s32.totalorder %s27, 0
      %p206 = por %p204, %p205
      %s208 = sadd.s32 %s207, 1
      %p211 = scmp.eq.s32.totalorder %s21, 1
      %p212 = scmp.ne.s32.totalorder %s207, %s209
      %p213 = scmp.eq.s32.totalorder %s21, 0
      %p214 = por %p212, %p213
      %p215 = scmp.ne.s32.totalorder %s207, %s209
      %p216 = scmp.eq.s32.totalorder %s26, 1
      %p217 = por %p215, %p216
      %p218 = scmp.ne.s32.totalorder %s209, %s210
      %p219 = scmp.eq.s32.totalorder %s26, 0
      %p220 = por %p218, %p219
      %p221 = scmp.ne.s32.totalorder %s209, %s210
      %p222 = scmp.eq.s32.totalorder %s27, 1
      %p223 = por %p221, %p222
      %p225 = scmp.ne.s32.totalorder %s210, %s224
      %p226 = scmp.eq.s32.totalorder %s27, 0
      %p227 = por %p225, %p226
      %s229 = sadd.s32 %s228, 1
      %p232 = scmp.eq.s32.totalorder %s21, 1
      %p233 = scmp.ne.s32.totalorder %s228, %s230
      %p234 = scmp.eq.s32.totalorder %s21, 0
      %p235 = por %p233, %p234
      %p236 = scmp.ne.s32.totalorder %s228, %s230
      %p237 = scmp.eq.s32.totalorder %s26, 1
      %p238 = por %p236, %p237
      %p239 = scmp.ne.s32.totalorder %s230, %s231
      %p240 = scmp.eq.s32.totalorder %s26, 0
      %p241 = por %p239, %p240
      %p242 = scmp.ne.s32.totalorder %s230, %s231
      %p243 = scmp.eq.s32.totalorder %s27, 1
      %p244 = por %p242, %p243
      %p246 = scmp.ne.s32.totalorder %s231, %s245
      %p247 = scmp.eq.s32.totalorder %s27, 0
      %p248 = por %p246, %p247
      %s249 = ssub.s32 %s21, %s28
      %p250 = scmp.eq.s32.totalorder %s249, 0
      %s252 = sadd.s32 %s251, 1
      %s253 = scalar_select %p250, %s251, %s252
      %p256 = pneg %p250
      %p257 = scmp.eq.s32.totalorder %s21, 1
      %p258 = por %p256, %p257
      %p259 = scmp.ne.s32.totalorder %s251, %s254
      %p260 = scmp.eq.s32.totalorder %s21, 0
      %p261 = por %p259, %p260
      %p262 = scmp.ne.s32.totalorder %s251, %s254
      %p263 = scmp.eq.s32.totalorder %s26, 1
      %p264 = por %p262, %p263
      %p265 = scmp.ne.s32.totalorder %s254, %s255
      %p266 = scmp.eq.s32.totalorder %s26, 0
      %p267 = por %p265, %p266
      %p268 = scmp.ne.s32.totalorder %s254, %s255
      %p269 = scmp.eq.s32.totalorder %s27, 1
      %p270 = por %p268, %p269
      %p272 = scmp.ne.s32.totalorder %s255, %s271
      %p273 = scmp.eq.s32.totalorder %s27, 0
      %p274 = por %p272, %p273
      %p275 = scmp.le.s32.totalorder 1, %s21
      %p276 = scmp.lt.s32.totalorder %s21, 3
      %p277 = pnand %p275, %p276
      %p278 = pneg %p277
      // Predicated region
      $region9: #{tpu_custom_call.1} parent=5 // pred_check
        _
      $region10: #{tpu_custom_call.1} parent=5 // pred_check_branch
        %280 = sbr.rel (%p277) target = $region12
      $region11: #{tpu_custom_call.1} parent=5 // pred_region
        %s281 = ssub.s32 %s21, 1
        // Predicated region
        $region13: #{tpu_custom_call.1} parent=11 // pred_check
          %p282 = pneg %p94
        $region14: #{tpu_custom_call.1} parent=11 // pred_check_branch
          %284 = sbr.rel (%p282) target = $region16
        $region15: #{tpu_custom_call.1} parent=11 // pred_region
          _
        $region16: #{tpu_custom_call.1} parent=11 // pred_fallthru
          _
        // Predicated region
        $region17: #{tpu_custom_call.1} parent=11 // pred_check
          %p285 = pneg %p115
        $region18: #{tpu_custom_call.1} parent=11 // pred_check_branch
          %287 = sbr.rel (%p285) target = $region20
        $region19: #{tpu_custom_call.1} parent=11 // pred_region
          _
        $region20: #{tpu_custom_call.1} parent=11 // pred_fallthru
          _
        // Predicated region
        $region21: #{tpu_custom_call.1} parent=11 // pred_check
          %p288 = pneg %p136
        $region22: #{tpu_custom_call.1} parent=11 // pred_check_branch
          %290 = sbr.rel (%p288) target = $region24
        $region23: #{tpu_custom_call.1} parent=11 // pred_region
          _
        $region24: #{tpu_custom_call.1} parent=11 // pred_fallthru
          _
        // Predicated region
        $region25: #{tpu_custom_call.1} parent=11 // pred_check
          %p291 = pneg %p157
        $region26: #{tpu_custom_call.1} parent=11 // pred_check_branch
          %293 = sbr.rel (%p291) target = $region28
        $region27: #{tpu_custom_call.1} parent=11 // pred_region
          _
        $region28: #{tpu_custom_call.1} parent=11 // pred_fallthru
          _
        // Predicated region
        $region29: #{tpu_custom_call.1} parent=11 // pred_check
          %p294 = pneg %p178
        $region30: #{tpu_custom_call.1} parent=11 // pred_check_branch
          %296 = sbr.rel (%p294) target = $region32
        $region31: #{tpu_custom_call.1} parent=11 // pred_region
          _
        $region32: #{tpu_custom_call.1} parent=11 // pred_fallthru
          _
        // Predicated region
        $region33: #{tpu_custom_call.1} parent=11 // pred_check
          %p297 = pneg %p199
        $region34: #{tpu_custom_call.1} parent=11 // pred_check_branch
          %299 = sbr.rel (%p297) target = $region36
        $region35: #{tpu_custom_call.1} parent=11 // pred_region
          _
        $region36: #{tpu_custom_call.1} parent=11 // pred_fallthru
          _
        // Predicated region
        $region37: #{tpu_custom_call.1} parent=11 // pred_check
          %p300 = pneg %p220
        $region38: #{tpu_custom_call.1} parent=11 // pred_check_branch
          %302 = sbr.rel (%p300) target = $region40
        $region39: #{tpu_custom_call.1} parent=11 // pred_region
          _
        $region40: #{tpu_custom_call.1} parent=11 // pred_fallthru
          _
        // Predicated region
        $region41: #{tpu_custom_call.1} parent=11 // pred_check
          %p303 = pneg %p241
        $region42: #{tpu_custom_call.1} parent=11 // pred_check_branch
          %305 = sbr.rel (%p303) target = $region44
        $region43: #{tpu_custom_call.1} parent=11 // pred_region
          _
        $region44: #{tpu_custom_call.1} parent=11 // pred_fallthru
          _
      $region12: #{tpu_custom_call.1} parent=5 // pred_fallthru
        _
      %p306 = scmp.lt.s32.totalorder %s21, 2
      // Predicated region
      $region45: #{tpu_custom_call.1} parent=5 // pred_check
        %p307 = pneg %p306
      $region46: #{tpu_custom_call.1} parent=5 // pred_check_branch
        %309 = sbr.rel (%p307) target = $region48
      $region47: #{tpu_custom_call.1} parent=5 // pred_region
        // Predicated region
        $region49: #{tpu_custom_call.1} parent=47 // pred_check
          %p310 = pneg %p41
        $region50: #{tpu_custom_call.1} parent=47 // pred_check_branch
          %312 = sbr.rel (%p310) target = $region52
        $region51: #{tpu_custom_call.1} parent=47 // pred_region
          %s313 = smul.u32 64, %s21
          %p314 = scmp.lt.s32.totalorder %s313, 127
          %s315 = scalar_select %p314, %s313, 127
          %s316 = smul.addr %s315, 8
          %s317 = scalar_lea.vmem %s0, %s316
          %s318 = smul.u32 64, %s21
        $region52: #{tpu_custom_call.1} parent=47 // pred_fallthru
          _
        // Predicated region
        $region53: #{tpu_custom_call.1} parent=47 // pred_check
          %p319 = pneg %p67
        $region54: #{tpu_custom_call.1} parent=47 // pred_check_branch
          %321 = sbr.rel (%p319) target = $region56
        $region55: #{tpu_custom_call.1} parent=47 // pred_region
          %s322 = smul.u32 64, %s21
          %p323 = scmp.lt.s32.totalorder %s322, 127
          %s324 = scalar_select %p323, %s322, 127
          %s325 = smul.addr %s324, 8
          %s326 = scalar_lea.vmem %s1, %s325
          %s327 = smul.u32 64, %s21
        $region56: #{tpu_custom_call.1} parent=47 // pred_fallthru
          _
      $region48: #{tpu_custom_call.1} parent=5 // pred_fallthru
        _
      %p328 = scmp.le.s32.totalorder 1, %s21
      %p329 = scmp.lt.s32.totalorder %s21, 3
      %p330 = pnand %p328, %p329
      %p331 = pneg %p330
      // Predicated region
      $region57: #{tpu_custom_call.1} parent=5 // pred_check
        _
      $region58: #{tpu_custom_call.1} parent=5 // pred_check_branch
        %333 = sbr.rel (%p330) target = $region60
      $region59: #{tpu_custom_call.1} parent=5 // pred_region
        %s334 = ssub.s32 %s21, 1
        %s335 = smul.u32 64, %s26
        %p336 = scmp.lt.s32.totalorder %s335, 127
        %s337 = scalar_select %p336, %s335, 127
        %s338 = smul.addr %s337, 8
        %s339 = scalar_lea.vmem %s0, %s338
        %p340 = pneg %p47
        %p341 = pneg %p44
        %s342 = smul.u32 64, %s26
        %p343 = scmp.lt.s32.totalorder %s342, 127
        %s344 = scalar_select %p343, %s342, 127
        %s345 = smul.addr %s344, 8
        %s346 = scalar_lea.vmem %s1, %s345
        %p347 = pneg %p73
        %p348 = pneg %p70
        %p349 = pneg %p94
        %p350 = pneg %p91
        %p351 = pneg %p115
        %p352 = pneg %p112
        %p353 = pneg %p136
        %p354 = pneg %p133
        %p355 = pneg %p157
        %p356 = pneg %p154
        %p357 = pneg %p178
        %p358 = pneg %p175
        %p359 = pneg %p199
        %p360 = pneg %p196
        %p361 = pneg %p220
        %p362 = pneg %p217
        %p363 = pneg %p241
        %p364 = pneg %p238
        %p365 = pneg %p267
        %p366 = pneg %p264
        %s367 = sand.u32 %s254, 1
        %s368 = scalar_lea.sflag [#allocation4], %s367
        %s369 = sand.u32 %s254, 1
        %s370 = smul.addr %s369, 512
        %s371 = scalar_lea.vmem [#allocation3], %s370
        %s372 = smul.u32 64, %s26
        %p373 = scmp.lt.s32.totalorder %s372, 127
        %s374 = scalar_select %p373, %s372, 127
        %s375 = smul.addr %s374, 8
        %s376 = scalar_lea.vmem %s0, %s375
        %s377 = smul.u32 64, %s26
        %s378 = smul.u32 64, %s26
        %p379 = scmp.lt.s32.totalorder %s378, 127
        %s380 = scalar_select %p379, %s378, 127
        %s381 = smul.addr %s380, 8
        %s382 = scalar_lea.vmem %s1, %s381
        %s383 = smul.u32 64, %s26
        %s384 = smul.u32 64, %s26
        %v385 = vld [vmem:[%s376] sm:$0xff]
        %v386 = vld [vmem:[%s376 + $0x8] sm:$0xff]
        %v387 = vld [vmem:[%s376 + $0x10] sm:$0xff]
        %v388 = vld [vmem:[%s376 + $0x18] sm:$0xff]
        %v389 = vld [vmem:[%s376 + $0x20] sm:$0xff]
        %v390 = vld [vmem:[%s376 + $0x28] sm:$0xff]
        %v391 = vld [vmem:[%s376 + $0x30] sm:$0xff]
        %v392 = vld [vmem:[%s376 + $0x38] sm:$0xff]
        %v393 = vld [vmem:[%s376 + $0x40] sm:$0xff]
        %v394 = vld [vmem:[%s376 + $0x48] sm:$0xff]
        %v395 = vld [vmem:[%s376 + $0x50] sm:$0xff]
        %v396 = vld [vmem:[%s376 + $0x58] sm:$0xff]
        %v397 = vld [vmem:[%s376 + $0x60] sm:$0xff]
        %v398 = vld [vmem:[%s376 + $0x68] sm:$0xff]
        %v399 = vld [vmem:[%s376 + $0x70] sm:$0xff]
        %v400 = vld [vmem:[%s376 + $0x78] sm:$0xff]
        %v401 = vld [vmem:[%s376 + $0x80] sm:$0xff]
        %v402 = vld [vmem:[%s376 + $0x88] sm:$0xff]
        %v403 = vld [vmem:[%s376 + $0x90] sm:$0xff]
        %v404 = vld [vmem:[%s376 + $0x98] sm:$0xff]
        %v405 = vld [vmem:[%s376 + $0xa0] sm:$0xff]
        %v406 = vld [vmem:[%s376 + $0xa8] sm:$0xff]
        %v407 = vld [vmem:[%s376 + $0xb0] sm:$0xff]
        %v408 = vld [vmem:[%s376 + $0xb8] sm:$0xff]
        %v409 = vld [vmem:[%s376 + $0xc0] sm:$0xff]
        %v410 = vld [vmem:[%s376 + $0xc8] sm:$0xff]
        %v411 = vld [vmem:[%s376 + $0xd0] sm:$0xff]
        %v412 = vld [vmem:[%s376 + $0xd8] sm:$0xff]
        %v413 = vld [vmem:[%s376 + $0xe0] sm:$0xff]
        %v414 = vld [vmem:[%s376 + $0xe8] sm:$0xff]
        %v415 = vld [vmem:[%s376 + $0xf0] sm:$0xff]
        %v416 = vld [vmem:[%s376 + $0xf8] sm:$0xff]
        %v417 = vld [vmem:[%s376 + $0x100] sm:$0xff]
        %v418 = vld [vmem:[%s376 + $0x108] sm:$0xff]
        %v419 = vld [vmem:[%s376 + $0x110] sm:$0xff]
        %v420 = vld [vmem:[%s376 + $0x118] sm:$0xff]
        %v421 = vld [vmem:[%s376 + $0x120] sm:$0xff]
        %v422 = vld [vmem:[%s376 + $0x128] sm:$0xff]
        %v423 = vld [vmem:[%s376 + $0x130] sm:$0xff]
        %v424 = vld [vmem:[%s376 + $0x138] sm:$0xff]
        %v425 = vld [vmem:[%s376 + $0x140] sm:$0xff]
        %v426 = vld [vmem:[%s376 + $0x148] sm:$0xff]
        %v427 = vld [vmem:[%s376 + $0x150] sm:$0xff]
        %v428 = vld [vmem:[%s376 + $0x158] sm:$0xff]
        %v429 = vld [vmem:[%s376 + $0x160] sm:$0xff]
        %v430 = vld [vmem:[%s376 + $0x168] sm:$0xff]
        %v431 = vld [vmem:[%s376 + $0x170] sm:$0xff]
        %v432 = vld [vmem:[%s376 + $0x178] sm:$0xff]
        %v433 = vld [vmem:[%s376 + $0x180] sm:$0xff]
        %v434 = vld [vmem:[%s376 + $0x188] sm:$0xff]
        %v435 = vld [vmem:[%s376 + $0x190] sm:$0xff]
        %v436 = vld [vmem:[%s376 + $0x198] sm:$0xff]
        %v437 = vld [vmem:[%s376 + $0x1a0] sm:$0xff]
        %v438 = vld [vmem:[%s376 + $0x1a8] sm:$0xff]
        %v439 = vld [vmem:[%s376 + $0x1b0] sm:$0xff]
        %v440 = vld [vmem:[%s376 + $0x1b8] sm:$0xff]
        %v441 = vld [vmem:[%s376 + $0x1c0] sm:$0xff]
        %v442 = vld [vmem:[%s376 + $0x1c8] sm:$0xff]
        %v443 = vld [vmem:[%s376 + $0x1d0] sm:$0xff]
        %v444 = vld [vmem:[%s376 + $0x1d8] sm:$0xff]
        %v445 = vld [vmem:[%s376 + $0x1e0] sm:$0xff]
        %v446 = vld [vmem:[%s376 + $0x1e8] sm:$0xff]
        %v447 = vld [vmem:[%s376 + $0x1f0] sm:$0xff]
        %v448 = vld [vmem:[%s376 + $0x1f8] sm:$0xff]
        %v449 = vld [vmem:[%s382] sm:$0xff]
        %v450 = vld [vmem:[%s382 + $0x8] sm:$0xff]
        %v451 = vld [vmem:[%s382 + $0x10] sm:$0xff]
        %v452 = vld [vmem:[%s382 + $0x18] sm:$0xff]
        %v453 = vld [vmem:[%s382 + $0x20] sm:$0xff]
        %v454 = vld [vmem:[%s382 + $0x28] sm:$0xff]
        %v455 = vld [vmem:[%s382 + $0x30] sm:$0xff]
        %v456 = vld [vmem:[%s382 + $0x38] sm:$0xff]
        %v457 = vld [vmem:[%s382 + $0x40] sm:$0xff]
        %v458 = vld [vmem:[%s382 + $0x48] sm:$0xff]
        %v459 = vld [vmem:[%s382 + $0x50] sm:$0xff]
        %v460 = vld [vmem:[%s382 + $0x58] sm:$0xff]
        %v461 = vld [vmem:[%s382 + $0x60] sm:$0xff]
        %v462 = vld [vmem:[%s382 + $0x68] sm:$0xff]
        %v463 = vld [vmem:[%s382 + $0x70] sm:$0xff]
        %v464 = vld [vmem:[%s382 + $0x78] sm:$0xff]
        %v465 = vld [vmem:[%s382 + $0x80] sm:$0xff]
        %v466 = vld [vmem:[%s382 + $0x88] sm:$0xff]
        %v467 = vld [vmem:[%s382 + $0x90] sm:$0xff]
        %v468 = vld [vmem:[%s382 + $0x98] sm:$0xff]
        %v469 = vld [vmem:[%s382 + $0xa0] sm:$0xff]
        %v470 = vld [vmem:[%s382 + $0xa8] sm:$0xff]
        %v471 = vld [vmem:[%s382 + $0xb0] sm:$0xff]
        %v472 = vld [vmem:[%s382 + $0xb8] sm:$0xff]
        %v473 = vld [vmem:[%s382 + $0xc0] sm:$0xff]
        %v474 = vld [vmem:[%s382 + $0xc8] sm:$0xff]
        %v475 = vld [vmem:[%s382 + $0xd0] sm:$0xff]
        %v476 = vld [vmem:[%s382 + $0xd8] sm:$0xff]
        %v477 = vld [vmem:[%s382 + $0xe0] sm:$0xff]
        %v478 = vld [vmem:[%s382 + $0xe8] sm:$0xff]
        %v479 = vld [vmem:[%s382 + $0xf0] sm:$0xff]
        %v480 = vld [vmem:[%s382 + $0xf8] sm:$0xff]
        %v481 = vld [vmem:[%s382 + $0x100] sm:$0xff]
        %v482 = vld [vmem:[%s382 + $0x108] sm:$0xff]
        %v483 = vld [vmem:[%s382 + $0x110] sm:$0xff]
        %v484 = vld [vmem:[%s382 + $0x118] sm:$0xff]
        %v485 = vld [vmem:[%s382 + $0x120] sm:$0xff]
        %v486 = vld [vmem:[%s382 + $0x128] sm:$0xff]
        %v487 = vld [vmem:[%s382 + $0x130] sm:$0xff]
        %v488 = vld [vmem:[%s382 + $0x138] sm:$0xff]
        %v489 = vld [vmem:[%s382 + $0x140] sm:$0xff]
        %v490 = vld [vmem:[%s382 + $0x148] sm:$0xff]
        %v491 = vld [vmem:[%s382 + $0x150] sm:$0xff]
        %v492 = vld [vmem:[%s382 + $0x158] sm:$0xff]
        %v493 = vld [vmem:[%s382 + $0x160] sm:$0xff]
        %v494 = vld [vmem:[%s382 + $0x168] sm:$0xff]
        %v495 = vld [vmem:[%s382 + $0x170] sm:$0xff]
        %v496 = vld [vmem:[%s382 + $0x178] sm:$0xff]
        %v497 = vld [vmem:[%s382 + $0x180] sm:$0xff]
        %v498 = vld [vmem:[%s382 + $0x188] sm:$0xff]
        %v499 = vld [vmem:[%s382 + $0x190] sm:$0xff]
        %v500 = vld [vmem:[%s382 + $0x198] sm:$0xff]
        %v501 = vld [vmem:[%s382 + $0x1a0] sm:$0xff]
        %v502 = vld [vmem:[%s382 + $0x1a8] sm:$0xff]
        %v503 = vld [vmem:[%s382 + $0x1b0] sm:$0xff]
        %v504 = vld [vmem:[%s382 + $0x1b8] sm:$0xff]
        %v505 = vld [vmem:[%s382 + $0x1c0] sm:$0xff]
        %v506 = vld [vmem:[%s382 + $0x1c8] sm:$0xff]
        %v507 = vld [vmem:[%s382 + $0x1d0] sm:$0xff]
        %v508 = vld [vmem:[%s382 + $0x1d8] sm:$0xff]
        %v509 = vld [vmem:[%s382 + $0x1e0] sm:$0xff]
        %v510 = vld [vmem:[%s382 + $0x1e8] sm:$0xff]
        %v511 = vld [vmem:[%s382 + $0x1f0] sm:$0xff]
        %v512 = vld [vmem:[%s382 + $0x1f8] sm:$0xff]
        %v513 = vld [vmem:[%s2] sm:$0xff]
        %v514 = vld [vmem:[%s3] sm:$0x1]
        %v516 = vlaneseq
        %v517 = vshrl.u32 %v516, 7
        %v518 = vsub.s32 0, %v517
        %v519 = vrot.slane %v514, %v518
        %vm521 = vcmask 64512
        %v523 = vsel %vm521, %v385, 0
        %v526 = vsel %vm521, %v386, 0
        %v529 = vsel %vm521, %v387, 0
        %v532 = vsel %vm521, %v388, 0
        %v535 = vsel %vm521, %v389, 0
        %v538 = vsel %vm521, %v390, 0
        %v541 = vsel %vm521, %v391, 0
        %v544 = vsel %vm521, %v392, 0
        %v547 = vsel %vm521, %v393, 0
        %v550 = vsel %vm521, %v394, 0
        %v553 = vsel %vm521, %v395, 0
        %v556 = vsel %vm521, %v396, 0
        %v559 = vsel %vm521, %v397, 0
        %v562 = vsel %vm521, %v398, 0
        %v565 = vsel %vm521, %v399, 0
        %v568 = vsel %vm521, %v400, 0
        %v571 = vsel %vm521, %v401, 0
        %v574 = vsel %vm521, %v402, 0
        %v577 = vsel %vm521, %v403, 0
        %v580 = vsel %vm521, %v404, 0
        %v583 = vsel %vm521, %v405, 0
        %v586 = vsel %vm521, %v406, 0
        %v589 = vsel %vm521, %v407, 0
        %v592 = vsel %vm521, %v408, 0
        %v595 = vsel %vm521, %v409, 0
        %v598 = vsel %vm521, %v410, 0
        %v601 = vsel %vm521, %v411, 0
        %v604 = vsel %vm521, %v412, 0
        %v607 = vsel %vm521, %v413, 0
        %v610 = vsel %vm521, %v414, 0
        %v613 = vsel %vm521, %v415, 0
        %v616 = vsel %vm521, %v416, 0
        %v619 = vsel %vm521, %v417, 0
        %v622 = vsel %vm521, %v418, 0
        %v625 = vsel %vm521, %v419, 0
        %v628 = vsel %vm521, %v420, 0
        %v631 = vsel %vm521, %v421, 0
        %v634 = vsel %vm521, %v422, 0
        %v637 = vsel %vm521, %v423, 0
        %v640 = vsel %vm521, %v424, 0
        %v643 = vsel %vm521, %v425, 0
        %v646 = vsel %vm521, %v426, 0
        %v649 = vsel %vm521, %v427, 0
        %v652 = vsel %vm521, %v428, 0
        %v655 = vsel %vm521, %v429, 0
        %v658 = vsel %vm521, %v430, 0
        %v661 = vsel %vm521, %v431, 0
        %v664 = vsel %vm521, %v432, 0
        %v667 = vsel %vm521, %v433, 0
        %v670 = vsel %vm521, %v434, 0
        %v673 = vsel %vm521, %v435, 0
        %v676 = vsel %vm521, %v436, 0
        %v679 = vsel %vm521, %v437, 0
        %v682 = vsel %vm521, %v438, 0
        %v685 = vsel %vm521, %v439, 0
        %v688 = vsel %vm521, %v440, 0
        %v691 = vsel %vm521, %v441, 0
        %v694 = vsel %vm521, %v442, 0
        %v697 = vsel %vm521, %v443, 0
        %v700 = vsel %vm521, %v444, 0
        %v703 = vsel %vm521, %v445, 0
        %v706 = vsel %vm521, %v446, 0
        %v709 = vsel %vm521, %v447, 0
        %v712 = vsel %vm521, %v448, 0
        %714 = vmatprep.subr.mxu0 0.0
        %715 = vmatpush1.msra.mxu0 %v513
        %716 = vmatprep.subr.mxu0 0.0
        %717 = vmatpush1.msra.mxu0 0.0
        %718 = vmatprep.subr.mxu0 0.0
        %719 = vmatpush1.msra.mxu0 0.0
        %720 = vmatprep.subr.mxu0 0.0
        %721 = vmatpush1.msra.mxu0 0.0
        %722 = vmatprep.subr.mxu0 0.0
        %723 = vmatpush1.msra.mxu0 0.0
        %724 = vmatprep.subr.mxu0 0.0
        %725 = vmatpush1.msra.mxu0 0.0
        %726 = vmatprep.subr.mxu0 0.0
        %727 = vmatpush1.msra.mxu0 0.0
        %728 = vmatprep.subr.mxu0 0.0
        %729 = vmatpush1.msra.mxu0 0.0
        %730 = vmatprep.subr.mxu0 0.0
        %731 = vmatpush1.msra.mxu0 0.0
        %732 = vmatprep.subr.mxu0 0.0
        %733 = vmatpush1.msra.mxu0 0.0
        %734 = vmatprep.subr.mxu0 0.0
        %735 = vmatpush1.msra.mxu0 0.0
        %736 = vmatprep.subr.mxu0 0.0
        %737 = vmatpush1.msra.mxu0 0.0
        %738 = vmatprep.subr.mxu0 0.0
        %739 = vmatpush1.msra.mxu0 0.0
        %740 = vmatprep.subr.mxu0 0.0
        %741 = vmatpush1.msra.mxu0 0.0
        %742 = vmatprep.subr.mxu0 0.0
        %743 = vmatpush1.msra.mxu0 0.0
        %744 = vmatprep.subr.mxu0 0.0
        %745 = vmatpush1.msra.mxu0 0.0
        %746 = vmatprep.subr.mxu0 0.0
        %747 = vmatpush1.msra.mxu0 0.0
        %748 = vmatprep.subr.mxu0 0.0
        %749 = vmatpush1.msra.mxu0 0.0
        %750 = vmatprep.subr.mxu0 0.0
        %751 = vmatpush1.msra.mxu0 0.0
        %752 = vmatprep.subr.mxu0 0.0
        %753 = vmatpush1.msra.mxu0 0.0
        %754 = vmatprep.subr.mxu0 0.0
        %755 = vmatpush1.msra.mxu0 0.0
        %756 = vmatprep.subr.mxu0 0.0
        %757 = vmatpush1.msra.mxu0 0.0
        %758 = vmatprep.subr.mxu0 0.0
        %759 = vmatpush1.msra.mxu0 0.0
        %760 = vmatprep.subr.mxu0 0.0
        %761 = vmatpush1.msra.mxu0 0.0
        %762 = vmatprep.subr.mxu0 0.0
        %763 = vmatpush1.msra.mxu0 0.0
        %764 = vmatprep.subr.mxu0 0.0
        %765 = vmatpush1.msra.mxu0 0.0
        %766 = vmatprep.subr.mxu0 0.0
        %767 = vmatpush1.msra.mxu0 0.0
        %768 = vmatprep.subr.mxu0 0.0
        %769 = vmatpush1.msra.mxu0 0.0
        %770 = vmatprep.subr.mxu0 0.0
        %771 = vmatpush1.msra.mxu0 0.0
        %772 = vmatprep.subr.mxu0 0.0
        %773 = vmatpush1.msra.mxu0 0.0
        %774 = vmatprep.subr.mxu0 0.0
        %775 = vmatpush1.msra.mxu0 0.0
        %776 = vmatprep.subr.mxu0 0.0
        %777 = vmatpush1.msra.mxu0 0.0
        %778 = vmatprep.mubr.f32.mxu0 0.0
        %779 = vmatmul.mubr.f32.gmra.mrb[0].mxu0 %v523
        %v780 = vpop.f32.mrb[0].mxu0
        %v781 = vadd.f32 %v519, %v780
        %v782 = vpop.f32.mrb[0].mxu0
        %783 = vmatprep.mubr.f32.mxu0 0.0
        %784 = vmatmul.mubr.f32.gmra.mrb[0].mxu0 %v526
        %v785 = vpop.f32.mrb[0].mxu0
        %v786 = vadd.f32 %v519, %v785
        %v787 = vpop.f32.mrb[0].mxu0
        %788 = vmatprep.mubr.f32.mxu0 0.0
        %789 = vmatmul.mubr.f32.gmra.mrb[0].mxu0 %v529
        %v790 = vpop.f32.mrb[0].mxu0
        %v791 = vadd.f32 %v519, %v790
        %v792 = vpop.f32.mrb[0].mxu0
        %793 = vmatprep.mubr.f32.mxu0 0.0
        %794 = vmatmul.mubr.f32.gmra.mrb[0].mxu0 %v532
        %v795 = vpop.f32.mrb[0].mxu0
        %v796 = vadd.f32 %v519, %v795
        %v797 = vpop.f32.mrb[0].mxu0
        %798 = vmatprep.mubr.f32.mxu0 0.0
        %799 = vmatmul.mubr.f32.gmra.mrb[0].mxu0 %v535
        %v800 = vpop.f32.mrb[0].mxu0
        %v801 = vadd.f32 %v519, %v800
        %v802 = vpop.f32.mrb[0].mxu0
        %803 = vmatprep.mubr.f32.mxu0 0.0
        %804 = vmatmul.mubr.f32.gmra.mrb[0].mxu0 %v538
        %v805 = vpop.f32.mrb[0].mxu0
        %v806 = vadd.f32 %v519, %v805
        %v807 = vpop.f32.mrb[0].mxu0
        %808 = vmatprep.mubr.f32.mxu0 0.0
        %809 = vmatmul.mubr.f32.gmra.mrb[0].mxu0 %v541
        %v810 = vpop.f32.mrb[0].mxu0
        %v811 = vadd.f32 %v519, %v810
        %v812 = vpop.f32.mrb[0].mxu0
        %813 = vmatprep.mubr.f32.mxu0 0.0
        %814 = vmatmul.mubr.f32.gmra.mrb[0].mxu0 %v544
        %v815 = vpop.f32.mrb[0].mxu0
        %v816 = vadd.f32 %v519, %v815
        %v817 = vpop.f32.mrb[0].mxu0
        %818 = vmatprep.mubr.f32.mxu0 0.0
        %819 = vmatmul.mubr.f32.gmra.mrb[0].mxu0 %v547
        %v820 = vpop.f32.mrb[0].mxu0
        %v821 = vadd.f32 %v519, %v820
        %v822 = vpop.f32.mrb[0].mxu0
        %823 = vmatprep.mubr.f32.mxu0 0.0
        %824 = vmatmul.mubr.f32.gmra.mrb[0].mxu0 %v550
        %v825 = vpop.f32.mrb[0].mxu0
        %v826 = vadd.f32 %v519, %v825
        %v827 = vpop.f32.mrb[0].mxu0
        %828 = vmatprep.mubr.f32.mxu0 0.0
        %829 = vmatmul.mubr.f32.gmra.mrb[0].mxu0 %v553
        %v830 = vpop.f32.mrb[0].mxu0
        %v831 = vadd.f32 %v519, %v830
        %v832 = vpop.f32.mrb[0].mxu0
        %833 = vmatprep.mubr.f32.mxu0 0.0
        %834 = vmatmul.mubr.f32.gmra.mrb[0].mxu0 %v556
        %v835 = vpop.f32.mrb[0].mxu0
        %v836 = vadd.f32 %v519, %v835
        %v837 = vpop.f32.mrb[0].mxu0
        %838 = vmatprep.mubr.f32.mxu0 0.0
        %839 = vmatmul.mubr.f32.gmra.mrb[0].mxu0 %v559
        %v840 = vpop.f32.mrb[0].mxu0
        %v841 = vadd.f32 %v519, %v840
        %v842 = vpop.f32.mrb[0].mxu0
        %843 = vmatprep.mubr.f32.mxu0 0.0
        %844 = vmatmul.mubr.f32.gmra.mrb[0].mxu0 %v562
        %v845 = vpop.f32.mrb[0].mxu0
        %v846 = vadd.f32 %v519, %v845
        %v847 = vpop.f32.mrb[0].mxu0
        %848 = vmatprep.mubr.f32.mxu0 0.0
        %849 = vmatmul.mubr.f32.gmra.mrb[0].mxu0 %v565
        %v850 = vpop.f32.mrb[0].mxu0
        %v851 = vadd.f32 %v519, %v850
        %v852 = vpop.f32.mrb[0].mxu0
        %853 = vmatprep.mubr.f32.mxu0 0.0
        %854 = vmatmul.mubr.f32.gmra.mrb[0].mxu0 %v568
        %v855 = vpop.f32.mrb[0].mxu0
        %v856 = vadd.f32 %v519, %v855
        %v857 = vpop.f32.mrb[0].mxu0
        %858 = vmatprep.mubr.f32.mxu0 0.0
        %859 = vmatmul.mubr.f32.gmra.mrb[0].mxu0 %v571
        %v860 = vpop.f32.mrb[0].mxu0
        %v861 = vadd.f32 %v519, %v860
        %v862 = vpop.f32.mrb[0].mxu0
        %863 = vmatprep.mubr.f32.mxu0 0.0
        %864 = vmatmul.mubr.f32.gmra.mrb[0].mxu0 %v574
        %v865 = vpop.f32.mrb[0].mxu0
        %v866 = vadd.f32 %v519, %v865
        %v867 = vpop.f32.mrb[0].mxu0
        %868 = vmatprep.mubr.f32.mxu0 0.0
        %869 = vmatmul.mubr.f32.gmra.mrb[0].mxu0 %v577
        %v870 = vpop.f32.mrb[0].mxu0
        %v871 = vadd.f32 %v519, %v870
        %v872 = vpop.f32.mrb[0].mxu0
        %873 = vmatprep.mubr.f32.mxu0 0.0
        %874 = vmatmul.mubr.f32.gmra.mrb[0].mxu0 %v580
        %v875 = vpop.f32.mrb[0].mxu0
        %v876 = vadd.f32 %v519, %v875
        %v877 = vpop.f32.mrb[0].mxu0
        %878 = vmatprep.mubr.f32.mxu0 0.0
        %879 = vmatmul.mubr.f32.gmra.mrb[0].mxu0 %v583
        %v880 = vpop.f32.mrb[0].mxu0
        %v881 = vadd.f32 %v519, %v880
        %v882 = vpop.f32.mrb[0].mxu0
        %883 = vmatprep.mubr.f32.mxu0 0.0
        %884 = vmatmul.mubr.f32.gmra.mrb[0].mxu0 %v586
        %v885 = vpop.f32.mrb[0].mxu0
        %v886 = vadd.f32 %v519, %v885
        %v887 = vpop.f32.mrb[0].mxu0
        %888 = vmatprep.mubr.f32.mxu0 0.0
        %889 = vmatmul.mubr.f32.gmra.mrb[0].mxu0 %v589
        %v890 = vpop.f32.mrb[0].mxu0
        %v891 = vadd.f32 %v519, %v890
        %v892 = vpop.f32.mrb[0].mxu0
        %893 = vmatprep.mubr.f32.mxu0 0.0
        %894 = vmatmul.mubr.f32.gmra.mrb[0].mxu0 %v592
        %v895 = vpop.f32.mrb[0].mxu0
        %v896 = vadd.f32 %v519, %v895
        %v897 = vpop.f32.mrb[0].mxu0
        %898 = vmatprep.mubr.f32.mxu0 0.0
        %899 = vmatmul.mubr.f32.gmra.mrb[0].mxu0 %v595
        %v900 = vpop.f32.mrb[0].mxu0
        %v901 = vadd.f32 %v519, %v900
        %v902 = vpop.f32.mrb[0].mxu0
        %903 = vmatprep.mubr.f32.mxu0 0.0
        %904 = vmatmul.mubr.f32.gmra.mrb[0].mxu0 %v598
        %v905 = vpop.f32.mrb[0].mxu0
        %v906 = vadd.f32 %v519, %v905
        %v907 = vpop.f32.mrb[0].mxu0
        %908 = vmatprep.mubr.f32.mxu0 0.0
        %909 = vmatmul.mubr.f32.gmra.mrb[0].mxu0 %v601
        %v910 = vpop.f32.mrb[0].mxu0
        %v911 = vadd.f32 %v519, %v910
        %v912 = vpop.f32.mrb[0].mxu0
        %913 = vmatprep.mubr.f32.mxu0 0.0
        %914 = vmatmul.mubr.f32.gmra.mrb[0].mxu0 %v604
        %v915 = vpop.f32.mrb[0].mxu0
        %v916 = vadd.f32 %v519, %v915
        %v917 = vpop.f32.mrb[0].mxu0
        %918 = vmatprep.mubr.f32.mxu0 0.0
        %919 = vmatmul.mubr.f32.gmra.mrb[0].mxu0 %v607
        %v920 = vpop.f32.mrb[0].mxu0
        %v921 = vadd.f32 %v519, %v920
        %v922 = vpop.f32.mrb[0].mxu0
        %923 = vmatprep.mubr.f32.mxu0 0.0
        %924 = vmatmul.mubr.f32.gmra.mrb[0].mxu0 %v610
        %v925 = vpop.f32.mrb[0].mxu0
        %v926 = vadd.f32 %v519, %v925
        %v927 = vpop.f32.mrb[0].mxu0
        %928 = vmatprep.mubr.f32.mxu0 0.0
        %929 = vmatmul.mubr.f32.gmra.mrb[0].mxu0 %v613
        %v930 = vpop.f32.mrb[0].mxu0
        %v931 = vadd.f32 %v519, %v930
        %v932 = vpop.f32.mrb[0].mxu0
        %933 = vmatprep.mubr.f32.mxu0 0.0
        %934 = vmatmul.mubr.f32.gmra.mrb[0].mxu0 %v616
        %v935 = vpop.f32.mrb[0].mxu0
        %v936 = vadd.f32 %v519, %v935
        %v937 = vpop.f32.mrb[0].mxu0
        %938 = vmatprep.mubr.f32.mxu0 0.0
        %939 = vmatmul.mubr.f32.gmra.mrb[0].mxu0 %v619
        %v940 = vpop.f32.mrb[0].mxu0
        %v941 = vadd.f32 %v519, %v940
        %v942 = vpop.f32.mrb[0].mxu0
        %943 = vmatprep.mubr.f32.mxu0 0.0
        %944 = vmatmul.mubr.f32.gmra.mrb[0].mxu0 %v622
        %v945 = vpop.f32.mrb[0].mxu0
        %v946 = vadd.f32 %v519, %v945
        %v947 = vpop.f32.mrb[0].mxu0
        %948 = vmatprep.mubr.f32.mxu0 0.0
        %949 = vmatmul.mubr.f32.gmra.mrb[0].mxu0 %v625
        %v950 = vpop.f32.mrb[0].mxu0
        %v951 = vadd.f32 %v519, %v950
        %v952 = vpop.f32.mrb[0].mxu0
        %953 = vmatprep.mubr.f32.mxu0 0.0
        %954 = vmatmul.mubr.f32.gmra.mrb[0].mxu0 %v628
        %v955 = vpop.f32.mrb[0].mxu0
        %v956 = vadd.f32 %v519, %v955
        %v957 = vpop.f32.mrb[0].mxu0
        %958 = vmatprep.mubr.f32.mxu0 0.0
        %959 = vmatmul.mubr.f32.gmra.mrb[0].mxu0 %v631
        %v960 = vpop.f32.mrb[0].mxu0
        %v961 = vadd.f32 %v519, %v960
        %v962 = vpop.f32.mrb[0].mxu0
        %963 = vmatprep.mubr.f32.mxu0 0.0
        %964 = vmatmul.mubr.f32.gmra.mrb[0].mxu0 %v634
        %v965 = vpop.f32.mrb[0].mxu0
        %v966 = vadd.f32 %v519, %v965
        %v967 = vpop.f32.mrb[0].mxu0
        %968 = vmatprep.mubr.f32.mxu0 0.0
        %969 = vmatmul.mubr.f32.gmra.mrb[0].mxu0 %v637
        %v970 = vpop.f32.mrb[0].mxu0
        %v971 = vadd.f32 %v519, %v970
        %v972 = vpop.f32.mrb[0].mxu0
        %973 = vmatprep.mubr.f32.mxu0 0.0
        %974 = vmatmul.mubr.f32.gmra.mrb[0].mxu0 %v640
        %v975 = vpop.f32.mrb[0].mxu0
        %v976 = vadd.f32 %v519, %v975
        %v977 = vpop.f32.mrb[0].mxu0
        %978 = vmatprep.mubr.f32.mxu0 0.0
        %979 = vmatmul.mubr.f32.gmra.mrb[0].mxu0 %v643
        %v980 = vpop.f32.mrb[0].mxu0
        %v981 = vadd.f32 %v519, %v980
        %v982 = vpop.f32.mrb[0].mxu0
        %983 = vmatprep.mubr.f32.mxu0 0.0
        %984 = vmatmul.mubr.f32.gmra.mrb[0].mxu0 %v646
        %v985 = vpop.f32.mrb[0].mxu0
        %v986 = vadd.f32 %v519, %v985
        %v987 = vpop.f32.mrb[0].mxu0
        %988 = vmatprep.mubr.f32.mxu0 0.0
        %989 = vmatmul.mubr.f32.gmra.mrb[0].mxu0 %v649
        %v990 = vpop.f32.mrb[0].mxu0
        %v991 = vadd.f32 %v519, %v990
        %v992 = vpop.f32.mrb[0].mxu0
        %993 = vmatprep.mubr.f32.mxu0 0.0
        %994 = vmatmul.mubr.f32.gmra.mrb[0].mxu0 %v652
        %v995 = vpop.f32.mrb[0].mxu0
        %v996 = vadd.f32 %v519, %v995
        %v997 = vpop.f32.mrb[0].mxu0
        %998 = vmatprep.mubr.f32.mxu0 0.0
        %999 = vmatmul.mubr.f32.gmra.mrb[0].mxu0 %v655
        %v1000 = vpop.f32.mrb[0].mxu0
        %v1001 = vadd.f32 %v519, %v1000
        %v1002 = vpop.f32.mrb[0].mxu0
        %1003 = vmatprep.mubr.f32.mxu0 0.0
        %1004 = vmatmul.mubr.f32.gmra.mrb[0].mxu0 %v658
        %v1005 = vpop.f32.mrb[0].mxu0
        %v1006 = vadd.f32 %v519, %v1005
        %v1007 = vpop.f32.mrb[0].mxu0
        %1008 = vmatprep.mubr.f32.mxu0 0.0
        %1009 = vmatmul.mubr.f32.gmra.mrb[0].mxu0 %v661
        %v1010 = vpop.f32.mrb[0].mxu0
        %v1011 = vadd.f32 %v519, %v1010
        %v1012 = vpop.f32.mrb[0].mxu0
        %1013 = vmatprep.mubr.f32.mxu0 0.0
        %1014 = vmatmul.mubr.f32.gmra.mrb[0].mxu0 %v664
        %v1015 = vpop.f32.mrb[0].mxu0
        %v1016 = vadd.f32 %v519, %v1015
        %v1017 = vpop.f32.mrb[0].mxu0
        %1018 = vmatprep.mubr.f32.mxu0 0.0
        %1019 = vmatmul.mubr.f32.gmra.mrb[0].mxu0 %v667
        %v1020 = vpop.f32.mrb[0].mxu0
        %v1021 = vadd.f32 %v519, %v1020
        %v1022 = vpop.f32.mrb[0].mxu0
        %1023 = vmatprep.mubr.f32.mxu0 0.0
        %1024 = vmatmul.mubr.f32.gmra.mrb[0].mxu0 %v670
        %v1025 = vpop.f32.mrb[0].mxu0
        %v1026 = vadd.f32 %v519, %v1025
        %v1027 = vpop.f32.mrb[0].mxu0
        %1028 = vmatprep.mubr.f32.mxu0 0.0
        %1029 = vmatmul.mubr.f32.gmra.mrb[0].mxu0 %v673
        %v1030 = vpop.f32.mrb[0].mxu0
        %v1031 = vadd.f32 %v519, %v1030
        %v1032 = vpop.f32.mrb[0].mxu0
        %1033 = vmatprep.mubr.f32.mxu0 0.0
        %1034 = vmatmul.mubr.f32.gmra.mrb[0].mxu0 %v676
        %v1035 = vpop.f32.mrb[0].mxu0
        %v1036 = vadd.f32 %v519, %v1035
        %v1037 = vpop.f32.mrb[0].mxu0
        %1038 = vmatprep.mubr.f32.mxu0 0.0
        %1039 = vmatmul.mubr.f32.gmra.mrb[0].mxu0 %v679
        %v1040 = vpop.f32.mrb[0].mxu0
        %v1041 = vadd.f32 %v519, %v1040
        %v1042 = vpop.f32.mrb[0].mxu0
        %1043 = vmatprep.mubr.f32.mxu0 0.0
        %1044 = vmatmul.mubr.f32.gmra.mrb[0].mxu0 %v682
        %v1045 = vpop.f32.mrb[0].mxu0
        %v1046 = vadd.f32 %v519, %v1045
        %v1047 = vpop.f32.mrb[0].mxu0
        %1048 = vmatprep.mubr.f32.mxu0 0.0
        %1049 = vmatmul.mubr.f32.gmra.mrb[0].mxu0 %v685
        %v1050 = vpop.f32.mrb[0].mxu0
        %v1051 = vadd.f32 %v519, %v1050
        %v1052 = vpop.f32.mrb[0].mxu0
        %1053 = vmatprep.mubr.f32.mxu0 0.0
        %1054 = vmatmul.mubr.f32.gmra.mrb[0].mxu0 %v688
        %v1055 = vpop.f32.mrb[0].mxu0
        %v1056 = vadd.f32 %v519, %v1055
        %v1057 = vpop.f32.mrb[0].mxu0
        %1058 = vmatprep.mubr.f32.mxu0 0.0
        %1059 = vmatmul.mubr.f32.gmra.mrb[0].mxu0 %v691
        %v1060 = vpop.f32.mrb[0].mxu0
        %v1061 = vadd.f32 %v519, %v1060
        %v1062 = vpop.f32.mrb[0].mxu0
        %1063 = vmatprep.mubr.f32.mxu0 0.0
        %1064 = vmatmul.mubr.f32.gmra.mrb[0].mxu0 %v694
        %v1065 = vpop.f32.mrb[0].mxu0
        %v1066 = vadd.f32 %v519, %v1065
        %v1067 = vpop.f32.mrb[0].mxu0
        %1068 = vmatprep.mubr.f32.mxu0 0.0
        %1069 = vmatmul.mubr.f32.gmra.mrb[0].mxu0 %v697
        %v1070 = vpop.f32.mrb[0].mxu0
        %v1071 = vadd.f32 %v519, %v1070
        %v1072 = vpop.f32.mrb[0].mxu0
        %1073 = vmatprep.mubr.f32.mxu0 0.0
        %1074 = vmatmul.mubr.f32.gmra.mrb[0].mxu0 %v700
        %v1075 = vpop.f32.mrb[0].mxu0
        %v1076 = vadd.f32 %v519, %v1075
        %v1077 = vpop.f32.mrb[0].mxu0
        %1078 = vmatprep.mubr.f32.mxu0 0.0
        %1079 = vmatmul.mubr.f32.gmra.mrb[0].mxu0 %v703
        %v1080 = vpop.f32.mrb[0].mxu0
        %v1081 = vadd.f32 %v519, %v1080
        %v1082 = vpop.f32.mrb[0].mxu0
        %1083 = vmatprep.mubr.f32.mxu0 0.0
        %1084 = vmatmul.mubr.f32.gmra.mrb[0].mxu0 %v706
        %v1085 = vpop.f32.mrb[0].mxu0
        %v1086 = vadd.f32 %v519, %v1085
        %v1087 = vpop.f32.mrb[0].mxu0
        %1088 = vmatprep.mubr.f32.mxu0 0.0
        %1089 = vmatmul.mubr.f32.gmra.mrb[0].mxu0 %v709
        %v1090 = vpop.f32.mrb[0].mxu0
        %v1091 = vadd.f32 %v519, %v1090
        %v1092 = vpop.f32.mrb[0].mxu0
        %1093 = vmatprep.mubr.f32.mxu0 0.0
        %1094 = vmatmul.mubr.f32.gmra.mrb[0].mxu0 %v712
        %v1095 = vpop.f32.mrb[0].mxu0
        %v1096 = vadd.f32 %v519, %v1095
        %v1097 = vpop.f32.mrb[0].mxu0
        %1098 = vdwg.mxu0
        %v1099 = vtanh.pop %v781
        %v1100 = vtanh.pop %v786
        %v1101 = vtanh.pop %v791
        %v1102 = vtanh.pop %v796
        %v1103 = vtanh.pop %v801
        %v1104 = vtanh.pop %v806
        %v1105 = vtanh.pop %v811
        %v1106 = vtanh.pop %v816
        %v1107 = vtanh.pop %v821
        %v1108 = vtanh.pop %v826
        %v1109 = vtanh.pop %v831
        %v1110 = vtanh.pop %v836
        %v1111 = vtanh.pop %v841
        %v1112 = vtanh.pop %v846
        %v1113 = vtanh.pop %v851
        %v1114 = vtanh.pop %v856
        %v1115 = vtanh.pop %v861
        %v1116 = vtanh.pop %v866
        %v1117 = vtanh.pop %v871
        %v1118 = vtanh.pop %v876
        %v1119 = vtanh.pop %v881
        %v1120 = vtanh.pop %v886
        %v1121 = vtanh.pop %v891
        %v1122 = vtanh.pop %v896
        %v1123 = vtanh.pop %v901
        %v1124 = vtanh.pop %v906
        %v1125 = vtanh.pop %v911
        %v1126 = vtanh.pop %v916
        %v1127 = vtanh.pop %v921
        %v1128 = vtanh.pop %v926
        %v1129 = vtanh.pop %v931
        %v1130 = vtanh.pop %v936
        %v1131 = vtanh.pop %v941
        %v1132 = vtanh.pop %v946
        %v1133 = vtanh.pop %v951
        %v1134 = vtanh.pop %v956
        %v1135 = vtanh.pop %v961
        %v1136 = vtanh.pop %v966
        %v1137 = vtanh.pop %v971
        %v1138 = vtanh.pop %v976
        %v1139 = vtanh.pop %v981
        %v1140 = vtanh.pop %v986
        %v1141 = vtanh.pop %v991
        %v1142 = vtanh.pop %v996
        %v1143 = vtanh.pop %v1001
        %v1144 = vtanh.pop %v1006
        %v1145 = vtanh.pop %v1011
        %v1146 = vtanh.pop %v1016
        %v1147 = vtanh.pop %v1021
        %v1148 = vtanh.pop %v1026
        %v1149 = vtanh.pop %v1031
        %v1150 = vtanh.pop %v1036
        %v1151 = vtanh.pop %v1041
        %v1152 = vtanh.pop %v1046
        %v1153 = vtanh.pop %v1051
        %v1154 = vtanh.pop %v1056
        %v1155 = vtanh.pop %v1061
        %v1156 = vtanh.pop %v1066
        %v1157 = vtanh.pop %v1071
        %v1158 = vtanh.pop %v1076
        %v1159 = vtanh.pop %v1081
        %v1160 = vtanh.pop %v1086
        %v1161 = vtanh.pop %v1091
        %v1162 = vtanh.pop %v1096
        %v1163 = vld [vmem:[%s4] sm:$0xff]
        %v1164 = vld [vmem:[%s4 + $0x8] sm:$0xff]
        %v1165 = vld [vmem:[%s4 + $0x10] sm:$0xff]
        %v1166 = vld [vmem:[%s4 + $0x18] sm:$0xff]
        %v1167 = vld [vmem:[%s4 + $0x20] sm:$0xff]
        %v1168 = vld [vmem:[%s4 + $0x28] sm:$0xff]
        %v1169 = vld [vmem:[%s4 + $0x30] sm:$0xff]
        %v1170 = vld [vmem:[%s4 + $0x38] sm:$0xff]
        %v1171 = vld [vmem:[%s4 + $0x40] sm:$0xff]
        %v1172 = vld [vmem:[%s4 + $0x48] sm:$0xff]
        %v1173 = vld [vmem:[%s4 + $0x50] sm:$0xff]
        %v1174 = vld [vmem:[%s4 + $0x58] sm:$0xff]
        %v1175 = vld [vmem:[%s4 + $0x60] sm:$0xff]
        %v1176 = vld [vmem:[%s4 + $0x68] sm:$0xff]
        %v1177 = vld [vmem:[%s4 + $0x70] sm:$0xff]
        %v1178 = vld [vmem:[%s4 + $0x78] sm:$0xff]
        %v1179 = vld [vmem:[%s5] sm:$0x1]
        %v1181 = vlaneseq
        %v1182 = vshrl.u32 %v1181, 7
        %v1183 = vsub.s32 0, %v1182
        %v1184 = vrot.slane %v1179, %v1183
        %1186 = vmatprep.subr.mxu0 0.0
        %1187 = vmatpush1.msra.mxu0 %v1163
        %1188 = vmatprep.subr.mxu0 0.0
        %1189 = vmatpush1.msra.mxu0 %v1164
        %1190 = vmatprep.subr.mxu0 0.0
        %1191 = vmatpush1.msra.mxu0 %v1165
        %1192 = vmatprep.subr.mxu0 0.0
        %1193 = vmatpush1.msra.mxu0 %v1166
        %1194 = vmatprep.subr.mxu0 0.0
        %1195 = vmatpush1.msra.mxu0 %v1167
        %1196 = vmatprep.subr.mxu0 0.0
        %1197 = vmatpush1.msra.mxu0 %v1168
        %1198 = vmatprep.subr.mxu0 0.0
        %1199 = vmatpush1.msra.mxu0 %v1169
        %1200 = vmatprep.subr.mxu0 0.0
        %1201 = vmatpush1.msra.mxu0 %v1170
        %1202 = vmatprep.subr.mxu0 0.0
        %1203 = vmatpush1.msra.mxu0 %v1171
        %1204 = vmatprep.subr.mxu0 0.0
        %1205 = vmatpush1.msra.mxu0 %v1172
        %1206 = vmatprep.subr.mxu0 0.0
        %1207 = vmatpush1.msra.mxu0 %v1173
        %1208 = vmatprep.subr.mxu0 0.0
        %1209 = vmatpush1.msra.mxu0 %v1174
        %1210 = vmatprep.subr.mxu0 0.0
        %1211 = vmatpush1.msra.mxu0 %v1175
        %1212 = vmatprep.subr.mxu0 0.0
        %1213 = vmatpush1.msra.mxu0 %v1176
        %1214 = vmatprep.subr.mxu0 0.0
        %1215 = vmatpush1.msra.mxu0 %v1177
        %1216 = vmatprep.subr.mxu0 0.0
        %1217 = vmatpush1.msra.mxu0 %v1178
        %1218 = vmatprep.subr.mxu0 0.0
        %1219 = vmatpush1.msra.mxu0 0.0
        %1220 = vmatprep.subr.mxu0 0.0
        %1221 = vmatpush1.msra.mxu0 0.0
        %1222 = vmatprep.subr.mxu0 0.0
        %1223 = vmatpush1.msra.mxu0 0.0
        %1224 = vmatprep.subr.mxu0 0.0
        %1225 = vmatpush1.msra.mxu0 0.0
        %1226 = vmatprep.subr.mxu0 0.0
        %1227 = vmatpush1.msra.mxu0 0.0
        %1228 = vmatprep.subr.mxu0 0.0
        %1229 = vmatpush1.msra.mxu0 0.0
        %1230 = vmatprep.subr.mxu0 0.0
        %1231 = vmatpush1.msra.mxu0 0.0
        %1232 = vmatprep.subr.mxu0 0.0
        %1233 = vmatpush1.msra.mxu0 0.0
        %1234 = vmatprep.subr.mxu0 0.0
        %1235 = vmatpush1.msra.mxu0 0.0
        %1236 = vmatprep.subr.mxu0 0.0
        %1237 = vmatpush1.msra.mxu0 0.0
        %1238 = vmatprep.subr.mxu0 0.0
        %1239 = vmatpush1.msra.mxu0 0.0
        %1240 = vmatprep.subr.mxu0 0.0
        %1241 = vmatpush1.msra.mxu0 0.0
        %1242 = vmatprep.subr.mxu0 0.0
        %1243 = vmatpush1.msra.mxu0 0.0
        %1244 = vmatprep.subr.mxu0 0.0
        %1245 = vmatpush1.msra.mxu0 0.0
        %1246 = vmatprep.subr.mxu0 0.0
        %1247 = vmatpush1.msra.mxu0 0.0
        %1248 = vmatprep.subr.mxu0 0.0
        %1249 = vmatpush1.msra.mxu0 0.0
        %1250 = vmatprep.mubr.f32.mxu0 0.0
        %1251 = vmatmul.mubr.f32.gmra.mrb[0].mxu0 %v1099
        %v1252 = vpop.f32.mrb[0].mxu0
        %v1253 = vadd.f32 %v1184, %v1252
        %v1254 = vpop.f32.mrb[0].mxu0
        %1255 = vmatprep.mubr.f32.mxu0 0.0
        %1256 = vmatmul.mubr.f32.gmra.mrb[0].mxu0 %v1100
        %v1257 = vpop.f32.mrb[0].mxu0
        %v1258 = vadd.f32 %v1184, %v1257
        %v1259 = vpop.f32.mrb[0].mxu0
        %1260 = vmatprep.mubr.f32.mxu0 0.0
        %1261 = vmatmul.mubr.f32.gmra.mrb[0].mxu0 %v1101
        %v1262 = vpop.f32.mrb[0].mxu0
        %v1263 = vadd.f32 %v1184, %v1262
        %v1264 = vpop.f32.mrb[0].mxu0
        %1265 = vmatprep.mubr.f32.mxu0 0.0
        %1266 = vmatmul.mubr.f32.gmra.mrb[0].mxu0 %v1102
        %v1267 = vpop.f32.mrb[0].mxu0
        %v1268 = vadd.f32 %v1184, %v1267
        %v1269 = vpop.f32.mrb[0].mxu0
        %1270 = vmatprep.mubr.f32.mxu0 0.0
        %1271 = vmatmul.mubr.f32.gmra.mrb[0].mxu0 %v1103
        %v1272 = vpop.f32.mrb[0].mxu0
        %v1273 = vadd.f32 %v1184, %v1272
        %v1274 = vpop.f32.mrb[0].mxu0
        %1275 = vmatprep.mubr.f32.mxu0 0.0
        %1276 = vmatmul.mubr.f32.gmra.mrb[0].mxu0 %v1104
        %v1277 = vpop.f32.mrb[0].mxu0
        %v1278 = vadd.f32 %v1184, %v1277
        %v1279 = vpop.f32.mrb[0].mxu0
        %1280 = vmatprep.mubr.f32.mxu0 0.0
        %1281 = vmatmul.mubr.f32.gmra.mrb[0].mxu0 %v1105
        %v1282 = vpop.f32.mrb[0].mxu0
        %v1283 = vadd.f32 %v1184, %v1282
        %v1284 = vpop.f32.mrb[0].mxu0
        %1285 = vmatprep.mubr.f32.mxu0 0.0
        %1286 = vmatmul.mubr.f32.gmra.mrb[0].mxu0 %v1106
        %v1287 = vpop.f32.mrb[0].mxu0
        %v1288 = vadd.f32 %v1184, %v1287
        %v1289 = vpop.f32.mrb[0].mxu0
        %1290 = vmatprep.mubr.f32.mxu0 0.0
        %1291 = vmatmul.mubr.f32.gmra.mrb[0].mxu0 %v1107
        %v1292 = vpop.f32.mrb[0].mxu0
        %v1293 = vadd.f32 %v1184, %v1292
        %v1294 = vpop.f32.mrb[0].mxu0
        %1295 = vmatprep.mubr.f32.mxu0 0.0
        %1296 = vmatmul.mubr.f32.gmra.mrb[0].mxu0 %v1108
        %v1297 = vpop.f32.mrb[0].mxu0
        %v1298 = vadd.f32 %v1184, %v1297
        %v1299 = vpop.f32.mrb[0].mxu0
        %1300 = vmatprep.mubr.f32.mxu0 0.0
        %1301 = vmatmul.mubr.f32.gmra.mrb[0].mxu0 %v1109
        %v1302 = vpop.f32.mrb[0].mxu0
        %v1303 = vadd.f32 %v1184, %v1302
        %v1304 = vpop.f32.mrb[0].mxu0
        %1305 = vmatprep.mubr.f32.mxu0 0.0
        %1306 = vmatmul.mubr.f32.gmra.mrb[0].mxu0 %v1110
        %v1307 = vpop.f32.mrb[0].mxu0
        %v1308 = vadd.f32 %v1184, %v1307
        %v1309 = vpop.f32.mrb[0].mxu0
        %1310 = vmatprep.mubr.f32.mxu0 0.0
        %1311 = vmatmul.mubr.f32.gmra.mrb[0].mxu0 %v1111
        %v1312 = vpop.f32.mrb[0].mxu0
        %v1313 = vadd.f32 %v1184, %v1312
        %v1314 = vpop.f32.mrb[0].mxu0
        %1315 = vmatprep.mubr.f32.mxu0 0.0
        %1316 = vmatmul.mubr.f32.gmra.mrb[0].mxu0 %v1112
        %v1317 = vpop.f32.mrb[0].mxu0
        %v1318 = vadd.f32 %v1184, %v1317
        %v1319 = vpop.f32.mrb[0].mxu0
        %1320 = vmatprep.mubr.f32.mxu0 0.0
        %1321 = vmatmul.mubr.f32.gmra.mrb[0].mxu0 %v1113
        %v1322 = vpop.f32.mrb[0].mxu0
        %v1323 = vadd.f32 %v1184, %v1322
        %v1324 = vpop.f32.mrb[0].mxu0
        %1325 = vmatprep.mubr.f32.mxu0 0.0
        %1326 = vmatmul.mubr.f32.gmra.mrb[0].mxu0 %v1114
        %v1327 = vpop.f32.mrb[0].mxu0
        %v1328 = vadd.f32 %v1184, %v1327
        %v1329 = vpop.f32.mrb[0].mxu0
        %1330 = vmatprep.mubr.f32.mxu0 0.0
        %1331 = vmatmul.mubr.f32.gmra.mrb[0].mxu0 %v1115
        %v1332 = vpop.f32.mrb[0].mxu0
        %v1333 = vadd.f32 %v1184, %v1332
        %v1334 = vpop.f32.mrb[0].mxu0
        %1335 = vmatprep.mubr.f32.mxu0 0.0
        %1336 = vmatmul.mubr.f32.gmra.mrb[0].mxu0 %v1116
        %v1337 = vpop.f32.mrb[0].mxu0
        %v1338 = vadd.f32 %v1184, %v1337
        %v1339 = vpop.f32.mrb[0].mxu0
        %1340 = vmatprep.mubr.f32.mxu0 0.0
        %1341 = vmatmul.mubr.f32.gmra.mrb[0].mxu0 %v1117
        %v1342 = vpop.f32.mrb[0].mxu0
        %v1343 = vadd.f32 %v1184, %v1342
        %v1344 = vpop.f32.mrb[0].mxu0
        %1345 = vmatprep.mubr.f32.mxu0 0.0
        %1346 = vmatmul.mubr.f32.gmra.mrb[0].mxu0 %v1118
        %v1347 = vpop.f32.mrb[0].mxu0
        %v1348 = vadd.f32 %v1184, %v1347
        %v1349 = vpop.f32.mrb[0].mxu0
        %1350 = vmatprep.mubr.f32.mxu0 0.0
        %1351 = vmatmul.mubr.f32.gmra.mrb[0].mxu0 %v1119
        %v1352 = vpop.f32.mrb[0].mxu0
        %v1353 = vadd.f32 %v1184, %v1352
        %v1354 = vpop.f32.mrb[0].mxu0
        %1355 = vmatprep.mubr.f32.mxu0 0.0
        %1356 = vmatmul.mubr.f32.gmra.mrb[0].mxu0 %v1120
        %v1357 = vpop.f32.mrb[0].mxu0
        %v1358 = vadd.f32 %v1184, %v1357
        %v1359 = vpop.f32.mrb[0].mxu0
        %1360 = vmatprep.mubr.f32.mxu0 0.0
        %1361 = vmatmul.mubr.f32.gmra.mrb[0].mxu0 %v1121
        %v1362 = vpop.f32.mrb[0].mxu0
        %v1363 = vadd.f32 %v1184, %v1362
        %v1364 = vpop.f32.mrb[0].mxu0
        %1365 = vmatprep.mubr.f32.mxu0 0.0
        %1366 = vmatmul.mubr.f32.gmra.mrb[0].mxu0 %v1122
        %v1367 = vpop.f32.mrb[0].mxu0
        %v1368 = vadd.f32 %v1184, %v1367
        %v1369 = vpop.f32.mrb[0].mxu0
        %1370 = vmatprep.mubr.f32.mxu0 0.0
        %1371 = vmatmul.mubr.f32.gmra.mrb[0].mxu0 %v1123
        %v1372 = vpop.f32.mrb[0].mxu0
        %v1373 = vadd.f32 %v1184, %v1372
        %v1374 = vpop.f32.mrb[0].mxu0
        %1375 = vmatprep.mubr.f32.mxu0 0.0
        %1376 = vmatmul.mubr.f32.gmra.mrb[0].mxu0 %v1124
        %v1377 = vpop.f32.mrb[0].mxu0
        %v1378 = vadd.f32 %v1184, %v1377
        %v1379 = vpop.f32.mrb[0].mxu0
        %1380 = vmatprep.mubr.f32.mxu0 0.0
        %1381 = vmatmul.mubr.f32.gmra.mrb[0].mxu0 %v1125
        %v1382 = vpop.f32.mrb[0].mxu0
        %v1383 = vadd.f32 %v1184, %v1382
        %v1384 = vpop.f32.mrb[0].mxu0
        %1385 = vmatprep.mubr.f32.mxu0 0.0
        %1386 = vmatmul.mubr.f32.gmra.mrb[0].mxu0 %v1126
        %v1387 = vpop.f32.mrb[0].mxu0
        %v1388 = vadd.f32 %v1184, %v1387
        %v1389 = vpop.f32.mrb[0].mxu0
        %1390 = vmatprep.mubr.f32.mxu0 0.0
        %1391 = vmatmul.mubr.f32.gmra.mrb[0].mxu0 %v1127
        %v1392 = vpop.f32.mrb[0].mxu0
        %v1393 = vadd.f32 %v1184, %v1392
        %v1394 = vpop.f32.mrb[0].mxu0
        %1395 = vmatprep.mubr.f32.mxu0 0.0
        %1396 = vmatmul.mubr.f32.gmra.mrb[0].mxu0 %v1128
        %v1397 = vpop.f32.mrb[0].mxu0
        %v1398 = vadd.f32 %v1184, %v1397
        %v1399 = vpop.f32.mrb[0].mxu0
        %1400 = vmatprep.mubr.f32.mxu0 0.0
        %1401 = vmatmul.mubr.f32.gmra.mrb[0].mxu0 %v1129
        %v1402 = vpop.f32.mrb[0].mxu0
        %v1403 = vadd.f32 %v1184, %v1402
        %v1404 = vpop.f32.mrb[0].mxu0
        %1405 = vmatprep.mubr.f32.mxu0 0.0
        %1406 = vmatmul.mubr.f32.gmra.mrb[0].mxu0 %v1130
        %v1407 = vpop.f32.mrb[0].mxu0
        %v1408 = vadd.f32 %v1184, %v1407
        %v1409 = vpop.f32.mrb[0].mxu0
        %1410 = vmatprep.mubr.f32.mxu0 0.0
        %1411 = vmatmul.mubr.f32.gmra.mrb[0].mxu0 %v1131
        %v1412 = vpop.f32.mrb[0].mxu0
        %v1413 = vadd.f32 %v1184, %v1412
        %v1414 = vpop.f32.mrb[0].mxu0
        %1415 = vmatprep.mubr.f32.mxu0 0.0
        %1416 = vmatmul.mubr.f32.gmra.mrb[0].mxu0 %v1132
        %v1417 = vpop.f32.mrb[0].mxu0
        %v1418 = vadd.f32 %v1184, %v1417
        %v1419 = vpop.f32.mrb[0].mxu0
        %1420 = vmatprep.mubr.f32.mxu0 0.0
        %1421 = vmatmul.mubr.f32.gmra.mrb[0].mxu0 %v1133
        %v1422 = vpop.f32.mrb[0].mxu0
        %v1423 = vadd.f32 %v1184, %v1422
        %v1424 = vpop.f32.mrb[0].mxu0
        %1425 = vmatprep.mubr.f32.mxu0 0.0
        %1426 = vmatmul.mubr.f32.gmra.mrb[0].mxu0 %v1134
        %v1427 = vpop.f32.mrb[0].mxu0
        %v1428 = vadd.f32 %v1184, %v1427
        %v1429 = vpop.f32.mrb[0].mxu0
        %1430 = vmatprep.mubr.f32.mxu0 0.0
        %1431 = vmatmul.mubr.f32.gmra.mrb[0].mxu0 %v1135
        %v1432 = vpop.f32.mrb[0].mxu0
        %v1433 = vadd.f32 %v1184, %v1432
        %v1434 = vpop.f32.mrb[0].mxu0
        %1435 = vmatprep.mubr.f32.mxu0 0.0
        %1436 = vmatmul.mubr.f32.gmra.mrb[0].mxu0 %v1136
        %v1437 = vpop.f32.mrb[0].mxu0
        %v1438 = vadd.f32 %v1184, %v1437
        %v1439 = vpop.f32.mrb[0].mxu0
        %1440 = vmatprep.mubr.f32.mxu0 0.0
        %1441 = vmatmul.mubr.f32.gmra.mrb[0].mxu0 %v1137
        %v1442 = vpop.f32.mrb[0].mxu0
        %v1443 = vadd.f32 %v1184, %v1442
        %v1444 = vpop.f32.mrb[0].mxu0
        %1445 = vmatprep.mubr.f32.mxu0 0.0
        %1446 = vmatmul.mubr.f32.gmra.mrb[0].mxu0 %v1138
        %v1447 = vpop.f32.mrb[0].mxu0
        %v1448 = vadd.f32 %v1184, %v1447
        %v1449 = vpop.f32.mrb[0].mxu0
        %1450 = vmatprep.mubr.f32.mxu0 0.0
        %1451 = vmatmul.mubr.f32.gmra.mrb[0].mxu0 %v1139
        %v1452 = vpop.f32.mrb[0].mxu0
        %v1453 = vadd.f32 %v1184, %v1452
        %v1454 = vpop.f32.mrb[0].mxu0
        %1455 = vmatprep.mubr.f32.mxu0 0.0
        %1456 = vmatmul.mubr.f32.gmra.mrb[0].mxu0 %v1140
        %v1457 = vpop.f32.mrb[0].mxu0
        %v1458 = vadd.f32 %v1184, %v1457
        %v1459 = vpop.f32.mrb[0].mxu0
        %1460 = vmatprep.mubr.f32.mxu0 0.0
        %1461 = vmatmul.mubr.f32.gmra.mrb[0].mxu0 %v1141
        %v1462 = vpop.f32.mrb[0].mxu0
        %v1463 = vadd.f32 %v1184, %v1462
        %v1464 = vpop.f32.mrb[0].mxu0
        %1465 = vmatprep.mubr.f32.mxu0 0.0
        %1466 = vmatmul.mubr.f32.gmra.mrb[0].mxu0 %v1142
        %v1467 = vpop.f32.mrb[0].mxu0
        %v1468 = vadd.f32 %v1184, %v1467
        %v1469 = vpop.f32.mrb[0].mxu0
        %1470 = vmatprep.mubr.f32.mxu0 0.0
        %1471 = vmatmul.mubr.f32.gmra.mrb[0].mxu0 %v1143
        %v1472 = vpop.f32.mrb[0].mxu0
        %v1473 = vadd.f32 %v1184, %v1472
        %v1474 = vpop.f32.mrb[0].mxu0
        %1475 = vmatprep.mubr.f32.mxu0 0.0
        %1476 = vmatmul.mubr.f32.gmra.mrb[0].mxu0 %v1144
        %v1477 = vpop.f32.mrb[0].mxu0
        %v1478 = vadd.f32 %v1184, %v1477
        %v1479 = vpop.f32.mrb[0].mxu0
        %1480 = vmatprep.mubr.f32.mxu0 0.0
        %1481 = vmatmul.mubr.f32.gmra.mrb[0].mxu0 %v1145
        %v1482 = vpop.f32.mrb[0].mxu0
        %v1483 = vadd.f32 %v1184, %v1482
        %v1484 = vpop.f32.mrb[0].mxu0
        %1485 = vmatprep.mubr.f32.mxu0 0.0
        %1486 = vmatmul.mubr.f32.gmra.mrb[0].mxu0 %v1146
        %v1487 = vpop.f32.mrb[0].mxu0
        %v1488 = vadd.f32 %v1184, %v1487
        %v1489 = vpop.f32.mrb[0].mxu0
        %1490 = vmatprep.mubr.f32.mxu0 0.0
        %1491 = vmatmul.mubr.f32.gmra.mrb[0].mxu0 %v1147
        %v1492 = vpop.f32.mrb[0].mxu0
        %v1493 = vadd.f32 %v1184, %v1492
        %v1494 = vpop.f32.mrb[0].mxu0
        %1495 = vmatprep.mubr.f32.mxu0 0.0
        %1496 = vmatmul.mubr.f32.gmra.mrb[0].mxu0 %v1148
        %v1497 = vpop.f32.mrb[0].mxu0
        %v1498 = vadd.f32 %v1184, %v1497
        %v1499 = vpop.f32.mrb[0].mxu0
        %1500 = vmatprep.mubr.f32.mxu0 0.0
        %1501 = vmatmul.mubr.f32.gmra.mrb[0].mxu0 %v1149
        %v1502 = vpop.f32.mrb[0].mxu0
        %v1503 = vadd.f32 %v1184, %v1502
        %v1504 = vpop.f32.mrb[0].mxu0
        %1505 = vmatprep.mubr.f32.mxu0 0.0
        %1506 = vmatmul.mubr.f32.gmra.mrb[0].mxu0 %v1150
        %v1507 = vpop.f32.mrb[0].mxu0
        %v1508 = vadd.f32 %v1184, %v1507
        %v1509 = vpop.f32.mrb[0].mxu0
        %1510 = vmatprep.mubr.f32.mxu0 0.0
        %1511 = vmatmul.mubr.f32.gmra.mrb[0].mxu0 %v1151
        %v1512 = vpop.f32.mrb[0].mxu0
        %v1513 = vadd.f32 %v1184, %v1512
        %v1514 = vpop.f32.mrb[0].mxu0
        %1515 = vmatprep.mubr.f32.mxu0 0.0
        %1516 = vmatmul.mubr.f32.gmra.mrb[0].mxu0 %v1152
        %v1517 = vpop.f32.mrb[0].mxu0
        %v1518 = vadd.f32 %v1184, %v1517
        %v1519 = vpop.f32.mrb[0].mxu0
        %1520 = vmatprep.mubr.f32.mxu0 0.0
        %1521 = vmatmul.mubr.f32.gmra.mrb[0].mxu0 %v1153
        %v1522 = vpop.f32.mrb[0].mxu0
        %v1523 = vadd.f32 %v1184, %v1522
        %v1524 = vpop.f32.mrb[0].mxu0
        %1525 = vmatprep.mubr.f32.mxu0 0.0
        %1526 = vmatmul.mubr.f32.gmra.mrb[0].mxu0 %v1154
        %v1527 = vpop.f32.mrb[0].mxu0
        %v1528 = vadd.f32 %v1184, %v1527
        %v1529 = vpop.f32.mrb[0].mxu0
        %1530 = vmatprep.mubr.f32.mxu0 0.0
        %1531 = vmatmul.mubr.f32.gmra.mrb[0].mxu0 %v1155
        %v1532 = vpop.f32.mrb[0].mxu0
        %v1533 = vadd.f32 %v1184, %v1532
        %v1534 = vpop.f32.mrb[0].mxu0
        %1535 = vmatprep.mubr.f32.mxu0 0.0
        %1536 = vmatmul.mubr.f32.gmra.mrb[0].mxu0 %v1156
        %v1537 = vpop.f32.mrb[0].mxu0
        %v1538 = vadd.f32 %v1184, %v1537
        %v1539 = vpop.f32.mrb[0].mxu0
        %1540 = vmatprep.mubr.f32.mxu0 0.0
        %1541 = vmatmul.mubr.f32.gmra.mrb[0].mxu0 %v1157
        %v1542 = vpop.f32.mrb[0].mxu0
        %v1543 = vadd.f32 %v1184, %v1542
        %v1544 = vpop.f32.mrb[0].mxu0
        %1545 = vmatprep.mubr.f32.mxu0 0.0
        %1546 = vmatmul.mubr.f32.gmra.mrb[0].mxu0 %v1158
        %v1547 = vpop.f32.mrb[0].mxu0
        %v1548 = vadd.f32 %v1184, %v1547
        %v1549 = vpop.f32.mrb[0].mxu0
        %1550 = vmatprep.mubr.f32.mxu0 0.0
        %1551 = vmatmul.mubr.f32.gmra.mrb[0].mxu0 %v1159
        %v1552 = vpop.f32.mrb[0].mxu0
        %v1553 = vadd.f32 %v1184, %v1552
        %v1554 = vpop.f32.mrb[0].mxu0
        %1555 = vmatprep.mubr.f32.mxu0 0.0
        %1556 = vmatmul.mubr.f32.gmra.mrb[0].mxu0 %v1160
        %v1557 = vpop.f32.mrb[0].mxu0
        %v1558 = vadd.f32 %v1184, %v1557
        %v1559 = vpop.f32.mrb[0].mxu0
        %1560 = vmatprep.mubr.f32.mxu0 0.0
        %1561 = vmatmul.mubr.f32.gmra.mrb[0].mxu0 %v1161
        %v1562 = vpop.f32.mrb[0].mxu0
        %v1563 = vadd.f32 %v1184, %v1562
        %v1564 = vpop.f32.mrb[0].mxu0
        %1565 = vmatprep.mubr.f32.mxu0 0.0
        %1566 = vmatmul.mubr.f32.gmra.mrb[0].mxu0 %v1162
        %v1567 = vpop.f32.mrb[0].mxu0
        %v1568 = vadd.f32 %v1184, %v1567
        %v1569 = vpop.f32.mrb[0].mxu0
        %1570 = vdwg.mxu0
        %v1571 = vtanh.pop %v1253
        %v1572 = vtanh.pop %v1258
        %v1573 = vtanh.pop %v1263
        %v1574 = vtanh.pop %v1268
        %v1575 = vtanh.pop %v1273
        %v1576 = vtanh.pop %v1278
        %v1577 = vtanh.pop %v1283
        %v1578 = vtanh.pop %v1288
        %v1579 = vtanh.pop %v1293
        %v1580 = vtanh.pop %v1298
        %v1581 = vtanh.pop %v1303
        %v1582 = vtanh.pop %v1308
        %v1583 = vtanh.pop %v1313
        %v1584 = vtanh.pop %v1318
        %v1585 = vtanh.pop %v1323
        %v1586 = vtanh.pop %v1328
        %v1587 = vtanh.pop %v1333
        %v1588 = vtanh.pop %v1338
        %v1589 = vtanh.pop %v1343
        %v1590 = vtanh.pop %v1348
        %v1591 = vtanh.pop %v1353
        %v1592 = vtanh.pop %v1358
        %v1593 = vtanh.pop %v1363
        %v1594 = vtanh.pop %v1368
        %v1595 = vtanh.pop %v1373
        %v1596 = vtanh.pop %v1378
        %v1597 = vtanh.pop %v1383
        %v1598 = vtanh.pop %v1388
        %v1599 = vtanh.pop %v1393
        %v1600 = vtanh.pop %v1398
        %v1601 = vtanh.pop %v1403
        %v1602 = vtanh.pop %v1408
        %v1603 = vtanh.pop %v1413
        %v1604 = vtanh.pop %v1418
        %v1605 = vtanh.pop %v1423
        %v1606 = vtanh.pop %v1428
        %v1607 = vtanh.pop %v1433
        %v1608 = vtanh.pop %v1438
        %v1609 = vtanh.pop %v1443
        %v1610 = vtanh.pop %v1448
        %v1611 = vtanh.pop %v1453
        %v1612 = vtanh.pop %v1458
        %v1613 = vtanh.pop %v1463
        %v1614 = vtanh.pop %v1468
        %v1615 = vtanh.pop %v1473
        %v1616 = vtanh.pop %v1478
        %v1617 = vtanh.pop %v1483
        %v1618 = vtanh.pop %v1488
        %v1619 = vtanh.pop %v1493
        %v1620 = vtanh.pop %v1498
        %v1621 = vtanh.pop %v1503
        %v1622 = vtanh.pop %v1508
        %v1623 = vtanh.pop %v1513
        %v1624 = vtanh.pop %v1518
        %v1625 = vtanh.pop %v1523
        %v1626 = vtanh.pop %v1528
        %v1627 = vtanh.pop %v1533
        %v1628 = vtanh.pop %v1538
        %v1629 = vtanh.pop %v1543
        %v1630 = vtanh.pop %v1548
        %v1631 = vtanh.pop %v1553
        %v1632 = vtanh.pop %v1558
        %v1633 = vtanh.pop %v1563
        %v1634 = vtanh.pop %v1568
        %v1635 = vld [vmem:[%s6] sm:$0xff]
        %v1636 = vld [vmem:[%s6 + $0x8] sm:$0xff]
        %v1637 = vld [vmem:[%s6 + $0x10] sm:$0xff]
        %v1638 = vld [vmem:[%s6 + $0x18] sm:$0xff]
        %v1639 = vld [vmem:[%s6 + $0x20] sm:$0xff]
        %v1640 = vld [vmem:[%s6 + $0x28] sm:$0xff]
        %v1641 = vld [vmem:[%s6 + $0x30] sm:$0xff]
        %v1642 = vld [vmem:[%s6 + $0x38] sm:$0xff]
        %v1643 = vld [vmem:[%s7] sm:$0x1]
        %v1645 = vlaneseq
        %v1646 = vshrl.u32 %v1645, 7
        %v1647 = vsub.s32 0, %v1646
        %v1648 = vrot.slane %v1643, %v1647
        %vm1650 = vcmask 523264
        %v1652 = vsel %vm1650, %v1571, 0
        %v1655 = vsel %vm1650, %v1572, 0
        %v1658 = vsel %vm1650, %v1573, 0
        %v1661 = vsel %vm1650, %v1574, 0
        %v1664 = vsel %vm1650, %v1575, 0
        %v1667 = vsel %vm1650, %v1576, 0
        %v1670 = vsel %vm1650, %v1577, 0
        %v1673 = vsel %vm1650, %v1578, 0
        %v1676 = vsel %vm1650, %v1579, 0
        %v1679 = vsel %vm1650, %v1580, 0
        %v1682 = vsel %vm1650, %v1581, 0
        %v1685 = vsel %vm1650, %v1582, 0
        %v1688 = vsel %vm1650, %v1583, 0
        %v1691 = vsel %vm1650, %v1584, 0
        %v1694 = vsel %vm1650, %v1585, 0
        %v1697 = vsel %vm1650, %v1586, 0
        %v1700 = vsel %vm1650, %v1587, 0
        %v1703 = vsel %vm1650, %v1588, 0
        %v1706 = vsel %vm1650, %v1589, 0
        %v1709 = vsel %vm1650, %v1590, 0
        %v1712 = vsel %vm1650, %v1591, 0
        %v1715 = vsel %vm1650, %v1592, 0
        %v1718 = vsel %vm1650, %v1593, 0
        %v1721 = vsel %vm1650, %v1594, 0
        %v1724 = vsel %vm1650, %v1595, 0
        %v1727 = vsel %vm1650, %v1596, 0
        %v1730 = vsel %vm1650, %v1597, 0
        %v1733 = vsel %vm1650, %v1598, 0
        %v1736 = vsel %vm1650, %v1599, 0
        %v1739 = vsel %vm1650, %v1600, 0
        %v1742 = vsel %vm1650, %v1601, 0
        %v1745 = vsel %vm1650, %v1602, 0
        %v1748 = vsel %vm1650, %v1603, 0
        %v1751 = vsel %vm1650, %v1604, 0
        %v1754 = vsel %vm1650, %v1605, 0
        %v1757 = vsel %vm1650, %v1606, 0
        %v1760 = vsel %vm1650, %v1607, 0
        %v1763 = vsel %vm1650, %v1608, 0
        %v1766 = vsel %vm1650, %v1609, 0
        %v1769 = vsel %vm1650, %v1610, 0
        %v1772 = vsel %vm1650, %v1611, 0
        %v1775 = vsel %vm1650, %v1612, 0
        %v1778 = vsel %vm1650, %v1613, 0
        %v1781 = vsel %vm1650, %v1614, 0
        %v1784 = vsel %vm1650, %v1615, 0
        %v1787 = vsel %vm1650, %v1616, 0
        %v1790 = vsel %vm1650, %v1617, 0
        %v1793 = vsel %vm1650, %v1618, 0
        %v1796 = vsel %vm1650, %v1619, 0
        %v1799 = vsel %vm1650, %v1620, 0
        %v1802 = vsel %vm1650, %v1621, 0
        %v1805 = vsel %vm1650, %v1622, 0
        %v1808 = vsel %vm1650, %v1623, 0
        %v1811 = vsel %vm1650, %v1624, 0
        %v1814 = vsel %vm1650, %v1625, 0
        %v1817 = vsel %vm1650, %v1626, 0
        %v1820 = vsel %vm1650, %v1627, 0
        %v1823 = vsel %vm1650, %v1628, 0
        %v1826 = vsel %vm1650, %v1629, 0
        %v1829 = vsel %vm1650, %v1630, 0
        %v1832 = vsel %vm1650, %v1631, 0
        %v1835 = vsel %vm1650, %v1632, 0
        %v1838 = vsel %vm1650, %v1633, 0
        %v1841 = vsel %vm1650, %v1634, 0
        %1843 = vmatprep.subr.mxu0 0.0
        %1844 = vmatpush1.msra.mxu0 %v1635
        %1845 = vmatprep.subr.mxu0 0.0
        %1846 = vmatpush1.msra.mxu0 %v1636
        %1847 = vmatprep.subr.mxu0 0.0
        %1848 = vmatpush1.msra.mxu0 %v1637
        %1849 = vmatprep.subr.mxu0 0.0
        %1850 = vmatpush1.msra.mxu0 %v1638
        %1851 = vmatprep.subr.mxu0 0.0
        %1852 = vmatpush1.msra.mxu0 %v1639
        %1853 = vmatprep.subr.mxu0 0.0
        %1854 = vmatpush1.msra.mxu0 %v1640
        %1855 = vmatprep.subr.mxu0 0.0
        %1856 = vmatpush1.msra.mxu0 %v1641
        %1857 = vmatprep.subr.mxu0 0.0
        %1858 = vmatpush1.msra.mxu0 %v1642
        %1859 = vmatprep.subr.mxu0 0.0
        %1860 = vmatpush1.msra.mxu0 0.0
        %1861 = vmatprep.subr.mxu0 0.0
        %1862 = vmatpush1.msra.mxu0 0.0
        %1863 = vmatprep.subr.mxu0 0.0
        %1864 = vmatpush1.msra.mxu0 0.0
        %1865 = vmatprep.subr.mxu0 0.0
        %1866 = vmatpush1.msra.mxu0 0.0
        %1867 = vmatprep.subr.mxu0 0.0
        %1868 = vmatpush1.msra.mxu0 0.0
        %1869 = vmatprep.subr.mxu0 0.0
        %1870 = vmatpush1.msra.mxu0 0.0
        %1871 = vmatprep.subr.mxu0 0.0
        %1872 = vmatpush1.msra.mxu0 0.0
        %1873 = vmatprep.subr.mxu0 0.0
        %1874 = vmatpush1.msra.mxu0 0.0
        %1875 = vmatprep.subr.mxu0 0.0
        %1876 = vmatpush1.msra.mxu0 0.0
        %1877 = vmatprep.subr.mxu0 0.0
        %1878 = vmatpush1.msra.mxu0 0.0
        %1879 = vmatprep.subr.mxu0 0.0
        %1880 = vmatpush1.msra.mxu0 0.0
        %1881 = vmatprep.subr.mxu0 0.0
        %1882 = vmatpush1.msra.mxu0 0.0
        %1883 = vmatprep.subr.mxu0 0.0
        %1884 = vmatpush1.msra.mxu0 0.0
        %1885 = vmatprep.subr.mxu0 0.0
        %1886 = vmatpush1.msra.mxu0 0.0
        %1887 = vmatprep.subr.mxu0 0.0
        %1888 = vmatpush1.msra.mxu0 0.0
        %1889 = vmatprep.subr.mxu0 0.0
        %1890 = vmatpush1.msra.mxu0 0.0
        %1891 = vmatprep.subr.mxu0 0.0
        %1892 = vmatpush1.msra.mxu0 0.0
        %1893 = vmatprep.subr.mxu0 0.0
        %1894 = vmatpush1.msra.mxu0 0.0
        %1895 = vmatprep.subr.mxu0 0.0
        %1896 = vmatpush1.msra.mxu0 0.0
        %1897 = vmatprep.subr.mxu0 0.0
        %1898 = vmatpush1.msra.mxu0 0.0
        %1899 = vmatprep.subr.mxu0 0.0
        %1900 = vmatpush1.msra.mxu0 0.0
        %1901 = vmatprep.subr.mxu0 0.0
        %1902 = vmatpush1.msra.mxu0 0.0
        %1903 = vmatprep.subr.mxu0 0.0
        %1904 = vmatpush1.msra.mxu0 0.0
        %1905 = vmatprep.subr.mxu0 0.0
        %1906 = vmatpush1.msra.mxu0 0.0
        %1907 = vmatprep.mubr.f32.mxu0 0.0
        %1908 = vmatmul.mubr.f32.gmra.mrb[0].mxu0 %v1652
        %v1909 = vpop.f32.mrb[0].mxu0
        %v1910 = vadd.f32 %v1648, %v1909
        %v1911 = vpop.f32.mrb[0].mxu0
        %1912 = vmatprep.mubr.f32.mxu0 0.0
        %1913 = vmatmul.mubr.f32.gmra.mrb[0].mxu0 %v1655
        %v1914 = vpop.f32.mrb[0].mxu0
        %v1915 = vadd.f32 %v1648, %v1914
        %v1916 = vpop.f32.mrb[0].mxu0
        %1917 = vmatprep.mubr.f32.mxu0 0.0
        %1918 = vmatmul.mubr.f32.gmra.mrb[0].mxu0 %v1658
        %v1919 = vpop.f32.mrb[0].mxu0
        %v1920 = vadd.f32 %v1648, %v1919
        %v1921 = vpop.f32.mrb[0].mxu0
        %1922 = vmatprep.mubr.f32.mxu0 0.0
        %1923 = vmatmul.mubr.f32.gmra.mrb[0].mxu0 %v1661
        %v1924 = vpop.f32.mrb[0].mxu0
        %v1925 = vadd.f32 %v1648, %v1924
        %v1926 = vpop.f32.mrb[0].mxu0
        %1927 = vmatprep.mubr.f32.mxu0 0.0
        %1928 = vmatmul.mubr.f32.gmra.mrb[0].mxu0 %v1664
        %v1929 = vpop.f32.mrb[0].mxu0
        %v1930 = vadd.f32 %v1648, %v1929
        %v1931 = vpop.f32.mrb[0].mxu0
        %1932 = vmatprep.mubr.f32.mxu0 0.0
        %1933 = vmatmul.mubr.f32.gmra.mrb[0].mxu0 %v1667
        %v1934 = vpop.f32.mrb[0].mxu0
        %v1935 = vadd.f32 %v1648, %v1934
        %v1936 = vpop.f32.mrb[0].mxu0
        %1937 = vmatprep.mubr.f32.mxu0 0.0
        %1938 = vmatmul.mubr.f32.gmra.mrb[0].mxu0 %v1670
        %v1939 = vpop.f32.mrb[0].mxu0
        %v1940 = vadd.f32 %v1648, %v1939
        %v1941 = vpop.f32.mrb[0].mxu0
        %1942 = vmatprep.mubr.f32.mxu0 0.0
        %1943 = vmatmul.mubr.f32.gmra.mrb[0].mxu0 %v1673
        %v1944 = vpop.f32.mrb[0].mxu0
        %v1945 = vadd.f32 %v1648, %v1944
        %v1946 = vpop.f32.mrb[0].mxu0
        %1947 = vmatprep.mubr.f32.mxu0 0.0
        %1948 = vmatmul.mubr.f32.gmra.mrb[0].mxu0 %v1676
        %v1949 = vpop.f32.mrb[0].mxu0
        %v1950 = vadd.f32 %v1648, %v1949
        %v1951 = vpop.f32.mrb[0].mxu0
        %1952 = vmatprep.mubr.f32.mxu0 0.0
        %1953 = vmatmul.mubr.f32.gmra.mrb[0].mxu0 %v1679
        %v1954 = vpop.f32.mrb[0].mxu0
        %v1955 = vadd.f32 %v1648, %v1954
        %v1956 = vpop.f32.mrb[0].mxu0
        %1957 = vmatprep.mubr.f32.mxu0 0.0
        %1958 = vmatmul.mubr.f32.gmra.mrb[0].mxu0 %v1682
        %v1959 = vpop.f32.mrb[0].mxu0
        %v1960 = vadd.f32 %v1648, %v1959
        %v1961 = vpop.f32.mrb[0].mxu0
        %1962 = vmatprep.mubr.f32.mxu0 0.0
        %1963 = vmatmul.mubr.f32.gmra.mrb[0].mxu0 %v1685
        %v1964 = vpop.f32.mrb[0].mxu0
        %v1965 = vadd.f32 %v1648, %v1964
        %v1966 = vpop.f32.mrb[0].mxu0
        %1967 = vmatprep.mubr.f32.mxu0 0.0
        %1968 = vmatmul.mubr.f32.gmra.mrb[0].mxu0 %v1688
        %v1969 = vpop.f32.mrb[0].mxu0
        %v1970 = vadd.f32 %v1648, %v1969
        %v1971 = vpop.f32.mrb[0].mxu0
        %1972 = vmatprep.mubr.f32.mxu0 0.0
        %1973 = vmatmul.mubr.f32.gmra.mrb[0].mxu0 %v1691
        %v1974 = vpop.f32.mrb[0].mxu0
        %v1975 = vadd.f32 %v1648, %v1974
        %v1976 = vpop.f32.mrb[0].mxu0
        %1977 = vmatprep.mubr.f32.mxu0 0.0
        %1978 = vmatmul.mubr.f32.gmra.mrb[0].mxu0 %v1694
        %v1979 = vpop.f32.mrb[0].mxu0
        %v1980 = vadd.f32 %v1648, %v1979
        %v1981 = vpop.f32.mrb[0].mxu0
        %1982 = vmatprep.mubr.f32.mxu0 0.0
        %1983 = vmatmul.mubr.f32.gmra.mrb[0].mxu0 %v1697
        %v1984 = vpop.f32.mrb[0].mxu0
        %v1985 = vadd.f32 %v1648, %v1984
        %v1986 = vpop.f32.mrb[0].mxu0
        %1987 = vmatprep.mubr.f32.mxu0 0.0
        %1988 = vmatmul.mubr.f32.gmra.mrb[0].mxu0 %v1700
        %v1989 = vpop.f32.mrb[0].mxu0
        %v1990 = vadd.f32 %v1648, %v1989
        %v1991 = vpop.f32.mrb[0].mxu0
        %1992 = vmatprep.mubr.f32.mxu0 0.0
        %1993 = vmatmul.mubr.f32.gmra.mrb[0].mxu0 %v1703
        %v1994 = vpop.f32.mrb[0].mxu0
        %v1995 = vadd.f32 %v1648, %v1994
        %v1996 = vpop.f32.mrb[0].mxu0
        %1997 = vmatprep.mubr.f32.mxu0 0.0
        %1998 = vmatmul.mubr.f32.gmra.mrb[0].mxu0 %v1706
        %v1999 = vpop.f32.mrb[0].mxu0
        %v2000 = vadd.f32 %v1648, %v1999
        %v2001 = vpop.f32.mrb[0].mxu0
        %2002 = vmatprep.mubr.f32.mxu0 0.0
        %2003 = vmatmul.mubr.f32.gmra.mrb[0].mxu0 %v1709
        %v2004 = vpop.f32.mrb[0].mxu0
        %v2005 = vadd.f32 %v1648, %v2004
        %v2006 = vpop.f32.mrb[0].mxu0
        %2007 = vmatprep.mubr.f32.mxu0 0.0
        %2008 = vmatmul.mubr.f32.gmra.mrb[0].mxu0 %v1712
        %v2009 = vpop.f32.mrb[0].mxu0
        %v2010 = vadd.f32 %v1648, %v2009
        %v2011 = vpop.f32.mrb[0].mxu0
        %2012 = vmatprep.mubr.f32.mxu0 0.0
        %2013 = vmatmul.mubr.f32.gmra.mrb[0].mxu0 %v1715
        %v2014 = vpop.f32.mrb[0].mxu0
        %v2015 = vadd.f32 %v1648, %v2014
        %v2016 = vpop.f32.mrb[0].mxu0
        %2017 = vmatprep.mubr.f32.mxu0 0.0
        %2018 = vmatmul.mubr.f32.gmra.mrb[0].mxu0 %v1718
        %v2019 = vpop.f32.mrb[0].mxu0
        %v2020 = vadd.f32 %v1648, %v2019
        %v2021 = vpop.f32.mrb[0].mxu0
        %2022 = vmatprep.mubr.f32.mxu0 0.0
        %2023 = vmatmul.mubr.f32.gmra.mrb[0].mxu0 %v1721
        %v2024 = vpop.f32.mrb[0].mxu0
        %v2025 = vadd.f32 %v1648, %v2024
        %v2026 = vpop.f32.mrb[0].mxu0
        %2027 = vmatprep.mubr.f32.mxu0 0.0
        %2028 = vmatmul.mubr.f32.gmra.mrb[0].mxu0 %v1724
        %v2029 = vpop.f32.mrb[0].mxu0
        %v2030 = vadd.f32 %v1648, %v2029
        %v2031 = vpop.f32.mrb[0].mxu0
        %2032 = vmatprep.mubr.f32.mxu0 0.0
        %2033 = vmatmul.mubr.f32.gmra.mrb[0].mxu0 %v1727
        %v2034 = vpop.f32.mrb[0].mxu0
        %v2035 = vadd.f32 %v1648, %v2034
        %v2036 = vpop.f32.mrb[0].mxu0
        %2037 = vmatprep.mubr.f32.mxu0 0.0
        %2038 = vmatmul.mubr.f32.gmra.mrb[0].mxu0 %v1730
        %v2039 = vpop.f32.mrb[0].mxu0
        %v2040 = vadd.f32 %v1648, %v2039
        %v2041 = vpop.f32.mrb[0].mxu0
        %2042 = vmatprep.mubr.f32.mxu0 0.0
        %2043 = vmatmul.mubr.f32.gmra.mrb[0].mxu0 %v1733
        %v2044 = vpop.f32.mrb[0].mxu0
        %v2045 = vadd.f32 %v1648, %v2044
        %v2046 = vpop.f32.mrb[0].mxu0
        %2047 = vmatprep.mubr.f32.mxu0 0.0
        %2048 = vmatmul.mubr.f32.gmra.mrb[0].mxu0 %v1736
        %v2049 = vpop.f32.mrb[0].mxu0
        %v2050 = vadd.f32 %v1648, %v2049
        %v2051 = vpop.f32.mrb[0].mxu0
        %2052 = vmatprep.mubr.f32.mxu0 0.0
        %2053 = vmatmul.mubr.f32.gmra.mrb[0].mxu0 %v1739
        %v2054 = vpop.f32.mrb[0].mxu0
        %v2055 = vadd.f32 %v1648, %v2054
        %v2056 = vpop.f32.mrb[0].mxu0
        %2057 = vmatprep.mubr.f32.mxu0 0.0
        %2058 = vmatmul.mubr.f32.gmra.mrb[0].mxu0 %v1742
        %v2059 = vpop.f32.mrb[0].mxu0
        %v2060 = vadd.f32 %v1648, %v2059
        %v2061 = vpop.f32.mrb[0].mxu0
        %2062 = vmatprep.mubr.f32.mxu0 0.0
        %2063 = vmatmul.mubr.f32.gmra.mrb[0].mxu0 %v1745
        %v2064 = vpop.f32.mrb[0].mxu0
        %v2065 = vadd.f32 %v1648, %v2064
        %v2066 = vpop.f32.mrb[0].mxu0
        %2067 = vmatprep.mubr.f32.mxu0 0.0
        %2068 = vmatmul.mubr.f32.gmra.mrb[0].mxu0 %v1748
        %v2069 = vpop.f32.mrb[0].mxu0
        %v2070 = vadd.f32 %v1648, %v2069
        %v2071 = vpop.f32.mrb[0].mxu0
        %2072 = vmatprep.mubr.f32.mxu0 0.0
        %2073 = vmatmul.mubr.f32.gmra.mrb[0].mxu0 %v1751
        %v2074 = vpop.f32.mrb[0].mxu0
        %v2075 = vadd.f32 %v1648, %v2074
        %v2076 = vpop.f32.mrb[0].mxu0
        %2077 = vmatprep.mubr.f32.mxu0 0.0
        %2078 = vmatmul.mubr.f32.gmra.mrb[0].mxu0 %v1754
        %v2079 = vpop.f32.mrb[0].mxu0
        %v2080 = vadd.f32 %v1648, %v2079
        %v2081 = vpop.f32.mrb[0].mxu0
        %2082 = vmatprep.mubr.f32.mxu0 0.0
        %2083 = vmatmul.mubr.f32.gmra.mrb[0].mxu0 %v1757
        %v2084 = vpop.f32.mrb[0].mxu0
        %v2085 = vadd.f32 %v1648, %v2084
        %v2086 = vpop.f32.mrb[0].mxu0
        %2087 = vmatprep.mubr.f32.mxu0 0.0
        %2088 = vmatmul.mubr.f32.gmra.mrb[0].mxu0 %v1760
        %v2089 = vpop.f32.mrb[0].mxu0
        %v2090 = vadd.f32 %v1648, %v2089
        %v2091 = vpop.f32.mrb[0].mxu0
        %2092 = vmatprep.mubr.f32.mxu0 0.0
        %2093 = vmatmul.mubr.f32.gmra.mrb[0].mxu0 %v1763
        %v2094 = vpop.f32.mrb[0].mxu0
        %v2095 = vadd.f32 %v1648, %v2094
        %v2096 = vpop.f32.mrb[0].mxu0
        %2097 = vmatprep.mubr.f32.mxu0 0.0
        %2098 = vmatmul.mubr.f32.gmra.mrb[0].mxu0 %v1766
        %v2099 = vpop.f32.mrb[0].mxu0
        %v2100 = vadd.f32 %v1648, %v2099
        %v2101 = vpop.f32.mrb[0].mxu0
        %2102 = vmatprep.mubr.f32.mxu0 0.0
        %2103 = vmatmul.mubr.f32.gmra.mrb[0].mxu0 %v1769
        %v2104 = vpop.f32.mrb[0].mxu0
        %v2105 = vadd.f32 %v1648, %v2104
        %v2106 = vpop.f32.mrb[0].mxu0
        %2107 = vmatprep.mubr.f32.mxu0 0.0
        %2108 = vmatmul.mubr.f32.gmra.mrb[0].mxu0 %v1772
        %v2109 = vpop.f32.mrb[0].mxu0
        %v2110 = vadd.f32 %v1648, %v2109
        %v2111 = vpop.f32.mrb[0].mxu0
        %2112 = vmatprep.mubr.f32.mxu0 0.0
        %2113 = vmatmul.mubr.f32.gmra.mrb[0].mxu0 %v1775
        %v2114 = vpop.f32.mrb[0].mxu0
        %v2115 = vadd.f32 %v1648, %v2114
        %v2116 = vpop.f32.mrb[0].mxu0
        %2117 = vmatprep.mubr.f32.mxu0 0.0
        %2118 = vmatmul.mubr.f32.gmra.mrb[0].mxu0 %v1778
        %v2119 = vpop.f32.mrb[0].mxu0
        %v2120 = vadd.f32 %v1648, %v2119
        %v2121 = vpop.f32.mrb[0].mxu0
        %2122 = vmatprep.mubr.f32.mxu0 0.0
        %2123 = vmatmul.mubr.f32.gmra.mrb[0].mxu0 %v1781
        %v2124 = vpop.f32.mrb[0].mxu0
        %v2125 = vadd.f32 %v1648, %v2124
        %v2126 = vpop.f32.mrb[0].mxu0
        %2127 = vmatprep.mubr.f32.mxu0 0.0
        %2128 = vmatmul.mubr.f32.gmra.mrb[0].mxu0 %v1784
        %v2129 = vpop.f32.mrb[0].mxu0
        %v2130 = vadd.f32 %v1648, %v2129
        %v2131 = vpop.f32.mrb[0].mxu0
        %2132 = vmatprep.mubr.f32.mxu0 0.0
        %2133 = vmatmul.mubr.f32.gmra.mrb[0].mxu0 %v1787
        %v2134 = vpop.f32.mrb[0].mxu0
        %v2135 = vadd.f32 %v1648, %v2134
        %v2136 = vpop.f32.mrb[0].mxu0
        %2137 = vmatprep.mubr.f32.mxu0 0.0
        %2138 = vmatmul.mubr.f32.gmra.mrb[0].mxu0 %v1790
        %v2139 = vpop.f32.mrb[0].mxu0
        %v2140 = vadd.f32 %v1648, %v2139
        %v2141 = vpop.f32.mrb[0].mxu0
        %2142 = vmatprep.mubr.f32.mxu0 0.0
        %2143 = vmatmul.mubr.f32.gmra.mrb[0].mxu0 %v1793
        %v2144 = vpop.f32.mrb[0].mxu0
        %v2145 = vadd.f32 %v1648, %v2144
        %v2146 = vpop.f32.mrb[0].mxu0
        %2147 = vmatprep.mubr.f32.mxu0 0.0
        %2148 = vmatmul.mubr.f32.gmra.mrb[0].mxu0 %v1796
        %v2149 = vpop.f32.mrb[0].mxu0
        %v2150 = vadd.f32 %v1648, %v2149
        %v2151 = vpop.f32.mrb[0].mxu0
        %2152 = vmatprep.mubr.f32.mxu0 0.0
        %2153 = vmatmul.mubr.f32.gmra.mrb[0].mxu0 %v1799
        %v2154 = vpop.f32.mrb[0].mxu0
        %v2155 = vadd.f32 %v1648, %v2154
        %v2156 = vpop.f32.mrb[0].mxu0
        %2157 = vmatprep.mubr.f32.mxu0 0.0
        %2158 = vmatmul.mubr.f32.gmra.mrb[0].mxu0 %v1802
        %v2159 = vpop.f32.mrb[0].mxu0
        %v2160 = vadd.f32 %v1648, %v2159
        %v2161 = vpop.f32.mrb[0].mxu0
        %2162 = vmatprep.mubr.f32.mxu0 0.0
        %2163 = vmatmul.mubr.f32.gmra.mrb[0].mxu0 %v1805
        %v2164 = vpop.f32.mrb[0].mxu0
        %v2165 = vadd.f32 %v1648, %v2164
        %v2166 = vpop.f32.mrb[0].mxu0
        %2167 = vmatprep.mubr.f32.mxu0 0.0
        %2168 = vmatmul.mubr.f32.gmra.mrb[0].mxu0 %v1808
        %v2169 = vpop.f32.mrb[0].mxu0
        %v2170 = vadd.f32 %v1648, %v2169
        %v2171 = vpop.f32.mrb[0].mxu0
        %2172 = vmatprep.mubr.f32.mxu0 0.0
        %2173 = vmatmul.mubr.f32.gmra.mrb[0].mxu0 %v1811
        %v2174 = vpop.f32.mrb[0].mxu0
        %v2175 = vadd.f32 %v1648, %v2174
        %v2176 = vpop.f32.mrb[0].mxu0
        %2177 = vmatprep.mubr.f32.mxu0 0.0
        %2178 = vmatmul.mubr.f32.gmra.mrb[0].mxu0 %v1814
        %v2179 = vpop.f32.mrb[0].mxu0
        %v2180 = vadd.f32 %v1648, %v2179
        %v2181 = vpop.f32.mrb[0].mxu0
        %2182 = vmatprep.mubr.f32.mxu0 0.0
        %2183 = vmatmul.mubr.f32.gmra.mrb[0].mxu0 %v1817
        %v2184 = vpop.f32.mrb[0].mxu0
        %v2185 = vadd.f32 %v1648, %v2184
        %v2186 = vpop.f32.mrb[0].mxu0
        %2187 = vmatprep.mubr.f32.mxu0 0.0
        %2188 = vmatmul.mubr.f32.gmra.mrb[0].mxu0 %v1820
        %v2189 = vpop.f32.mrb[0].mxu0
        %v2190 = vadd.f32 %v1648, %v2189
        %v2191 = vpop.f32.mrb[0].mxu0
        %2192 = vmatprep.mubr.f32.mxu0 0.0
        %2193 = vmatmul.mubr.f32.gmra.mrb[0].mxu0 %v1823
        %v2194 = vpop.f32.mrb[0].mxu0
        %v2195 = vadd.f32 %v1648, %v2194
        %v2196 = vpop.f32.mrb[0].mxu0
        %2197 = vmatprep.mubr.f32.mxu0 0.0
        %2198 = vmatmul.mubr.f32.gmra.mrb[0].mxu0 %v1826
        %v2199 = vpop.f32.mrb[0].mxu0
        %v2200 = vadd.f32 %v1648, %v2199
        %v2201 = vpop.f32.mrb[0].mxu0
        %2202 = vmatprep.mubr.f32.mxu0 0.0
        %2203 = vmatmul.mubr.f32.gmra.mrb[0].mxu0 %v1829
        %v2204 = vpop.f32.mrb[0].mxu0
        %v2205 = vadd.f32 %v1648, %v2204
        %v2206 = vpop.f32.mrb[0].mxu0
        %2207 = vmatprep.mubr.f32.mxu0 0.0
        %2208 = vmatmul.mubr.f32.gmra.mrb[0].mxu0 %v1832
        %v2209 = vpop.f32.mrb[0].mxu0
        %v2210 = vadd.f32 %v1648, %v2209
        %v2211 = vpop.f32.mrb[0].mxu0
        %2212 = vmatprep.mubr.f32.mxu0 0.0
        %2213 = vmatmul.mubr.f32.gmra.mrb[0].mxu0 %v1835
        %v2214 = vpop.f32.mrb[0].mxu0
        %v2215 = vadd.f32 %v1648, %v2214
        %v2216 = vpop.f32.mrb[0].mxu0
        %2217 = vmatprep.mubr.f32.mxu0 0.0
        %2218 = vmatmul.mubr.f32.gmra.mrb[0].mxu0 %v1838
        %v2219 = vpop.f32.mrb[0].mxu0
        %v2220 = vadd.f32 %v1648, %v2219
        %v2221 = vpop.f32.mrb[0].mxu0
        %2222 = vmatprep.mubr.f32.mxu0 0.0
        %2223 = vmatmul.mubr.f32.gmra.mrb[0].mxu0 %v1841
        %v2224 = vpop.f32.mrb[0].mxu0
        %v2225 = vadd.f32 %v1648, %v2224
        %v2226 = vpop.f32.mrb[0].mxu0
        %2227 = vdwg.mxu0
        %v2228 = vtanh.pop %v1910
        %v2229 = vtanh.pop %v1915
        %v2230 = vtanh.pop %v1920
        %v2231 = vtanh.pop %v1925
        %v2232 = vtanh.pop %v1930
        %v2233 = vtanh.pop %v1935
        %v2234 = vtanh.pop %v1940
        %v2235 = vtanh.pop %v1945
        %v2236 = vtanh.pop %v1950
        %v2237 = vtanh.pop %v1955
        %v2238 = vtanh.pop %v1960
        %v2239 = vtanh.pop %v1965
        %v2240 = vtanh.pop %v1970
        %v2241 = vtanh.pop %v1975
        %v2242 = vtanh.pop %v1980
        %v2243 = vtanh.pop %v1985
        %v2244 = vtanh.pop %v1990
        %v2245 = vtanh.pop %v1995
        %v2246 = vtanh.pop %v2000
        %v2247 = vtanh.pop %v2005
        %v2248 = vtanh.pop %v2010
        %v2249 = vtanh.pop %v2015
        %v2250 = vtanh.pop %v2020
        %v2251 = vtanh.pop %v2025
        %v2252 = vtanh.pop %v2030
        %v2253 = vtanh.pop %v2035
        %v2254 = vtanh.pop %v2040
        %v2255 = vtanh.pop %v2045
        %v2256 = vtanh.pop %v2050
        %v2257 = vtanh.pop %v2055
        %v2258 = vtanh.pop %v2060
        %v2259 = vtanh.pop %v2065
        %v2260 = vtanh.pop %v2070
        %v2261 = vtanh.pop %v2075
        %v2262 = vtanh.pop %v2080
        %v2263 = vtanh.pop %v2085
        %v2264 = vtanh.pop %v2090
        %v2265 = vtanh.pop %v2095
        %v2266 = vtanh.pop %v2100
        %v2267 = vtanh.pop %v2105
        %v2268 = vtanh.pop %v2110
        %v2269 = vtanh.pop %v2115
        %v2270 = vtanh.pop %v2120
        %v2271 = vtanh.pop %v2125
        %v2272 = vtanh.pop %v2130
        %v2273 = vtanh.pop %v2135
        %v2274 = vtanh.pop %v2140
        %v2275 = vtanh.pop %v2145
        %v2276 = vtanh.pop %v2150
        %v2277 = vtanh.pop %v2155
        %v2278 = vtanh.pop %v2160
        %v2279 = vtanh.pop %v2165
        %v2280 = vtanh.pop %v2170
        %v2281 = vtanh.pop %v2175
        %v2282 = vtanh.pop %v2180
        %v2283 = vtanh.pop %v2185
        %v2284 = vtanh.pop %v2190
        %v2285 = vtanh.pop %v2195
        %v2286 = vtanh.pop %v2200
        %v2287 = vtanh.pop %v2205
        %v2288 = vtanh.pop %v2210
        %v2289 = vtanh.pop %v2215
        %v2290 = vtanh.pop %v2220
        %v2291 = vtanh.pop %v2225
        %v2292 = vsub.f32 %v449, %v2228
        %v2293 = vsub.f32 %v450, %v2229
        %v2294 = vsub.f32 %v451, %v2230
        %v2295 = vsub.f32 %v452, %v2231
        %v2296 = vsub.f32 %v453, %v2232
        %v2297 = vsub.f32 %v454, %v2233
        %v2298 = vsub.f32 %v455, %v2234
        %v2299 = vsub.f32 %v456, %v2235
        %v2300 = vsub.f32 %v457, %v2236
        %v2301 = vsub.f32 %v458, %v2237
        %v2302 = vsub.f32 %v459, %v2238
        %v2303 = vsub.f32 %v460, %v2239
        %v2304 = vsub.f32 %v461, %v2240
        %v2305 = vsub.f32 %v462, %v2241
        %v2306 = vsub.f32 %v463, %v2242
        %v2307 = vsub.f32 %v464, %v2243
        %v2308 = vsub.f32 %v465, %v2244
        %v2309 = vsub.f32 %v466, %v2245
        %v2310 = vsub.f32 %v467, %v2246
        %v2311 = vsub.f32 %v468, %v2247
        %v2312 = vsub.f32 %v469, %v2248
        %v2313 = vsub.f32 %v470, %v2249
        %v2314 = vsub.f32 %v471, %v2250
        %v2315 = vsub.f32 %v472, %v2251
        %v2316 = vsub.f32 %v473, %v2252
        %v2317 = vsub.f32 %v474, %v2253
        %v2318 = vsub.f32 %v475, %v2254
        %v2319 = vsub.f32 %v476, %v2255
        %v2320 = vsub.f32 %v477, %v2256
        %v2321 = vsub.f32 %v478, %v2257
        %v2322 = vsub.f32 %v479, %v2258
        %v2323 = vsub.f32 %v480, %v2259
        %v2324 = vsub.f32 %v481, %v2260
        %v2325 = vsub.f32 %v482, %v2261
        %v2326 = vsub.f32 %v483, %v2262
        %v2327 = vsub.f32 %v484, %v2263
        %v2328 = vsub.f32 %v485, %v2264
        %v2329 = vsub.f32 %v486, %v2265
        %v2330 = vsub.f32 %v487, %v2266
        %v2331 = vsub.f32 %v488, %v2267
        %v2332 = vsub.f32 %v489, %v2268
        %v2333 = vsub.f32 %v490, %v2269
        %v2334 = vsub.f32 %v491, %v2270
        %v2335 = vsub.f32 %v492, %v2271
        %v2336 = vsub.f32 %v493, %v2272
        %v2337 = vsub.f32 %v494, %v2273
        %v2338 = vsub.f32 %v495, %v2274
        %v2339 = vsub.f32 %v496, %v2275
        %v2340 = vsub.f32 %v497, %v2276
        %v2341 = vsub.f32 %v498, %v2277
        %v2342 = vsub.f32 %v499, %v2278
        %v2343 = vsub.f32 %v500, %v2279
        %v2344 = vsub.f32 %v501, %v2280
        %v2345 = vsub.f32 %v502, %v2281
        %v2346 = vsub.f32 %v503, %v2282
        %v2347 = vsub.f32 %v504, %v2283
        %v2348 = vsub.f32 %v505, %v2284
        %v2349 = vsub.f32 %v506, %v2285
        %v2350 = vsub.f32 %v507, %v2286
        %v2351 = vsub.f32 %v508, %v2287
        %v2352 = vsub.f32 %v509, %v2288
        %v2353 = vsub.f32 %v510, %v2289
        %v2354 = vsub.f32 %v511, %v2290
        %v2355 = vsub.f32 %v512, %v2291
        %v2356 = vmul.f32 %v2292, %v2292
        %v2357 = vmul.f32 %v2293, %v2293
        %v2358 = vmul.f32 %v2294, %v2294
        %v2359 = vmul.f32 %v2295, %v2295
        %v2360 = vmul.f32 %v2296, %v2296
        %v2361 = vmul.f32 %v2297, %v2297
        %v2362 = vmul.f32 %v2298, %v2298
        %v2363 = vmul.f32 %v2299, %v2299
        %v2364 = vmul.f32 %v2300, %v2300
        %v2365 = vmul.f32 %v2301, %v2301
        %v2366 = vmul.f32 %v2302, %v2302
        %v2367 = vmul.f32 %v2303, %v2303
        %v2368 = vmul.f32 %v2304, %v2304
        %v2369 = vmul.f32 %v2305, %v2305
        %v2370 = vmul.f32 %v2306, %v2306
        %v2371 = vmul.f32 %v2307, %v2307
        %v2372 = vmul.f32 %v2308, %v2308
        %v2373 = vmul.f32 %v2309, %v2309
        %v2374 = vmul.f32 %v2310, %v2310
        %v2375 = vmul.f32 %v2311, %v2311
        %v2376 = vmul.f32 %v2312, %v2312
        %v2377 = vmul.f32 %v2313, %v2313
        %v2378 = vmul.f32 %v2314, %v2314
        %v2379 = vmul.f32 %v2315, %v2315
        %v2380 = vmul.f32 %v2316, %v2316
        %v2381 = vmul.f32 %v2317, %v2317
        %v2382 = vmul.f32 %v2318, %v2318
        %v2383 = vmul.f32 %v2319, %v2319
        %v2384 = vmul.f32 %v2320, %v2320
        %v2385 = vmul.f32 %v2321, %v2321
        %v2386 = vmul.f32 %v2322, %v2322
        %v2387 = vmul.f32 %v2323, %v2323
        %v2388 = vmul.f32 %v2324, %v2324
        %v2389 = vmul.f32 %v2325, %v2325
        %v2390 = vmul.f32 %v2326, %v2326
        %v2391 = vmul.f32 %v2327, %v2327
        %v2392 = vmul.f32 %v2328, %v2328
        %v2393 = vmul.f32 %v2329, %v2329
        %v2394 = vmul.f32 %v2330, %v2330
        %v2395 = vmul.f32 %v2331, %v2331
        %v2396 = vmul.f32 %v2332, %v2332
        %v2397 = vmul.f32 %v2333, %v2333
        %v2398 = vmul.f32 %v2334, %v2334
        %v2399 = vmul.f32 %v2335, %v2335
        %v2400 = vmul.f32 %v2336, %v2336
        %v2401 = vmul.f32 %v2337, %v2337
        %v2402 = vmul.f32 %v2338, %v2338
        %v2403 = vmul.f32 %v2339, %v2339
        %v2404 = vmul.f32 %v2340, %v2340
        %v2405 = vmul.f32 %v2341, %v2341
        %v2406 = vmul.f32 %v2342, %v2342
        %v2407 = vmul.f32 %v2343, %v2343
        %v2408 = vmul.f32 %v2344, %v2344
        %v2409 = vmul.f32 %v2345, %v2345
        %v2410 = vmul.f32 %v2346, %v2346
        %v2411 = vmul.f32 %v2347, %v2347
        %v2412 = vmul.f32 %v2348, %v2348
        %v2413 = vmul.f32 %v2349, %v2349
        %v2414 = vmul.f32 %v2350, %v2350
        %v2415 = vmul.f32 %v2351, %v2351
        %v2416 = vmul.f32 %v2352, %v2352
        %v2417 = vmul.f32 %v2353, %v2353
        %v2418 = vmul.f32 %v2354, %v2354
        %v2419 = vmul.f32 %v2355, %v2355
        %v2420 = vld [vmem:[%s8] sm:$0x1]
        %v2422 = vlaneseq
        %v2423 = vshrl.u32 %v2422, 7
        %v2424 = vsub.s32 0, %v2423
        %v2425 = vrot.slane %v2420, %v2424
        %v2427 = vmul.f32 %v2356, %v2425
        %v2428 = vmul.f32 %v2357, %v2425
        %v2429 = vmul.f32 %v2358, %v2425
        %v2430 = vmul.f32 %v2359, %v2425
        %v2431 = vmul.f32 %v2360, %v2425
        %v2432 = vmul.f32 %v2361, %v2425
        %v2433 = vmul.f32 %v2362, %v2425
        %v2434 = vmul.f32 %v2363, %v2425
        %v2435 = vmul.f32 %v2364, %v2425
        %v2436 = vmul.f32 %v2365, %v2425
        %v2437 = vmul.f32 %v2366, %v2425
        %v2438 = vmul.f32 %v2367, %v2425
        %v2439 = vmul.f32 %v2368, %v2425
        %v2440 = vmul.f32 %v2369, %v2425
        %v2441 = vmul.f32 %v2370, %v2425
        %v2442 = vmul.f32 %v2371, %v2425
        %v2443 = vmul.f32 %v2372, %v2425
        %v2444 = vmul.f32 %v2373, %v2425
        %v2445 = vmul.f32 %v2374, %v2425
        %v2446 = vmul.f32 %v2375, %v2425
        %v2447 = vmul.f32 %v2376, %v2425
        %v2448 = vmul.f32 %v2377, %v2425
        %v2449 = vmul.f32 %v2378, %v2425
        %v2450 = vmul.f32 %v2379, %v2425
        %v2451 = vmul.f32 %v2380, %v2425
        %v2452 = vmul.f32 %v2381, %v2425
        %v2453 = vmul.f32 %v2382, %v2425
        %v2454 = vmul.f32 %v2383, %v2425
        %v2455 = vmul.f32 %v2384, %v2425
        %v2456 = vmul.f32 %v2385, %v2425
        %v2457 = vmul.f32 %v2386, %v2425
        %v2458 = vmul.f32 %v2387, %v2425
        %v2459 = vmul.f32 %v2388, %v2425
        %v2460 = vmul.f32 %v2389, %v2425
        %v2461 = vmul.f32 %v2390, %v2425
        %v2462 = vmul.f32 %v2391, %v2425
        %v2463 = vmul.f32 %v2392, %v2425
        %v2464 = vmul.f32 %v2393, %v2425
        %v2465 = vmul.f32 %v2394, %v2425
        %v2466 = vmul.f32 %v2395, %v2425
        %v2467 = vmul.f32 %v2396, %v2425
        %v2468 = vmul.f32 %v2397, %v2425
        %v2469 = vmul.f32 %v2398, %v2425
        %v2470 = vmul.f32 %v2399, %v2425
        %v2471 = vmul.f32 %v2400, %v2425
        %v2472 = vmul.f32 %v2401, %v2425
        %v2473 = vmul.f32 %v2402, %v2425
        %v2474 = vmul.f32 %v2403, %v2425
        %v2475 = vmul.f32 %v2404, %v2425
        %v2476 = vmul.f32 %v2405, %v2425
        %v2477 = vmul.f32 %v2406, %v2425
        %v2478 = vmul.f32 %v2407, %v2425
        %v2479 = vmul.f32 %v2408, %v2425
        %v2480 = vmul.f32 %v2409, %v2425
        %v2481 = vmul.f32 %v2410, %v2425
        %v2482 = vmul.f32 %v2411, %v2425
        %v2483 = vmul.f32 %v2412, %v2425
        %v2484 = vmul.f32 %v2413, %v2425
        %v2485 = vmul.f32 %v2414, %v2425
        %v2486 = vmul.f32 %v2415, %v2425
        %v2487 = vmul.f32 %v2416, %v2425
        %v2488 = vmul.f32 %v2417, %v2425
        %v2489 = vmul.f32 %v2418, %v2425
        %v2490 = vmul.f32 %v2419, %v2425
        %vm2491 = vcmask 31744
        %v2492 = vsel %vm2491, %v2427, 0.0
        %2493 = vadd.xlane.f32.xlu0 %v2492
        %v2494 = vpop.xlane.xlu0 %2493
        %v2495 = vsel %vm2491, %v2428, 0.0
        %2496 = vadd.xlane.f32.xlu0 %v2495
        %v2497 = vpop.xlane.xlu0 %2496
        %v2498 = vsel %vm2491, %v2429, 0.0
        %2499 = vadd.xlane.f32.xlu0 %v2498
        %v2500 = vpop.xlane.xlu0 %2499
        %v2501 = vsel %vm2491, %v2430, 0.0
        %2502 = vadd.xlane.f32.xlu0 %v2501
        %v2503 = vpop.xlane.xlu0 %2502
        %v2504 = vsel %vm2491, %v2431, 0.0
        %2505 = vadd.xlane.f32.xlu0 %v2504
        %v2506 = vpop.xlane.xlu0 %2505
        %v2507 = vsel %vm2491, %v2432, 0.0
        %2508 = vadd.xlane.f32.xlu0 %v2507
        %v2509 = vpop.xlane.xlu0 %2508
        %v2510 = vsel %vm2491, %v2433, 0.0
        %2511 = vadd.xlane.f32.xlu0 %v2510
        %v2512 = vpop.xlane.xlu0 %2511
        %v2513 = vsel %vm2491, %v2434, 0.0
        %2514 = vadd.xlane.f32.xlu0 %v2513
        %v2515 = vpop.xlane.xlu0 %2514
        %v2516 = vsel %vm2491, %v2435, 0.0
        %2517 = vadd.xlane.f32.xlu0 %v2516
        %v2518 = vpop.xlane.xlu0 %2517
        %v2519 = vsel %vm2491, %v2436, 0.0
        %2520 = vadd.xlane.f32.xlu0 %v2519
        %v2521 = vpop.xlane.xlu0 %2520
        %v2522 = vsel %vm2491, %v2437, 0.0
        %2523 = vadd.xlane.f32.xlu0 %v2522
        %v2524 = vpop.xlane.xlu0 %2523
        %v2525 = vsel %vm2491, %v2438, 0.0
        %2526 = vadd.xlane.f32.xlu0 %v2525
        %v2527 = vpop.xlane.xlu0 %2526
        %v2528 = vsel %vm2491, %v2439, 0.0
        %2529 = vadd.xlane.f32.xlu0 %v2528
        %v2530 = vpop.xlane.xlu0 %2529
        %v2531 = vsel %vm2491, %v2440, 0.0
        %2532 = vadd.xlane.f32.xlu0 %v2531
        %v2533 = vpop.xlane.xlu0 %2532
        %v2534 = vsel %vm2491, %v2441, 0.0
        %2535 = vadd.xlane.f32.xlu0 %v2534
        %v2536 = vpop.xlane.xlu0 %2535
        %v2537 = vsel %vm2491, %v2442, 0.0
        %2538 = vadd.xlane.f32.xlu0 %v2537
        %v2539 = vpop.xlane.xlu0 %2538
        %v2540 = vsel %vm2491, %v2443, 0.0
        %2541 = vadd.xlane.f32.xlu0 %v2540
        %v2542 = vpop.xlane.xlu0 %2541
        %v2543 = vsel %vm2491, %v2444, 0.0
        %2544 = vadd.xlane.f32.xlu0 %v2543
        %v2545 = vpop.xlane.xlu0 %2544
        %v2546 = vsel %vm2491, %v2445, 0.0
        %2547 = vadd.xlane.f32.xlu0 %v2546
        %v2548 = vpop.xlane.xlu0 %2547
        %v2549 = vsel %vm2491, %v2446, 0.0
        %2550 = vadd.xlane.f32.xlu0 %v2549
        %v2551 = vpop.xlane.xlu0 %2550
        %v2552 = vsel %vm2491, %v2447, 0.0
        %2553 = vadd.xlane.f32.xlu0 %v2552
        %v2554 = vpop.xlane.xlu0 %2553
        %v2555 = vsel %vm2491, %v2448, 0.0
        %2556 = vadd.xlane.f32.xlu0 %v2555
        %v2557 = vpop.xlane.xlu0 %2556
        %v2558 = vsel %vm2491, %v2449, 0.0
        %2559 = vadd.xlane.f32.xlu0 %v2558
        %v2560 = vpop.xlane.xlu0 %2559
        %v2561 = vsel %vm2491, %v2450, 0.0
        %2562 = vadd.xlane.f32.xlu0 %v2561
        %v2563 = vpop.xlane.xlu0 %2562
        %v2564 = vsel %vm2491, %v2451, 0.0
        %2565 = vadd.xlane.f32.xlu0 %v2564
        %v2566 = vpop.xlane.xlu0 %2565
        %v2567 = vsel %vm2491, %v2452, 0.0
        %2568 = vadd.xlane.f32.xlu0 %v2567
        %v2569 = vpop.xlane.xlu0 %2568
        %v2570 = vsel %vm2491, %v2453, 0.0
        %2571 = vadd.xlane.f32.xlu0 %v2570
        %v2572 = vpop.xlane.xlu0 %2571
        %v2573 = vsel %vm2491, %v2454, 0.0
        %2574 = vadd.xlane.f32.xlu0 %v2573
        %v2575 = vpop.xlane.xlu0 %2574
        %v2576 = vsel %vm2491, %v2455, 0.0
        %2577 = vadd.xlane.f32.xlu0 %v2576
        %v2578 = vpop.xlane.xlu0 %2577
        %v2579 = vsel %vm2491, %v2456, 0.0
        %2580 = vadd.xlane.f32.xlu0 %v2579
        %v2581 = vpop.xlane.xlu0 %2580
        %v2582 = vsel %vm2491, %v2457, 0.0
        %2583 = vadd.xlane.f32.xlu0 %v2582
        %v2584 = vpop.xlane.xlu0 %2583
        %v2585 = vsel %vm2491, %v2458, 0.0
        %2586 = vadd.xlane.f32.xlu0 %v2585
        %v2587 = vpop.xlane.xlu0 %2586
        %v2588 = vsel %vm2491, %v2459, 0.0
        %2589 = vadd.xlane.f32.xlu0 %v2588
        %v2590 = vpop.xlane.xlu0 %2589
        %v2591 = vsel %vm2491, %v2460, 0.0
        %2592 = vadd.xlane.f32.xlu0 %v2591
        %v2593 = vpop.xlane.xlu0 %2592
        %v2594 = vsel %vm2491, %v2461, 0.0
        %2595 = vadd.xlane.f32.xlu0 %v2594
        %v2596 = vpop.xlane.xlu0 %2595
        %v2597 = vsel %vm2491, %v2462, 0.0
        %2598 = vadd.xlane.f32.xlu0 %v2597
        %v2599 = vpop.xlane.xlu0 %2598
        %v2600 = vsel %vm2491, %v2463, 0.0
        %2601 = vadd.xlane.f32.xlu0 %v2600
        %v2602 = vpop.xlane.xlu0 %2601
        %v2603 = vsel %vm2491, %v2464, 0.0
        %2604 = vadd.xlane.f32.xlu0 %v2603
        %v2605 = vpop.xlane.xlu0 %2604
        %v2606 = vsel %vm2491, %v2465, 0.0
        %2607 = vadd.xlane.f32.xlu0 %v2606
        %v2608 = vpop.xlane.xlu0 %2607
        %v2609 = vsel %vm2491, %v2466, 0.0
        %2610 = vadd.xlane.f32.xlu0 %v2609
        %v2611 = vpop.xlane.xlu0 %2610
        %v2612 = vsel %vm2491, %v2467, 0.0
        %2613 = vadd.xlane.f32.xlu0 %v2612
        %v2614 = vpop.xlane.xlu0 %2613
        %v2615 = vsel %vm2491, %v2468, 0.0
        %2616 = vadd.xlane.f32.xlu0 %v2615
        %v2617 = vpop.xlane.xlu0 %2616
        %v2618 = vsel %vm2491, %v2469, 0.0
        %2619 = vadd.xlane.f32.xlu0 %v2618
        %v2620 = vpop.xlane.xlu0 %2619
        %v2621 = vsel %vm2491, %v2470, 0.0
        %2622 = vadd.xlane.f32.xlu0 %v2621
        %v2623 = vpop.xlane.xlu0 %2622
        %v2624 = vsel %vm2491, %v2471, 0.0
        %2625 = vadd.xlane.f32.xlu0 %v2624
        %v2626 = vpop.xlane.xlu0 %2625
        %v2627 = vsel %vm2491, %v2472, 0.0
        %2628 = vadd.xlane.f32.xlu0 %v2627
        %v2629 = vpop.xlane.xlu0 %2628
        %v2630 = vsel %vm2491, %v2473, 0.0
        %2631 = vadd.xlane.f32.xlu0 %v2630
        %v2632 = vpop.xlane.xlu0 %2631
        %v2633 = vsel %vm2491, %v2474, 0.0
        %2634 = vadd.xlane.f32.xlu0 %v2633
        %v2635 = vpop.xlane.xlu0 %2634
        %v2636 = vsel %vm2491, %v2475, 0.0
        %2637 = vadd.xlane.f32.xlu0 %v2636
        %v2638 = vpop.xlane.xlu0 %2637
        %v2639 = vsel %vm2491, %v2476, 0.0
        %2640 = vadd.xlane.f32.xlu0 %v2639
        %v2641 = vpop.xlane.xlu0 %2640
        %v2642 = vsel %vm2491, %v2477, 0.0
        %2643 = vadd.xlane.f32.xlu0 %v2642
        %v2644 = vpop.xlane.xlu0 %2643
        %v2645 = vsel %vm2491, %v2478, 0.0
        %2646 = vadd.xlane.f32.xlu0 %v2645
        %v2647 = vpop.xlane.xlu0 %2646
        %v2648 = vsel %vm2491, %v2479, 0.0
        %2649 = vadd.xlane.f32.xlu0 %v2648
        %v2650 = vpop.xlane.xlu0 %2649
        %v2651 = vsel %vm2491, %v2480, 0.0
        %2652 = vadd.xlane.f32.xlu0 %v2651
        %v2653 = vpop.xlane.xlu0 %2652
        %v2654 = vsel %vm2491, %v2481, 0.0
        %2655 = vadd.xlane.f32.xlu0 %v2654
        %v2656 = vpop.xlane.xlu0 %2655
        %v2657 = vsel %vm2491, %v2482, 0.0
        %2658 = vadd.xlane.f32.xlu0 %v2657
        %v2659 = vpop.xlane.xlu0 %2658
        %v2660 = vsel %vm2491, %v2483, 0.0
        %2661 = vadd.xlane.f32.xlu0 %v2660
        %v2662 = vpop.xlane.xlu0 %2661
        %v2663 = vsel %vm2491, %v2484, 0.0
        %2664 = vadd.xlane.f32.xlu0 %v2663
        %v2665 = vpop.xlane.xlu0 %2664
        %v2666 = vsel %vm2491, %v2485, 0.0
        %2667 = vadd.xlane.f32.xlu0 %v2666
        %v2668 = vpop.xlane.xlu0 %2667
        %v2669 = vsel %vm2491, %v2486, 0.0
        %2670 = vadd.xlane.f32.xlu0 %v2669
        %v2671 = vpop.xlane.xlu0 %2670
        %v2672 = vsel %vm2491, %v2487, 0.0
        %2673 = vadd.xlane.f32.xlu0 %v2672
        %v2674 = vpop.xlane.xlu0 %2673
        %v2675 = vsel %vm2491, %v2488, 0.0
        %2676 = vadd.xlane.f32.xlu0 %v2675
        %v2677 = vpop.xlane.xlu0 %2676
        %v2678 = vsel %vm2491, %v2489, 0.0
        %2679 = vadd.xlane.f32.xlu0 %v2678
        %v2680 = vpop.xlane.xlu0 %2679
        %v2681 = vsel %vm2491, %v2490, 0.0
        %2682 = vadd.xlane.f32.xlu0 %v2681
        %v2683 = vpop.xlane.xlu0 %2682
        %v2684 = vld [vmem:[#allocation2] sm:$0x1]
        %v2685 = vmul.f32 %v2494, 0.5
        %v2686 = vmul.f32 %v2497, 0.5
        %v2687 = vmul.f32 %v2500, 0.5
        %v2688 = vmul.f32 %v2503, 0.5
        %v2689 = vmul.f32 %v2506, 0.5
        %v2690 = vmul.f32 %v2509, 0.5
        %v2691 = vmul.f32 %v2512, 0.5
        %v2692 = vmul.f32 %v2515, 0.5
        %v2693 = vmul.f32 %v2518, 0.5
        %v2694 = vmul.f32 %v2521, 0.5
        %v2695 = vmul.f32 %v2524, 0.5
        %v2696 = vmul.f32 %v2527, 0.5
        %v2697 = vmul.f32 %v2530, 0.5
        %v2698 = vmul.f32 %v2533, 0.5
        %v2699 = vmul.f32 %v2536, 0.5
        %v2700 = vmul.f32 %v2539, 0.5
        %v2701 = vmul.f32 %v2542, 0.5
        %v2702 = vmul.f32 %v2545, 0.5
        %v2703 = vmul.f32 %v2548, 0.5
        %v2704 = vmul.f32 %v2551, 0.5
        %v2705 = vmul.f32 %v2554, 0.5
        %v2706 = vmul.f32 %v2557, 0.5
        %v2707 = vmul.f32 %v2560, 0.5
        %v2708 = vmul.f32 %v2563, 0.5
        %v2709 = vmul.f32 %v2566, 0.5
        %v2710 = vmul.f32 %v2569, 0.5
        %v2711 = vmul.f32 %v2572, 0.5
        %v2712 = vmul.f32 %v2575, 0.5
        %v2713 = vmul.f32 %v2578, 0.5
        %v2714 = vmul.f32 %v2581, 0.5
        %v2715 = vmul.f32 %v2584, 0.5
        %v2716 = vmul.f32 %v2587, 0.5
        %v2717 = vmul.f32 %v2590, 0.5
        %v2718 = vmul.f32 %v2593, 0.5
        %v2719 = vmul.f32 %v2596, 0.5
        %v2720 = vmul.f32 %v2599, 0.5
        %v2721 = vmul.f32 %v2602, 0.5
        %v2722 = vmul.f32 %v2605, 0.5
        %v2723 = vmul.f32 %v2608, 0.5
        %v2724 = vmul.f32 %v2611, 0.5
        %v2725 = vmul.f32 %v2614, 0.5
        %v2726 = vmul.f32 %v2617, 0.5
        %v2727 = vmul.f32 %v2620, 0.5
        %v2728 = vmul.f32 %v2623, 0.5
        %v2729 = vmul.f32 %v2626, 0.5
        %v2730 = vmul.f32 %v2629, 0.5
        %v2731 = vmul.f32 %v2632, 0.5
        %v2732 = vmul.f32 %v2635, 0.5
        %v2733 = vmul.f32 %v2638, 0.5
        %v2734 = vmul.f32 %v2641, 0.5
        %v2735 = vmul.f32 %v2644, 0.5
        %v2736 = vmul.f32 %v2647, 0.5
        %v2737 = vmul.f32 %v2650, 0.5
        %v2738 = vmul.f32 %v2653, 0.5
        %v2739 = vmul.f32 %v2656, 0.5
        %v2740 = vmul.f32 %v2659, 0.5
        %v2741 = vmul.f32 %v2662, 0.5
        %v2742 = vmul.f32 %v2665, 0.5
        %v2743 = vmul.f32 %v2668, 0.5
        %v2744 = vmul.f32 %v2671, 0.5
        %v2745 = vmul.f32 %v2674, 0.5
        %v2746 = vmul.f32 %v2677, 0.5
        %v2747 = vmul.f32 %v2680, 0.5
        %v2748 = vmul.f32 %v2683, 0.5
        %v2750 = vlaneseq
        %v2751 = vshrl.u32 %v2750, 7
        %v2752 = vsub.s32 0, %v2751
        %v2753 = vrot.slane %v2684, %v2752
        %v2755 = vsub.f32 %v2753, %v2685
        %v2756 = vsub.f32 %v2753, %v2686
        %v2757 = vsub.f32 %v2753, %v2687
        %v2758 = vsub.f32 %v2753, %v2688
        %v2759 = vsub.f32 %v2753, %v2689
        %v2760 = vsub.f32 %v2753, %v2690
        %v2761 = vsub.f32 %v2753, %v2691
        %v2762 = vsub.f32 %v2753, %v2692
        %v2763 = vsub.f32 %v2753, %v2693
        %v2764 = vsub.f32 %v2753, %v2694
        %v2765 = vsub.f32 %v2753, %v2695
        %v2766 = vsub.f32 %v2753, %v2696
        %v2767 = vsub.f32 %v2753, %v2697
        %v2768 = vsub.f32 %v2753, %v2698
        %v2769 = vsub.f32 %v2753, %v2699
        %v2770 = vsub.f32 %v2753, %v2700
        %v2771 = vsub.f32 %v2753, %v2701
        %v2772 = vsub.f32 %v2753, %v2702
        %v2773 = vsub.f32 %v2753, %v2703
        %v2774 = vsub.f32 %v2753, %v2704
        %v2775 = vsub.f32 %v2753, %v2705
        %v2776 = vsub.f32 %v2753, %v2706
        %v2777 = vsub.f32 %v2753, %v2707
        %v2778 = vsub.f32 %v2753, %v2708
        %v2779 = vsub.f32 %v2753, %v2709
        %v2780 = vsub.f32 %v2753, %v2710
        %v2781 = vsub.f32 %v2753, %v2711
        %v2782 = vsub.f32 %v2753, %v2712
        %v2783 = vsub.f32 %v2753, %v2713
        %v2784 = vsub.f32 %v2753, %v2714
        %v2785 = vsub.f32 %v2753, %v2715
        %v2786 = vsub.f32 %v2753, %v2716
        %v2787 = vsub.f32 %v2753, %v2717
        %v2788 = vsub.f32 %v2753, %v2718
        %v2789 = vsub.f32 %v2753, %v2719
        %v2790 = vsub.f32 %v2753, %v2720
        %v2791 = vsub.f32 %v2753, %v2721
        %v2792 = vsub.f32 %v2753, %v2722
        %v2793 = vsub.f32 %v2753, %v2723
        %v2794 = vsub.f32 %v2753, %v2724
        %v2795 = vsub.f32 %v2753, %v2725
        %v2796 = vsub.f32 %v2753, %v2726
        %v2797 = vsub.f32 %v2753, %v2727
        %v2798 = vsub.f32 %v2753, %v2728
        %v2799 = vsub.f32 %v2753, %v2729
        %v2800 = vsub.f32 %v2753, %v2730
        %v2801 = vsub.f32 %v2753, %v2731
        %v2802 = vsub.f32 %v2753, %v2732
        %v2803 = vsub.f32 %v2753, %v2733
        %v2804 = vsub.f32 %v2753, %v2734
        %v2805 = vsub.f32 %v2753, %v2735
        %v2806 = vsub.f32 %v2753, %v2736
        %v2807 = vsub.f32 %v2753, %v2737
        %v2808 = vsub.f32 %v2753, %v2738
        %v2809 = vsub.f32 %v2753, %v2739
        %v2810 = vsub.f32 %v2753, %v2740
        %v2811 = vsub.f32 %v2753, %v2741
        %v2812 = vsub.f32 %v2753, %v2742
        %v2813 = vsub.f32 %v2753, %v2743
        %v2814 = vsub.f32 %v2753, %v2744
        %v2815 = vsub.f32 %v2753, %v2745
        %v2816 = vsub.f32 %v2753, %v2746
        %v2817 = vsub.f32 %v2753, %v2747
        %v2818 = vsub.f32 %v2753, %v2748
        %v2819 = vlaneseq
        %v2820 = vand.u32 %v2819, 127
        %vm2821 = vcmp.eq.s32.totalorder %v2820, 0
        %vm2822 = vcmp.eq.s32.totalorder %v2820, 1
        %2824 = vset.pattern.permute.xlu0 4
        %2825 = vperm.xlu0 %2824, %v1910
        %v2826 = vpop.permute.xlu0 %2825
        %2829 = vset.pattern.permute.xlu0 4
        %2830 = vperm.xlu0 %2829, %v1915
        %v2831 = vpop.permute.xlu0 %2830
        %2834 = vset.pattern.permute.xlu0 4
        %2835 = vperm.xlu0 %2834, %v1920
        %v2836 = vpop.permute.xlu0 %2835
        %2839 = vset.pattern.permute.xlu0 4
        %2840 = vperm.xlu0 %2839, %v1925
        %v2841 = vpop.permute.xlu0 %2840
        %2844 = vset.pattern.permute.xlu0 4
        %2845 = vperm.xlu0 %2844, %v1930
        %v2846 = vpop.permute.xlu0 %2845
        %2849 = vset.pattern.permute.xlu0 4
        %2850 = vperm.xlu0 %2849, %v1935
        %v2851 = vpop.permute.xlu0 %2850
        %2854 = vset.pattern.permute.xlu0 4
        %2855 = vperm.xlu0 %2854, %v1940
        %v2856 = vpop.permute.xlu0 %2855
        %2859 = vset.pattern.permute.xlu0 4
        %2860 = vperm.xlu0 %2859, %v1945
        %v2861 = vpop.permute.xlu0 %2860
        %2864 = vset.pattern.permute.xlu0 4
        %2865 = vperm.xlu0 %2864, %v1950
        %v2866 = vpop.permute.xlu0 %2865
        %2869 = vset.pattern.permute.xlu0 4
        %2870 = vperm.xlu0 %2869, %v1955
        %v2871 = vpop.permute.xlu0 %2870
        %2874 = vset.pattern.permute.xlu0 4
        %2875 = vperm.xlu0 %2874, %v1960
        %v2876 = vpop.permute.xlu0 %2875
        %2879 = vset.pattern.permute.xlu0 4
        %2880 = vperm.xlu0 %2879, %v1965
        %v2881 = vpop.permute.xlu0 %2880
        %2884 = vset.pattern.permute.xlu0 4
        %2885 = vperm.xlu0 %2884, %v1970
        %v2886 = vpop.permute.xlu0 %2885
        %2889 = vset.pattern.permute.xlu0 4
        %2890 = vperm.xlu0 %2889, %v1975
        %v2891 = vpop.permute.xlu0 %2890
        %2894 = vset.pattern.permute.xlu0 4
        %2895 = vperm.xlu0 %2894, %v1980
        %v2896 = vpop.permute.xlu0 %2895
        %2899 = vset.pattern.permute.xlu0 4
        %2900 = vperm.xlu0 %2899, %v1985
        %v2901 = vpop.permute.xlu0 %2900
        %2904 = vset.pattern.permute.xlu0 4
        %2905 = vperm.xlu0 %2904, %v1990
        %v2906 = vpop.permute.xlu0 %2905
        %2909 = vset.pattern.permute.xlu0 4
        %2910 = vperm.xlu0 %2909, %v1995
        %v2911 = vpop.permute.xlu0 %2910
        %2914 = vset.pattern.permute.xlu0 4
        %2915 = vperm.xlu0 %2914, %v2000
        %v2916 = vpop.permute.xlu0 %2915
        %2919 = vset.pattern.permute.xlu0 4
        %2920 = vperm.xlu0 %2919, %v2005
        %v2921 = vpop.permute.xlu0 %2920
        %2924 = vset.pattern.permute.xlu0 4
        %2925 = vperm.xlu0 %2924, %v2010
        %v2926 = vpop.permute.xlu0 %2925
        %2929 = vset.pattern.permute.xlu0 4
        %2930 = vperm.xlu0 %2929, %v2015
        %v2931 = vpop.permute.xlu0 %2930
        %2934 = vset.pattern.permute.xlu0 4
        %2935 = vperm.xlu0 %2934, %v2020
        %v2936 = vpop.permute.xlu0 %2935
        %2939 = vset.pattern.permute.xlu0 4
        %2940 = vperm.xlu0 %2939, %v2025
        %v2941 = vpop.permute.xlu0 %2940
        %2944 = vset.pattern.permute.xlu0 4
        %2945 = vperm.xlu0 %2944, %v2030
        %v2946 = vpop.permute.xlu0 %2945
        %2949 = vset.pattern.permute.xlu0 4
        %2950 = vperm.xlu0 %2949, %v2035
        %v2951 = vpop.permute.xlu0 %2950
        %2954 = vset.pattern.permute.xlu0 4
        %2955 = vperm.xlu0 %2954, %v2040
        %v2956 = vpop.permute.xlu0 %2955
        %2959 = vset.pattern.permute.xlu0 4
        %2960 = vperm.xlu0 %2959, %v2045
        %v2961 = vpop.permute.xlu0 %2960
        %2964 = vset.pattern.permute.xlu0 4
        %2965 = vperm.xlu0 %2964, %v2050
        %v2966 = vpop.permute.xlu0 %2965
        %2969 = vset.pattern.permute.xlu0 4
        %2970 = vperm.xlu0 %2969, %v2055
        %v2971 = vpop.permute.xlu0 %2970
        %2974 = vset.pattern.permute.xlu0 4
        %2975 = vperm.xlu0 %2974, %v2060
        %v2976 = vpop.permute.xlu0 %2975
        %2979 = vset.pattern.permute.xlu0 4
        %2980 = vperm.xlu0 %2979, %v2065
        %v2981 = vpop.permute.xlu0 %2980
        %2984 = vset.pattern.permute.xlu0 4
        %2985 = vperm.xlu0 %2984, %v2070
        %v2986 = vpop.permute.xlu0 %2985
        %2989 = vset.pattern.permute.xlu0 4
        %2990 = vperm.xlu0 %2989, %v2075
        %v2991 = vpop.permute.xlu0 %2990
        %2994 = vset.pattern.permute.xlu0 4
        %2995 = vperm.xlu0 %2994, %v2080
        %v2996 = vpop.permute.xlu0 %2995
        %2999 = vset.pattern.permute.xlu0 4
        %3000 = vperm.xlu0 %2999, %v2085
        %v3001 = vpop.permute.xlu0 %3000
        %3004 = vset.pattern.permute.xlu0 4
        %3005 = vperm.xlu0 %3004, %v2090
        %v3006 = vpop.permute.xlu0 %3005
        %3009 = vset.pattern.permute.xlu0 4
        %3010 = vperm.xlu0 %3009, %v2095
        %v3011 = vpop.permute.xlu0 %3010
        %3014 = vset.pattern.permute.xlu0 4
        %3015 = vperm.xlu0 %3014, %v2100
        %v3016 = vpop.permute.xlu0 %3015
        %3019 = vset.pattern.permute.xlu0 4
        %3020 = vperm.xlu0 %3019, %v2105
        %v3021 = vpop.permute.xlu0 %3020
        %3024 = vset.pattern.permute.xlu0 4
        %3025 = vperm.xlu0 %3024, %v2110
        %v3026 = vpop.permute.xlu0 %3025
        %3029 = vset.pattern.permute.xlu0 4
        %3030 = vperm.xlu0 %3029, %v2115
        %v3031 = vpop.permute.xlu0 %3030
        %3034 = vset.pattern.permute.xlu0 4
        %3035 = vperm.xlu0 %3034, %v2120
        %v3036 = vpop.permute.xlu0 %3035
        %3039 = vset.pattern.permute.xlu0 4
        %3040 = vperm.xlu0 %3039, %v2125
        %v3041 = vpop.permute.xlu0 %3040
        %3044 = vset.pattern.permute.xlu0 4
        %3045 = vperm.xlu0 %3044, %v2130
        %v3046 = vpop.permute.xlu0 %3045
        %3049 = vset.pattern.permute.xlu0 4
        %3050 = vperm.xlu0 %3049, %v2135
        %v3051 = vpop.permute.xlu0 %3050
        %3054 = vset.pattern.permute.xlu0 4
        %3055 = vperm.xlu0 %3054, %v2140
        %v3056 = vpop.permute.xlu0 %3055
        %3059 = vset.pattern.permute.xlu0 4
        %3060 = vperm.xlu0 %3059, %v2145
        %v3061 = vpop.permute.xlu0 %3060
        %3064 = vset.pattern.permute.xlu0 4
        %3065 = vperm.xlu0 %3064, %v2150
        %v3066 = vpop.permute.xlu0 %3065
        %3069 = vset.pattern.permute.xlu0 4
        %3070 = vperm.xlu0 %3069, %v2155
        %v3071 = vpop.permute.xlu0 %3070
        %3074 = vset.pattern.permute.xlu0 4
        %3075 = vperm.xlu0 %3074, %v2160
        %v3076 = vpop.permute.xlu0 %3075
        %3079 = vset.pattern.permute.xlu0 4
        %3080 = vperm.xlu0 %3079, %v2165
        %v3081 = vpop.permute.xlu0 %3080
        %3084 = vset.pattern.permute.xlu0 4
        %3085 = vperm.xlu0 %3084, %v2170
        %v3086 = vpop.permute.xlu0 %3085
        %3089 = vset.pattern.permute.xlu0 4
        %3090 = vperm.xlu0 %3089, %v2175
        %v3091 = vpop.permute.xlu0 %3090
        %3094 = vset.pattern.permute.xlu0 4
        %3095 = vperm.xlu0 %3094, %v2180
        %v3096 = vpop.permute.xlu0 %3095
        %3099 = vset.pattern.permute.xlu0 4
        %3100 = vperm.xlu0 %3099, %v2185
        %v3101 = vpop.permute.xlu0 %3100
        %3104 = vset.pattern.permute.xlu0 4
        %3105 = vperm.xlu0 %3104, %v2190
        %v3106 = vpop.permute.xlu0 %3105
        %3109 = vset.pattern.permute.xlu0 4
        %3110 = vperm.xlu0 %3109, %v2195
        %v3111 = vpop.permute.xlu0 %3110
        %3114 = vset.pattern.permute.xlu0 4
        %3115 = vperm.xlu0 %3114, %v2200
        %v3116 = vpop.permute.xlu0 %3115
        %3119 = vset.pattern.permute.xlu0 4
        %3120 = vperm.xlu0 %3119, %v2205
        %v3121 = vpop.permute.xlu0 %3120
        %3124 = vset.pattern.permute.xlu0 4
        %3125 = vperm.xlu0 %3124, %v2210
        %v3126 = vpop.permute.xlu0 %3125
        %3129 = vset.pattern.permute.xlu0 4
        %3130 = vperm.xlu0 %3129, %v2215
        %v3131 = vpop.permute.xlu0 %3130
        %3134 = vset.pattern.permute.xlu0 4
        %3135 = vperm.xlu0 %3134, %v2220
        %v3136 = vpop.permute.xlu0 %3135
        %3139 = vset.pattern.permute.xlu0 4
        %3140 = vperm.xlu0 %3139, %v2225
        %v3141 = vpop.permute.xlu0 %3140
        %v3143 = vsel %vm2822, %v2826, 0.0
        %v3144 = vsel %vm2822, %v2831, 0.0
        %v3145 = vsel %vm2822, %v2836, 0.0
        %v3146 = vsel %vm2822, %v2841, 0.0
        %v3147 = vsel %vm2822, %v2846, 0.0
        %v3148 = vsel %vm2822, %v2851, 0.0
        %v3149 = vsel %vm2822, %v2856, 0.0
        %v3150 = vsel %vm2822, %v2861, 0.0
        %v3151 = vsel %vm2822, %v2866, 0.0
        %v3152 = vsel %vm2822, %v2871, 0.0
        %v3153 = vsel %vm2822, %v2876, 0.0
        %v3154 = vsel %vm2822, %v2881, 0.0
        %v3155 = vsel %vm2822, %v2886, 0.0
        %v3156 = vsel %vm2822, %v2891, 0.0
        %v3157 = vsel %vm2822, %v2896, 0.0
        %v3158 = vsel %vm2822, %v2901, 0.0
        %v3159 = vsel %vm2822, %v2906, 0.0
        %v3160 = vsel %vm2822, %v2911, 0.0
        %v3161 = vsel %vm2822, %v2916, 0.0
        %v3162 = vsel %vm2822, %v2921, 0.0
        %v3163 = vsel %vm2822, %v2926, 0.0
        %v3164 = vsel %vm2822, %v2931, 0.0
        %v3165 = vsel %vm2822, %v2936, 0.0
        %v3166 = vsel %vm2822, %v2941, 0.0
        %v3167 = vsel %vm2822, %v2946, 0.0
        %v3168 = vsel %vm2822, %v2951, 0.0
        %v3169 = vsel %vm2822, %v2956, 0.0
        %v3170 = vsel %vm2822, %v2961, 0.0
        %v3171 = vsel %vm2822, %v2966, 0.0
        %v3172 = vsel %vm2822, %v2971, 0.0
        %v3173 = vsel %vm2822, %v2976, 0.0
        %v3174 = vsel %vm2822, %v2981, 0.0
        %v3175 = vsel %vm2822, %v2986, 0.0
        %v3176 = vsel %vm2822, %v2991, 0.0
        %v3177 = vsel %vm2822, %v2996, 0.0
        %v3178 = vsel %vm2822, %v3001, 0.0
        %v3179 = vsel %vm2822, %v3006, 0.0
        %v3180 = vsel %vm2822, %v3011, 0.0
        %v3181 = vsel %vm2822, %v3016, 0.0
        %v3182 = vsel %vm2822, %v3021, 0.0
        %v3183 = vsel %vm2822, %v3026, 0.0
        %v3184 = vsel %vm2822, %v3031, 0.0
        %v3185 = vsel %vm2822, %v3036, 0.0
        %v3186 = vsel %vm2822, %v3041, 0.0
        %v3187 = vsel %vm2822, %v3046, 0.0
        %v3188 = vsel %vm2822, %v3051, 0.0
        %v3189 = vsel %vm2822, %v3056, 0.0
        %v3190 = vsel %vm2822, %v3061, 0.0
        %v3191 = vsel %vm2822, %v3066, 0.0
        %v3192 = vsel %vm2822, %v3071, 0.0
        %v3193 = vsel %vm2822, %v3076, 0.0
        %v3194 = vsel %vm2822, %v3081, 0.0
        %v3195 = vsel %vm2822, %v3086, 0.0
        %v3196 = vsel %vm2822, %v3091, 0.0
        %v3197 = vsel %vm2822, %v3096, 0.0
        %v3198 = vsel %vm2822, %v3101, 0.0
        %v3199 = vsel %vm2822, %v3106, 0.0
        %v3200 = vsel %vm2822, %v3111, 0.0
        %v3201 = vsel %vm2822, %v3116, 0.0
        %v3202 = vsel %vm2822, %v3121, 0.0
        %v3203 = vsel %vm2822, %v3126, 0.0
        %v3204 = vsel %vm2822, %v3131, 0.0
        %v3205 = vsel %vm2822, %v3136, 0.0
        %v3206 = vsel %vm2822, %v3141, 0.0
        %3208 = vset.pattern.permute.xlu0 0
        %3209 = vperm.xlu0 %3208, %v2755
        %v3210 = vpop.permute.xlu0 %3209
        %3213 = vset.pattern.permute.xlu0 0
        %3214 = vperm.xlu0 %3213, %v2756
        %v3215 = vpop.permute.xlu0 %3214
        %3218 = vset.pattern.permute.xlu0 0
        %3219 = vperm.xlu0 %3218, %v2757
        %v3220 = vpop.permute.xlu0 %3219
        %3223 = vset.pattern.permute.xlu0 0
        %3224 = vperm.xlu0 %3223, %v2758
        %v3225 = vpop.permute.xlu0 %3224
        %3228 = vset.pattern.permute.xlu0 0
        %3229 = vperm.xlu0 %3228, %v2759
        %v3230 = vpop.permute.xlu0 %3229
        %3233 = vset.pattern.permute.xlu0 0
        %3234 = vperm.xlu0 %3233, %v2760
        %v3235 = vpop.permute.xlu0 %3234
        %3238 = vset.pattern.permute.xlu0 0
        %3239 = vperm.xlu0 %3238, %v2761
        %v3240 = vpop.permute.xlu0 %3239
        %3243 = vset.pattern.permute.xlu0 0
        %3244 = vperm.xlu0 %3243, %v2762
        %v3245 = vpop.permute.xlu0 %3244
        %3248 = vset.pattern.permute.xlu0 0
        %3249 = vperm.xlu0 %3248, %v2763
        %v3250 = vpop.permute.xlu0 %3249
        %3253 = vset.pattern.permute.xlu0 0
        %3254 = vperm.xlu0 %3253, %v2764
        %v3255 = vpop.permute.xlu0 %3254
        %3258 = vset.pattern.permute.xlu0 0
        %3259 = vperm.xlu0 %3258, %v2765
        %v3260 = vpop.permute.xlu0 %3259
        %3263 = vset.pattern.permute.xlu0 0
        %3264 = vperm.xlu0 %3263, %v2766
        %v3265 = vpop.permute.xlu0 %3264
        %3268 = vset.pattern.permute.xlu0 0
        %3269 = vperm.xlu0 %3268, %v2767
        %v3270 = vpop.permute.xlu0 %3269
        %3273 = vset.pattern.permute.xlu0 0
        %3274 = vperm.xlu0 %3273, %v2768
        %v3275 = vpop.permute.xlu0 %3274
        %3278 = vset.pattern.permute.xlu0 0
        %3279 = vperm.xlu0 %3278, %v2769
        %v3280 = vpop.permute.xlu0 %3279
        %3283 = vset.pattern.permute.xlu0 0
        %3284 = vperm.xlu0 %3283, %v2770
        %v3285 = vpop.permute.xlu0 %3284
        %3288 = vset.pattern.permute.xlu0 0
        %3289 = vperm.xlu0 %3288, %v2771
        %v3290 = vpop.permute.xlu0 %3289
        %3293 = vset.pattern.permute.xlu0 0
        %3294 = vperm.xlu0 %3293, %v2772
        %v3295 = vpop.permute.xlu0 %3294
        %3298 = vset.pattern.permute.xlu0 0
        %3299 = vperm.xlu0 %3298, %v2773
        %v3300 = vpop.permute.xlu0 %3299
        %3303 = vset.pattern.permute.xlu0 0
        %3304 = vperm.xlu0 %3303, %v2774
        %v3305 = vpop.permute.xlu0 %3304
        %3308 = vset.pattern.permute.xlu0 0
        %3309 = vperm.xlu0 %3308, %v2775
        %v3310 = vpop.permute.xlu0 %3309
        %3313 = vset.pattern.permute.xlu0 0
        %3314 = vperm.xlu0 %3313, %v2776
        %v3315 = vpop.permute.xlu0 %3314
        %3318 = vset.pattern.permute.xlu0 0
        %3319 = vperm.xlu0 %3318, %v2777
        %v3320 = vpop.permute.xlu0 %3319
        %3323 = vset.pattern.permute.xlu0 0
        %3324 = vperm.xlu0 %3323, %v2778
        %v3325 = vpop.permute.xlu0 %3324
        %3328 = vset.pattern.permute.xlu0 0
        %3329 = vperm.xlu0 %3328, %v2779
        %v3330 = vpop.permute.xlu0 %3329
        %3333 = vset.pattern.permute.xlu0 0
        %3334 = vperm.xlu0 %3333, %v2780
        %v3335 = vpop.permute.xlu0 %3334
        %3338 = vset.pattern.permute.xlu0 0
        %3339 = vperm.xlu0 %3338, %v2781
        %v3340 = vpop.permute.xlu0 %3339
        %3343 = vset.pattern.permute.xlu0 0
        %3344 = vperm.xlu0 %3343, %v2782
        %v3345 = vpop.permute.xlu0 %3344
        %3348 = vset.pattern.permute.xlu0 0
        %3349 = vperm.xlu0 %3348, %v2783
        %v3350 = vpop.permute.xlu0 %3349
        %3353 = vset.pattern.permute.xlu0 0
        %3354 = vperm.xlu0 %3353, %v2784
        %v3355 = vpop.permute.xlu0 %3354
        %3358 = vset.pattern.permute.xlu0 0
        %3359 = vperm.xlu0 %3358, %v2785
        %v3360 = vpop.permute.xlu0 %3359
        %3363 = vset.pattern.permute.xlu0 0
        %3364 = vperm.xlu0 %3363, %v2786
        %v3365 = vpop.permute.xlu0 %3364
        %3368 = vset.pattern.permute.xlu0 0
        %3369 = vperm.xlu0 %3368, %v2787
        %v3370 = vpop.permute.xlu0 %3369
        %3373 = vset.pattern.permute.xlu0 0
        %3374 = vperm.xlu0 %3373, %v2788
        %v3375 = vpop.permute.xlu0 %3374
        %3378 = vset.pattern.permute.xlu0 0
        %3379 = vperm.xlu0 %3378, %v2789
        %v3380 = vpop.permute.xlu0 %3379
        %3383 = vset.pattern.permute.xlu0 0
        %3384 = vperm.xlu0 %3383, %v2790
        %v3385 = vpop.permute.xlu0 %3384
        %3388 = vset.pattern.permute.xlu0 0
        %3389 = vperm.xlu0 %3388, %v2791
        %v3390 = vpop.permute.xlu0 %3389
        %3393 = vset.pattern.permute.xlu0 0
        %3394 = vperm.xlu0 %3393, %v2792
        %v3395 = vpop.permute.xlu0 %3394
        %3398 = vset.pattern.permute.xlu0 0
        %3399 = vperm.xlu0 %3398, %v2793
        %v3400 = vpop.permute.xlu0 %3399
        %3403 = vset.pattern.permute.xlu0 0
        %3404 = vperm.xlu0 %3403, %v2794
        %v3405 = vpop.permute.xlu0 %3404
        %3408 = vset.pattern.permute.xlu0 0
        %3409 = vperm.xlu0 %3408, %v2795
        %v3410 = vpop.permute.xlu0 %3409
        %3413 = vset.pattern.permute.xlu0 0
        %3414 = vperm.xlu0 %3413, %v2796
        %v3415 = vpop.permute.xlu0 %3414
        %3418 = vset.pattern.permute.xlu0 0
        %3419 = vperm.xlu0 %3418, %v2797
        %v3420 = vpop.permute.xlu0 %3419
        %3423 = vset.pattern.permute.xlu0 0
        %3424 = vperm.xlu0 %3423, %v2798
        %v3425 = vpop.permute.xlu0 %3424
        %3428 = vset.pattern.permute.xlu0 0
        %3429 = vperm.xlu0 %3428, %v2799
        %v3430 = vpop.permute.xlu0 %3429
        %3433 = vset.pattern.permute.xlu0 0
        %3434 = vperm.xlu0 %3433, %v2800
        %v3435 = vpop.permute.xlu0 %3434
        %3438 = vset.pattern.permute.xlu0 0
        %3439 = vperm.xlu0 %3438, %v2801
        %v3440 = vpop.permute.xlu0 %3439
        %3443 = vset.pattern.permute.xlu0 0
        %3444 = vperm.xlu0 %3443, %v2802
        %v3445 = vpop.permute.xlu0 %3444
        %3448 = vset.pattern.permute.xlu0 0
        %3449 = vperm.xlu0 %3448, %v2803
        %v3450 = vpop.permute.xlu0 %3449
        %3453 = vset.pattern.permute.xlu0 0
        %3454 = vperm.xlu0 %3453, %v2804
        %v3455 = vpop.permute.xlu0 %3454
        %3458 = vset.pattern.permute.xlu0 0
        %3459 = vperm.xlu0 %3458, %v2805
        %v3460 = vpop.permute.xlu0 %3459
        %3463 = vset.pattern.permute.xlu0 0
        %3464 = vperm.xlu0 %3463, %v2806
        %v3465 = vpop.permute.xlu0 %3464
        %3468 = vset.pattern.permute.xlu0 0
        %3469 = vperm.xlu0 %3468, %v2807
        %v3470 = vpop.permute.xlu0 %3469
        %3473 = vset.pattern.permute.xlu0 0
        %3474 = vperm.xlu0 %3473, %v2808
        %v3475 = vpop.permute.xlu0 %3474
        %3478 = vset.pattern.permute.xlu0 0
        %3479 = vperm.xlu0 %3478, %v2809
        %v3480 = vpop.permute.xlu0 %3479
        %3483 = vset.pattern.permute.xlu0 0
        %3484 = vperm.xlu0 %3483, %v2810
        %v3485 = vpop.permute.xlu0 %3484
        %3488 = vset.pattern.permute.xlu0 0
        %3489 = vperm.xlu0 %3488, %v2811
        %v3490 = vpop.permute.xlu0 %3489
        %3493 = vset.pattern.permute.xlu0 0
        %3494 = vperm.xlu0 %3493, %v2812
        %v3495 = vpop.permute.xlu0 %3494
        %3498 = vset.pattern.permute.xlu0 0
        %3499 = vperm.xlu0 %3498, %v2813
        %v3500 = vpop.permute.xlu0 %3499
        %3503 = vset.pattern.permute.xlu0 0
        %3504 = vperm.xlu0 %3503, %v2814
        %v3505 = vpop.permute.xlu0 %3504
        %3508 = vset.pattern.permute.xlu0 0
        %3509 = vperm.xlu0 %3508, %v2815
        %v3510 = vpop.permute.xlu0 %3509
        %3513 = vset.pattern.permute.xlu0 0
        %3514 = vperm.xlu0 %3513, %v2816
        %v3515 = vpop.permute.xlu0 %3514
        %3518 = vset.pattern.permute.xlu0 0
        %3519 = vperm.xlu0 %3518, %v2817
        %v3520 = vpop.permute.xlu0 %3519
        %3523 = vset.pattern.permute.xlu0 0
        %3524 = vperm.xlu0 %3523, %v2818
        %v3525 = vpop.permute.xlu0 %3524
        %v3527 = vsel %vm2821, %v3210, %v3143
        %v3528 = vsel %vm2821, %v3215, %v3144
        %v3529 = vsel %vm2821, %v3220, %v3145
        %v3530 = vsel %vm2821, %v3225, %v3146
        %v3531 = vsel %vm2821, %v3230, %v3147
        %v3532 = vsel %vm2821, %v3235, %v3148
        %v3533 = vsel %vm2821, %v3240, %v3149
        %v3534 = vsel %vm2821, %v3245, %v3150
        %v3535 = vsel %vm2821, %v3250, %v3151
        %v3536 = vsel %vm2821, %v3255, %v3152
        %v3537 = vsel %vm2821, %v3260, %v3153
        %v3538 = vsel %vm2821, %v3265, %v3154
        %v3539 = vsel %vm2821, %v3270, %v3155
        %v3540 = vsel %vm2821, %v3275, %v3156
        %v3541 = vsel %vm2821, %v3280, %v3157
        %v3542 = vsel %vm2821, %v3285, %v3158
        %v3543 = vsel %vm2821, %v3290, %v3159
        %v3544 = vsel %vm2821, %v3295, %v3160
        %v3545 = vsel %vm2821, %v3300, %v3161
        %v3546 = vsel %vm2821, %v3305, %v3162
        %v3547 = vsel %vm2821, %v3310, %v3163
        %v3548 = vsel %vm2821, %v3315, %v3164
        %v3549 = vsel %vm2821, %v3320, %v3165
        %v3550 = vsel %vm2821, %v3325, %v3166
        %v3551 = vsel %vm2821, %v3330, %v3167
        %v3552 = vsel %vm2821, %v3335, %v3168
        %v3553 = vsel %vm2821, %v3340, %v3169
        %v3554 = vsel %vm2821, %v3345, %v3170
        %v3555 = vsel %vm2821, %v3350, %v3171
        %v3556 = vsel %vm2821, %v3355, %v3172
        %v3557 = vsel %vm2821, %v3360, %v3173
        %v3558 = vsel %vm2821, %v3365, %v3174
        %v3559 = vsel %vm2821, %v3370, %v3175
        %v3560 = vsel %vm2821, %v3375, %v3176
        %v3561 = vsel %vm2821, %v3380, %v3177
        %v3562 = vsel %vm2821, %v3385, %v3178
        %v3563 = vsel %vm2821, %v3390, %v3179
        %v3564 = vsel %vm2821, %v3395, %v3180
        %v3565 = vsel %vm2821, %v3400, %v3181
        %v3566 = vsel %vm2821, %v3405, %v3182
        %v3567 = vsel %vm2821, %v3410, %v3183
        %v3568 = vsel %vm2821, %v3415, %v3184
        %v3569 = vsel %vm2821, %v3420, %v3185
        %v3570 = vsel %vm2821, %v3425, %v3186
        %v3571 = vsel %vm2821, %v3430, %v3187
        %v3572 = vsel %vm2821, %v3435, %v3188
        %v3573 = vsel %vm2821, %v3440, %v3189
        %v3574 = vsel %vm2821, %v3445, %v3190
        %v3575 = vsel %vm2821, %v3450, %v3191
        %v3576 = vsel %vm2821, %v3455, %v3192
        %v3577 = vsel %vm2821, %v3460, %v3193
        %v3578 = vsel %vm2821, %v3465, %v3194
        %v3579 = vsel %vm2821, %v3470, %v3195
        %v3580 = vsel %vm2821, %v3475, %v3196
        %v3581 = vsel %vm2821, %v3480, %v3197
        %v3582 = vsel %vm2821, %v3485, %v3198
        %v3583 = vsel %vm2821, %v3490, %v3199
        %v3584 = vsel %vm2821, %v3495, %v3200
        %v3585 = vsel %vm2821, %v3500, %v3201
        %v3586 = vsel %vm2821, %v3505, %v3202
        %v3587 = vsel %vm2821, %v3510, %v3203
        %v3588 = vsel %vm2821, %v3515, %v3204
        %v3589 = vsel %vm2821, %v3520, %v3205
        %v3590 = vsel %vm2821, %v3525, %v3206
        %3591 = vst [vmem:[%s371] sm:$0xff] %v3527
        %3592 = vst [vmem:[%s371 + $0x8] sm:$0xff] %v3528
        %3593 = vst [vmem:[%s371 + $0x10] sm:$0xff] %v3529
        %3594 = vst [vmem:[%s371 + $0x18] sm:$0xff] %v3530
        %3595 = vst [vmem:[%s371 + $0x20] sm:$0xff] %v3531
        %3596 = vst [vmem:[%s371 + $0x28] sm:$0xff] %v3532
        %3597 = vst [vmem:[%s371 + $0x30] sm:$0xff] %v3533
        %3598 = vst [vmem:[%s371 + $0x38] sm:$0xff] %v3534
        %3599 = vst [vmem:[%s371 + $0x40] sm:$0xff] %v3535
        %3600 = vst [vmem:[%s371 + $0x48] sm:$0xff] %v3536
        %3601 = vst [vmem:[%s371 + $0x50] sm:$0xff] %v3537
        %3602 = vst [vmem:[%s371 + $0x58] sm:$0xff] %v3538
        %3603 = vst [vmem:[%s371 + $0x60] sm:$0xff] %v3539
        %3604 = vst [vmem:[%s371 + $0x68] sm:$0xff] %v3540
        %3605 = vst [vmem:[%s371 + $0x70] sm:$0xff] %v3541
        %3606 = vst [vmem:[%s371 + $0x78] sm:$0xff] %v3542
        %3607 = vst [vmem:[%s371 + $0x80] sm:$0xff] %v3543
        %3608 = vst [vmem:[%s371 + $0x88] sm:$0xff] %v3544
        %3609 = vst [vmem:[%s371 + $0x90] sm:$0xff] %v3545
        %3610 = vst [vmem:[%s371 + $0x98] sm:$0xff] %v3546
        %3611 = vst [vmem:[%s371 + $0xa0] sm:$0xff] %v3547
        %3612 = vst [vmem:[%s371 + $0xa8] sm:$0xff] %v3548
        %3613 = vst [vmem:[%s371 + $0xb0] sm:$0xff] %v3549
        %3614 = vst [vmem:[%s371 + $0xb8] sm:$0xff] %v3550
        %3615 = vst [vmem:[%s371 + $0xc0] sm:$0xff] %v3551
        %3616 = vst [vmem:[%s371 + $0xc8] sm:$0xff] %v3552
        %3617 = vst [vmem:[%s371 + $0xd0] sm:$0xff] %v3553
        %3618 = vst [vmem:[%s371 + $0xd8] sm:$0xff] %v3554
        %3619 = vst [vmem:[%s371 + $0xe0] sm:$0xff] %v3555
        %3620 = vst [vmem:[%s371 + $0xe8] sm:$0xff] %v3556
        %3621 = vst [vmem:[%s371 + $0xf0] sm:$0xff] %v3557
        %3622 = vst [vmem:[%s371 + $0xf8] sm:$0xff] %v3558
        %3623 = vst [vmem:[%s371 + $0x100] sm:$0xff] %v3559
        %3624 = vst [vmem:[%s371 + $0x108] sm:$0xff] %v3560
        %3625 = vst [vmem:[%s371 + $0x110] sm:$0xff] %v3561
        %3626 = vst [vmem:[%s371 + $0x118] sm:$0xff] %v3562
        %3627 = vst [vmem:[%s371 + $0x120] sm:$0xff] %v3563
        %3628 = vst [vmem:[%s371 + $0x128] sm:$0xff] %v3564
        %3629 = vst [vmem:[%s371 + $0x130] sm:$0xff] %v3565
        %3630 = vst [vmem:[%s371 + $0x138] sm:$0xff] %v3566
        %3631 = vst [vmem:[%s371 + $0x140] sm:$0xff] %v3567
        %3632 = vst [vmem:[%s371 + $0x148] sm:$0xff] %v3568
        %3633 = vst [vmem:[%s371 + $0x150] sm:$0xff] %v3569
        %3634 = vst [vmem:[%s371 + $0x158] sm:$0xff] %v3570
        %3635 = vst [vmem:[%s371 + $0x160] sm:$0xff] %v3571
        %3636 = vst [vmem:[%s371 + $0x168] sm:$0xff] %v3572
        %3637 = vst [vmem:[%s371 + $0x170] sm:$0xff] %v3573
        %3638 = vst [vmem:[%s371 + $0x178] sm:$0xff] %v3574
        %3639 = vst [vmem:[%s371 + $0x180] sm:$0xff] %v3575
        %3640 = vst [vmem:[%s371 + $0x188] sm:$0xff] %v3576
        %3641 = vst [vmem:[%s371 + $0x190] sm:$0xff] %v3577
        %3642 = vst [vmem:[%s371 + $0x198] sm:$0xff] %v3578
        %3643 = vst [vmem:[%s371 + $0x1a0] sm:$0xff] %v3579
        %3644 = vst [vmem:[%s371 + $0x1a8] sm:$0xff] %v3580
        %3645 = vst [vmem:[%s371 + $0x1b0] sm:$0xff] %v3581
        %3646 = vst [vmem:[%s371 + $0x1b8] sm:$0xff] %v3582
        %3647 = vst [vmem:[%s371 + $0x1c0] sm:$0xff] %v3583
        %3648 = vst [vmem:[%s371 + $0x1c8] sm:$0xff] %v3584
        %3649 = vst [vmem:[%s371 + $0x1d0] sm:$0xff] %v3585
        %3650 = vst [vmem:[%s371 + $0x1d8] sm:$0xff] %v3586
        %3651 = vst [vmem:[%s371 + $0x1e0] sm:$0xff] %v3587
        %3652 = vst [vmem:[%s371 + $0x1e8] sm:$0xff] %v3588
        %3653 = vst [vmem:[%s371 + $0x1f0] sm:$0xff] %v3589
        %3654 = vst [vmem:[%s371 + $0x1f8] sm:$0xff] %v3590
        %s3655 = sand.u32 %s254, 1
        %s3656 = scalar_lea.sflag [#allocation4], %s3655
        %s3657 = sand.u32 %s254, 1
        %s3658 = smul.addr %s3657, 512
        %s3659 = scalar_lea.vmem [#allocation3], %s3658
        // Predicated region
        $region61: #{tpu_custom_call.1} parent=59 // pred_check
          %p3660 = pneg %p264
        $region62: #{tpu_custom_call.1} parent=59 // pred_check_branch
          %3662 = sbr.rel (%p3660) target = $region64
        $region63: #{tpu_custom_call.1} parent=59 // pred_region
          %s3663 = smul.u32 64, %s26
          %s3665 = ssub.s32 8192, 8192
          %3666 = vsyncadd %s3656, %s3665
          %s3667 = smul.addr %s3663, 128
          %s3668 = scalar_lea.hbm %s10, %s3667
          %s3669 = sshll.u32 %s3659, 4
          %s3670 = int_to_ptr.vmem [resolvable:$true] %s3669
          %3675 = dma.vmem_to_hbm [thread:$0]  %s3670, 8192, %s3668, %s3656, 128, 128, 8
        $region64: #{tpu_custom_call.1} parent=59 // pred_fallthru
          _
      $region60: #{tpu_custom_call.1} parent=5 // pred_fallthru
        _
      %p3676 = scmp.le.s32.totalorder 2, %s21
      // Predicated region
      $region65: #{tpu_custom_call.1} parent=5 // pred_check
        %p3677 = pneg %p3676
      $region66: #{tpu_custom_call.1} parent=5 // pred_check_branch
        %3679 = sbr.rel (%p3677) target = $region68
      $region67: #{tpu_custom_call.1} parent=5 // pred_region
        %s3680 = ssub.s32 %s21, 2
        // Predicated region
        $region69: #{tpu_custom_call.1} parent=67 // pred_check
          %p3681 = pneg %p270
        $region70: #{tpu_custom_call.1} parent=67 // pred_check_branch
          %3683 = sbr.rel (%p3681) target = $region72
        $region71: #{tpu_custom_call.1} parent=67 // pred_region
          %s3684 = sand.u32 %s255, 1
          %s3685 = scalar_lea.sflag [#allocation4], %s3684
          %s3686 = sand.u32 %s255, 1
          %s3687 = smul.addr %s3686, 512
          %s3688 = scalar_lea.vmem [#allocation3], %s3687
          %3689 = dma.done %s3685, 8192
        $region72: #{tpu_custom_call.1} parent=67 // pred_fallthru
          _
      $region68: #{tpu_custom_call.1} parent=5 // pred_fallthru
        _
    $region6: #{tpu_custom_call.1} parent=1 // loop_footer
      %s25 = sadd.s32 1, %s21
    $region7: #{tpu_custom_call.1} parent=1 // loop_footer_branch
      %20 = sbr.rel target = $region3
    $region8: #{tpu_custom_call.1} parent=1 // loop_exit
      _
    %3690 = vsyncpa [#allocation4], 1
    %s3691 = scalar_lea.sflag [#allocation4], 1
    %3692 = vsyncpa %s3691, 1

</llo_original>
